<compile_context>
chip_gen: v5e
topology: v5e:2x2
jax: 0.10.0
libtpu: 0.0.40
codegen_flags: <defaults>
</compile_context>

<pallas_src>
import numpy as np
import jax
import jax.numpy as jnp
from jax import lax
from jax.experimental import pallas as pl
from jax.experimental.pallas import tpu as pltpu


# ------------------------------ Pallas kernel ------------------------------ #

def bilstm_crf_kernel(ids_ref, xpf_ref, xpb_ref, whh_ref, w2t_ref, b2t_ref,
                      start_ref, end_ref, trans_ref,
                      tags_ref, lstm_ref, emis_ref):
    """Fused Embedding-gather + BiLSTM + Linear + CRF Viterbi decode.

    ids_ref:   (B, T)  int32  token ids (SMEM)
    xpf_ref:   (V, 1, 8H) f32  fwd-direction gate table  (emb@W_ih_f + b_f),
                               zeros in the backward column slots
    xpb_ref:   (V, 1, 8H) f32  bwd-direction gate table, zeros in fwd slots
    whh_ref:   (2H, 8H) f32  block-diagonal recurrent weights (both dirs)
    w2t_ref:   (2H, K)  f32  hidden2tag weight (transposed torch layout)
    b2t_ref:   (1, K)        hidden2tag bias
    start_ref/end_ref: (1, K)   CRF start/end transitions
    trans_ref: (K, K)           CRF transitions [prev, next]
    tags_ref:  (B, T) int32  decoded tags (output)
    lstm_ref:  (2, T, B, H) f32  LSTM outputs, dir-major (output, for checks)
    emis_ref:  (T, B, K) f32     emission scores (output, for checks)

    Gate column layout (8H = 4*2H):  [ i_f i_b | f_f f_b | o_f o_b | g_f g_b ]
    so with H2 = 2H:  sigmoid -> cols [0, 3*H2),  tanh -> cols [3*H2, 4*H2).
    """
    B, T = ids_ref.shape
    H2 = whh_ref.shape[0]          # 2H
    GH = whh_ref.shape[1]          # 8H
    H = H2 // 2
    K = trans_ref.shape[0]

    whh = whh_ref[...]
    w2t = w2t_ref[...]
    b2t = b2t_ref[...]
    start = start_ref[...]
    end = end_ref[...]
    trans = trans_ref[...]

    row_sel = lax.broadcasted_iota(jnp.int32, (B, GH), 0)

    # ---- fused bidirectional recurrence: one (B,2H)x(2H,8H) matmul / step ----
    h_cat = jnp.zeros((B, H2), jnp.float32)     # [h_f | h_b]
    c_cat = jnp.zeros((B, H2), jnp.float32)     # [c_f | c_b]
    hf = [None] * T                             # hf[t]: fwd hidden at time t
    hb = [None] * T                             # hb[t]: bwd hidden at time t

    for s in range(T):                          # fully unrolled (T is small)
        # gather precomputed input-projection rows for fwd time s / bwd time T-1-s
        gx = jnp.zeros((B, GH), jnp.float32)
        for b in range(B):
            row = xpf_ref[ids_ref[b, s]] + xpb_ref[ids_ref[b, T - 1 - s]]
            gx = jnp.where(row_sel == b, row, gx)

        gates = gx + jnp.dot(h_cat, whh, preferred_element_type=jnp.float32)
        sig = jax.nn.sigmoid(gates[:, :3 * H2])           # [i | f | o], both dirs
        g = jnp.tanh(gates[:, 3 * H2:])                   # [g], both dirs
        c_cat = sig[:, H2:2 * H2] * c_cat + sig[:, :H2] * g
        h_cat = sig[:, 2 * H2:] * jnp.tanh(c_cat)

        h_f = h_cat[:, :H]
        h_b = h_cat[:, H:]
        lstm_ref[0, s] = h_f
        lstm_ref[1, T - 1 - s] = h_b
        hf[s] = h_f
        hb[T - 1 - s] = h_b

    # ---- hidden2tag emissions (off the Viterbi serial dependency chain) ----
    w2t_f = w2t[:H, :]
    w2t_b = w2t[H:, :]
    e = [None] * T
    for t in range(T):
        e_t = (jnp.dot(hf[t], w2t_f, preferred_element_type=jnp.float32)
               + jnp.dot(hb[t], w2t_b, preferred_element_type=jnp.float32)
               + b2t)
        emis_ref[t] = e_t
        e[t] = e_t

    # ---- CRF Viterbi forward (history kept in registers, unrolled) ----
    iota_bk = lax.broadcasted_iota(jnp.int32, (B, K), 1).astype(jnp.float32)
    iota_bkk = lax.broadcasted_iota(jnp.int32, (B, K, K), 1).astype(jnp.float32)
    big = jnp.float32(K)

    score = start + e[0]                                   # (B, K)
    hist = []
    for t in range(1, T):
        # prev tag on axis 1, next tag on axis 2
        nsf = score[:, :, None] + trans[None, :, :] + e[t][:, None, :]  # (B,K,K)
        m = jnp.max(nsf, axis=1, keepdims=True)                         # (B,1,K)
        hist.append(jnp.min(jnp.where(nsf == m, iota_bkk, big), axis=1))
        score = m[:, 0, :]                                              # reuse max
    score = score + end

    # ---- backtrack; accumulate tags in registers, single bulk store ----
    m = jnp.max(score, axis=1, keepdims=True)
    best = jnp.min(jnp.where(score == m, iota_bk, big), axis=1, keepdims=True)

    iota_bt = lax.broadcasted_iota(jnp.int32, (B, T), 1)
    tags = jnp.where(iota_bt == T - 1, best, jnp.zeros((B, T), jnp.float32))
    for t in range(T - 1, 0, -1):
        best = jnp.sum(jnp.where(best == iota_bk, hist[t - 1], 0.0),
                       axis=1, keepdims=True)
        tags = jnp.where(iota_bt == t - 1, best, tags)
    tags_ref[...] = tags.astype(jnp.int32)


# ------------------------------ JAX wrapper -------------------------------- #

def bilstm_crf_forward(inputs, emb, lstm_p, w_tag, b_tag, start, end, trans):
    """inputs: (B, T) int32.  Returns (tags (B,T) int32, lstm (2,T,B,H), emis (T,B,K))."""
    B, T = inputs.shape
    H = lstm_p["w_hh_f"].shape[1]
    K = w_tag.shape[0]
    GH = 8 * H
    f32 = jnp.float32

    def perm_rows(w):
        # reorder torch gate blocks [i, f, g, o] -> [i, f, o, g] along axis 0
        return jnp.concatenate([w[0:H], w[H:2 * H], w[3 * H:4 * H], w[2 * H:3 * H]],
                               axis=0)

    # Embedding + input projection + biases fused into per-token gate tables.
    # Column layout: gate-major, direction-minor (other direction's slots = 0).
    def make_xtab(w_ih, b_ih, b_hh, slot):
        proj = (jnp.dot(emb.astype(f32), perm_rows(w_ih.astype(f32)).T)
                + perm_rows((b_ih + b_hh).astype(f32)))          # (V, 4H)
        proj = proj.reshape(-1, 4, 1, H)
        zero = jnp.zeros_like(proj)
        parts = (proj, zero) if slot == 0 else (zero, proj)
        return jnp.concatenate(parts, axis=2).reshape(-1, 1, GH)  # (V, 1, 8H)

    xpf = make_xtab(lstm_p["w_ih_f"], lstm_p["b_ih_f"], lstm_p["b_hh_f"], 0)
    xpb = make_xtab(lstm_p["w_ih_b"], lstm_p["b_ih_b"], lstm_p["b_hh_b"], 1)

    # Block-diagonal recurrent weight: rows 0:H drive fwd gates, H:2H bwd gates.
    def make_whh(w_hh, slot):
        w = perm_rows(w_hh.astype(f32)).T.reshape(H, 4, 1, H)
        zero = jnp.zeros_like(w)
        parts = (w, zero) if slot == 0 else (zero, w)
        return jnp.concatenate(parts, axis=2).reshape(H, GH)

    whh = jnp.concatenate([make_whh(lstm_p["w_hh_f"], 0),
                           make_whh(lstm_p["w_hh_b"], 1)], axis=0)   # (2H, 8H)

    w2t = w_tag.astype(f32).T                    # (2H, K)
    b2t = b_tag.astype(f32)[None, :]
    start2 = start.astype(f32)[None, :]
    end2 = end.astype(f32)[None, :]
    trans2 = trans.astype(f32)

    vmem = lambda: pl.BlockSpec(memory_space=pltpu.MemorySpace.VMEM)
    smem = lambda: pl.BlockSpec(memory_space=pltpu.MemorySpace.SMEM)

    tags, lstm_out, emis = pl.pallas_call(
        bilstm_crf_kernel,
        out_shape=(jax.ShapeDtypeStruct((B, T), jnp.int32),
                   jax.ShapeDtypeStruct((2, T, B, H), jnp.float32),
                   jax.ShapeDtypeStruct((T, B, K), jnp.float32)),
        in_specs=[smem()] + [vmem() for _ in range(8)],
        out_specs=(vmem(), vmem(), vmem()),
    )(inputs.astype(jnp.int32), xpf, xpb, whh, w2t, b2t, start2, end2, trans2)

    return tags, lstm_out, emis


# ------------------------- numpy reference (check) ------------------------- #

def ref_forward_np(inputs, emb, lstm_p, w_tag, b_tag, start, end, trans):
    inputs = np.asarray(inputs)
    emb = np.asarray(emb, np.float32)
    B, T = inputs.shape
    H = lstm_p["w_hh_f"].shape[1]
    word = emb[inputs]                                       # (B, T, E)

    def sig(x):
        return 1.0 / (1.0 + np.exp(-x))

    def run_dir(w_ih, w_hh, b_ih, b_hh, reverse):
        w_ih, w_hh = np.asarray(w_ih), np.asarray(w_hh)
        b = np.asarray(b_ih) + np.asarray(b_hh)
        h = np.zeros((B, H), np.float32)
        c = np.zeros((B, H), np.float32)
        out = np.zeros((T, B, H), np.float32)
        order = range(T - 1, -1, -1) if reverse else range(T)
        for t in order:
            g = word[:, t, :] @ w_ih.T + h @ w_hh.T + b
            i = sig(g[:, :H]); f = sig(g[:, H:2 * H])
            gg = np.tanh(g[:, 2 * H:3 * H]); o = sig(g[:, 3 * H:])
            c = f * c + i * gg
            h = o * np.tanh(c)
            out[t] = h
        return out

    out_f = run_dir(lstm_p["w_ih_f"], lstm_p["w_hh_f"],
                    lstm_p["b_ih_f"], lstm_p["b_hh_f"], False)
    out_b = run_dir(lstm_p["w_ih_b"], lstm_p["w_hh_b"],
                    lstm_p["b_ih_b"], lstm_p["b_hh_b"], True)
    lstm_out = np.concatenate([out_f, out_b], axis=-1)       # (T, B, 2H)

    w_tag = np.asarray(w_tag); b_tag = np.asarray(b_tag)
    start = np.asarray(start); end = np.asarray(end); trans = np.asarray(trans)
    emis = lstm_out @ w_tag.T + b_tag                        # (T, B, K)

    score = start[None, :] + emis[0]
    history = []
    for t in range(1, T):
        nsf = score[:, :, None] + trans[None, :, :] + emis[t][:, None, :]
        history.append(nsf.argmax(axis=1))
        score = nsf.max(axis=1)
    score = score + end[None, :]
    tags = np.zeros((B, T), np.int32)
    best = score.argmax(axis=1)
    tags[:, T - 1] = best
    for s, hist in enumerate(reversed(history)):
        best = hist[np.arange(B), best]
        tags[:, T - 2 - s] = best
    return out_f, out_b, emis, tags


# ---------------------------------- main ----------------------------------- #

if __name__ == "__main__":
    num_tags, vocab_size, embedding_dim, lstm_size = 5, 50, 16, 32
    B, T = 2, 8
    H = lstm_size // 2

    key = jax.random.PRNGKey(0)
    keys = jax.random.split(key, 16)

    def rnd(k, shape, scale=0.1):
        return jax.random.normal(k, shape, dtype=jnp.float32) * scale

    emb = rnd(keys[0], (vocab_size, embedding_dim), 1.0)
    emb = emb.at[0].set(0.0)  # padding_idx=0

    lstm_p = {
        "w_ih_f": rnd(keys[1], (4 * H, embedding_dim)),
        "w_hh_f": rnd(keys[2], (4 * H, H)),
        "b_ih_f": rnd(keys[3], (4 * H,)),
        "b_hh_f": rnd(keys[4], (4 * H,)),
        "w_ih_b": rnd(keys[5], (4 * H, embedding_dim)),
        "w_hh_b": rnd(keys[6], (4 * H, H)),
        "b_ih_b": rnd(keys[7], (4 * H,)),
        "b_hh_b": rnd(keys[8], (4 * H,)),
    }
    w_tag = rnd(keys[9], (num_tags, lstm_size))
    b_tag = rnd(keys[10], (num_tags,))
    start = rnd(keys[11], (num_tags,))
    end = rnd(keys[12], (num_tags,))
    trans = rnd(keys[13], (num_tags, num_tags))

    inputs = jax.random.randint(keys[14], (B, T), 0, vocab_size, dtype=jnp.int32)

    fwd = jax.jit(bilstm_crf_forward)
    tags, lstm_out, emis = fwd(inputs, emb, lstm_p, w_tag, b_tag, start, end, trans)
    tags = jax.block_until_ready(tags)

    ref_out_f, ref_out_b, ref_emis, ref_tags = ref_forward_np(
        inputs, emb, lstm_p, w_tag, b_tag, start, end, trans)

    lstm_np = np.asarray(lstm_out)                           # (2, T, B, H)
    assert np.allclose(lstm_np[0], ref_out_f, atol=1e-3, rtol=1e-3), "fwd LSTM mismatch"
    assert np.allclose(lstm_np[1], ref_out_b, atol=1e-3, rtol=1e-3), "bwd LSTM mismatch"
    assert np.allclose(np.asarray(emis), ref_emis, atol=1e-3, rtol=1e-3), "emission mismatch"
    assert np.array_equal(np.asarray(tags), ref_tags), "Viterbi tag mismatch"

    print("KERNEL_OK")
</pallas_src>

<mosaic_0001>
module attributes {stable_mosaic.version = 11 : i64} {
  func.func @bilstm_crf_kernel(%arg0: memref<2x8xi32, #tpu.memory_space<smem>>, %arg1: memref<50x1x128xf32, #tpu.memory_space<vmem>>, %arg2: memref<50x1x128xf32, #tpu.memory_space<vmem>>, %arg3: memref<32x128xf32, #tpu.memory_space<vmem>>, %arg4: memref<32x5xf32, #tpu.memory_space<vmem>>, %arg5: memref<1x5xf32, #tpu.memory_space<vmem>>, %arg6: memref<1x5xf32, #tpu.memory_space<vmem>>, %arg7: memref<1x5xf32, #tpu.memory_space<vmem>>, %arg8: memref<5x5xf32, #tpu.memory_space<vmem>>, %arg9: memref<2x8xi32, #tpu.memory_space<vmem>>, %arg10: memref<2x8x2x16xf32, #tpu.memory_space<vmem>>, %arg11: memref<8x2x5xf32, #tpu.memory_space<vmem>>) attributes {dimension_semantics = [], scalar_prefetch = 0 : i64, scratch_operands = 0 : i64, tpu.core_type = #tpu.core_type<tc>} {
    %c0 = arith.constant 0 : index
    %c0_0 = arith.constant 0 : index
    %0 = vector.load %arg3[%c0, %c0_0] : memref<32x128xf32, #tpu.memory_space<vmem>>, vector<32x128xf32>
    %c0_1 = arith.constant 0 : index
    %c0_2 = arith.constant 0 : index
    %1 = vector.load %arg4[%c0_1, %c0_2] : memref<32x5xf32, #tpu.memory_space<vmem>>, vector<32x5xf32>
    %c0_3 = arith.constant 0 : index
    %c0_4 = arith.constant 0 : index
    %2 = vector.load %arg5[%c0_3, %c0_4] : memref<1x5xf32, #tpu.memory_space<vmem>>, vector<1x5xf32>
    %c0_5 = arith.constant 0 : index
    %c0_6 = arith.constant 0 : index
    %3 = vector.load %arg6[%c0_5, %c0_6] : memref<1x5xf32, #tpu.memory_space<vmem>>, vector<1x5xf32>
    %c0_7 = arith.constant 0 : index
    %c0_8 = arith.constant 0 : index
    %4 = vector.load %arg7[%c0_7, %c0_8] : memref<1x5xf32, #tpu.memory_space<vmem>>, vector<1x5xf32>
    %c0_9 = arith.constant 0 : index
    %c0_10 = arith.constant 0 : index
    %5 = vector.load %arg8[%c0_9, %c0_10] : memref<5x5xf32, #tpu.memory_space<vmem>>, vector<5x5xf32>
    %6 = tpu.iota {dimensions = array<i32: 0>} : vector<2x128xi32>
    %cst = arith.constant 0.000000e+00 : f32
    %7 = vector.broadcast %cst : f32 to vector<2x32xf32>
    %cst_11 = arith.constant 0.000000e+00 : f32
    %8 = vector.broadcast %cst_11 : f32 to vector<2x32xf32>
    %cst_12 = arith.constant 0.000000e+00 : f32
    %9 = vector.broadcast %cst_12 : f32 to vector<2x128xf32>
    %c0_13 = arith.constant 0 : index
    %c0_14 = arith.constant 0 : index
    %10 = memref.load %arg0[%c0_13, %c0_14] : memref<2x8xi32, #tpu.memory_space<smem>>
    %11 = arith.index_cast %10 : i32 to index
    %c0_15 = arith.constant 0 : index
    %c0_16 = arith.constant 0 : index
    %12 = vector.load %arg1[%11, %c0_15, %c0_16] : memref<50x1x128xf32, #tpu.memory_space<vmem>>, vector<1x1x128xf32>
    %13 = vector.shape_cast %12 : vector<1x1x128xf32> to vector<1x128xf32>
    %c0_17 = arith.constant 0 : index
    %c7 = arith.constant 7 : index
    %14 = memref.load %arg0[%c0_17, %c7] : memref<2x8xi32, #tpu.memory_space<smem>>
    %15 = arith.index_cast %14 : i32 to index
    %c0_18 = arith.constant 0 : index
    %c0_19 = arith.constant 0 : index
    %16 = vector.load %arg2[%15, %c0_18, %c0_19] : memref<50x1x128xf32, #tpu.memory_space<vmem>>, vector<1x1x128xf32>
    %17 = vector.shape_cast %16 : vector<1x1x128xf32> to vector<1x128xf32>
    %18 = arith.addf %13, %17 : vector<1x128xf32>
    %c0_i32 = arith.constant 0 : i32
    %19 = vector.broadcast %c0_i32 : i32 to vector<2x128xi32>
    %20 = arith.cmpi eq, %6, %19 : vector<2x128xi32>
    %21 = vector.shape_cast %18 : vector<1x128xf32> to vector<1x128xf32>
    %22 = vector.broadcast %21 : vector<1x128xf32> to vector<2x128xf32>
    %23 = arith.select %20, %22, %9 : vector<2x128xi1>, vector<2x128xf32>
    %c1 = arith.constant 1 : index
    %c0_20 = arith.constant 0 : index
    %24 = memref.load %arg0[%c1, %c0_20] : memref<2x8xi32, #tpu.memory_space<smem>>
    %25 = arith.index_cast %24 : i32 to index
    %c0_21 = arith.constant 0 : index
    %c0_22 = arith.constant 0 : index
    %26 = vector.load %arg1[%25, %c0_21, %c0_22] : memref<50x1x128xf32, #tpu.memory_space<vmem>>, vector<1x1x128xf32>
    %27 = vector.shape_cast %26 : vector<1x1x128xf32> to vector<1x128xf32>
    %c1_23 = arith.constant 1 : index
    %c7_24 = arith.constant 7 : index
    %28 = memref.load %arg0[%c1_23, %c7_24] : memref<2x8xi32, #tpu.memory_space<smem>>
    %29 = arith.index_cast %28 : i32 to index
    %c0_25 = arith.constant 0 : index
    %c0_26 = arith.constant 0 : index
    %30 = vector.load %arg2[%29, %c0_25, %c0_26] : memref<50x1x128xf32, #tpu.memory_space<vmem>>, vector<1x1x128xf32>
    %31 = vector.shape_cast %30 : vector<1x1x128xf32> to vector<1x128xf32>
    %32 = arith.addf %27, %31 : vector<1x128xf32>
    %c1_i32 = arith.constant 1 : i32
    %33 = vector.broadcast %c1_i32 : i32 to vector<2x128xi32>
    %34 = arith.cmpi eq, %6, %33 : vector<2x128xi32>
    %35 = vector.shape_cast %32 : vector<1x128xf32> to vector<1x128xf32>
    %36 = vector.broadcast %35 : vector<1x128xf32> to vector<2x128xf32>
    %37 = arith.select %34, %36, %23 : vector<2x128xi1>, vector<2x128xf32>
    %cst_27 = arith.constant dense<0.000000e+00> : vector<2x128xf32>
    %38 = tpu.matmul %7, %0, %cst_27 {dimension_numbers = #tpu.dot_dimension_numbers<[1], [0], [0], [1], [0, 0, 1, 1], [], []>} : vector<2x32xf32>, vector<32x128xf32>, vector<2x128xf32> -> vector<2x128xf32>
    %39 = arith.addf %37, %38 : vector<2x128xf32>
    %40 = vector.extract_strided_slice %39 {offsets = [0, 0], sizes = [2, 96], strides = [1, 1]} : vector<2x128xf32> to vector<2x96xf32>
    %41 = arith.negf %40 : vector<2x96xf32>
    %42 = math.exp %41 : vector<2x96xf32>
    %cst_28 = arith.constant 1.000000e+00 : f32
    %43 = vector.broadcast %cst_28 : f32 to vector<2x96xf32>
    %44 = arith.addf %43, %42 : vector<2x96xf32>
    %45 = arith.divf %43, %44 : vector<2x96xf32>
    %46 = vector.extract_strided_slice %39 {offsets = [0, 96], sizes = [2, 32], strides = [1, 1]} : vector<2x128xf32> to vector<2x32xf32>
    %47 = math.tanh %46 : vector<2x32xf32>
    %48 = vector.extract_strided_slice %45 {offsets = [0, 32], sizes = [2, 32], strides = [1, 1]} : vector<2x96xf32> to vector<2x32xf32>
    %49 = arith.mulf %48, %8 : vector<2x32xf32>
    %50 = vector.extract_strided_slice %45 {offsets = [0, 0], sizes = [2, 32], strides = [1, 1]} : vector<2x96xf32> to vector<2x32xf32>
    %51 = arith.mulf %50, %47 : vector<2x32xf32>
    %52 = arith.addf %49, %51 : vector<2x32xf32>
    %53 = vector.extract_strided_slice %45 {offsets = [0, 64], sizes = [2, 32], strides = [1, 1]} : vector<2x96xf32> to vector<2x32xf32>
    %54 = math.tanh %52 : vector<2x32xf32>
    %55 = arith.mulf %53, %54 : vector<2x32xf32>
    %56 = vector.extract_strided_slice %55 {offsets = [0, 0], sizes = [2, 16], strides = [1, 1]} : vector<2x32xf32> to vector<2x16xf32>
    %57 = vector.extract_strided_slice %55 {offsets = [0, 16], sizes = [2, 16], strides = [1, 1]} : vector<2x32xf32> to vector<2x16xf32>
    %c0_29 = arith.constant 0 : index
    %c0_30 = arith.constant 0 : index
    %c0_31 = arith.constant 0 : index
    %c0_32 = arith.constant 0 : index
    %58 = vector.load %arg10[%c0_29, %c0_30, %c0_31, %c0_32] : memref<2x8x2x16xf32, #tpu.memory_space<vmem>>, vector<1x1x2x16xf32>
    %59 = vector.shape_cast %58 : vector<1x1x2x16xf32> to vector<2x16xf32>
    %60 = vector.shape_cast %56 : vector<2x16xf32> to vector<1x1x2x16xf32>
    tpu.vector_store %arg10[%c0_29, %c0_30, %c0_31, %c0_32], %60 {strides = array<i32>} : memref<2x8x2x16xf32, #tpu.memory_space<vmem>>, vector<1x1x2x16xf32>,
    %c1_33 = arith.constant 1 : index
    %c7_34 = arith.constant 7 : index
    %c0_35 = arith.constant 0 : index
    %c0_36 = arith.constant 0 : index
    %61 = vector.load %arg10[%c1_33, %c7_34, %c0_35, %c0_36] : memref<2x8x2x16xf32, #tpu.memory_space<vmem>>, vector<1x1x2x16xf32>
    %62 = vector.shape_cast %61 : vector<1x1x2x16xf32> to vector<2x16xf32>
    %63 = vector.shape_cast %57 : vector<2x16xf32> to vector<1x1x2x16xf32>
    tpu.vector_store %arg10[%c1_33, %c7_34, %c0_35, %c0_36], %63 {strides = array<i32>} : memref<2x8x2x16xf32, #tpu.memory_space<vmem>>, vector<1x1x2x16xf32>,
    %cst_37 = arith.constant 0.000000e+00 : f32
    %64 = vector.broadcast %cst_37 : f32 to vector<2x128xf32>
    %c0_38 = arith.constant 0 : index
    %c1_39 = arith.constant 1 : index
    %65 = memref.load %arg0[%c0_38, %c1_39] : memref<2x8xi32, #tpu.memory_space<smem>>
    %66 = arith.index_cast %65 : i32 to index
    %c0_40 = arith.constant 0 : index
    %c0_41 = arith.constant 0 : index
    %67 = vector.load %arg1[%66, %c0_40, %c0_41] : memref<50x1x128xf32, #tpu.memory_space<vmem>>, vector<1x1x128xf32>
    %68 = vector.shape_cast %67 : vector<1x1x128xf32> to vector<1x128xf32>
    %c0_42 = arith.constant 0 : index
    %c6 = arith.constant 6 : index
    %69 = memref.load %arg0[%c0_42, %c6] : memref<2x8xi32, #tpu.memory_space<smem>>
    %70 = arith.index_cast %69 : i32 to index
    %c0_43 = arith.constant 0 : index
    %c0_44 = arith.constant 0 : index
    %71 = vector.load %arg2[%70, %c0_43, %c0_44] : memref<50x1x128xf32, #tpu.memory_space<vmem>>, vector<1x1x128xf32>
    %72 = vector.shape_cast %71 : vector<1x1x128xf32> to vector<1x128xf32>
    %73 = arith.addf %68, %72 : vector<1x128xf32>
    %c0_i32_45 = arith.constant 0 : i32
    %74 = vector.broadcast %c0_i32_45 : i32 to vector<2x128xi32>
    %75 = arith.cmpi eq, %6, %74 : vector<2x128xi32>
    %76 = vector.shape_cast %73 : vector<1x128xf32> to vector<1x128xf32>
    %77 = vector.broadcast %76 : vector<1x128xf32> to vector<2x128xf32>
    %78 = arith.select %75, %77, %64 : vector<2x128xi1>, vector<2x128xf32>
    %c1_46 = arith.constant 1 : index
    %c1_47 = arith.constant 1 : index
    %79 = memref.load %arg0[%c1_46, %c1_47] : memref<2x8xi32, #tpu.memory_space<smem>>
    %80 = arith.index_cast %79 : i32 to index
    %c0_48 = arith.constant 0 : index
    %c0_49 = arith.constant 0 : index
    %81 = vector.load %arg1[%80, %c0_48, %c0_49] : memref<50x1x128xf32, #tpu.memory_space<vmem>>, vector<1x1x128xf32>
    %82 = vector.shape_cast %81 : vector<1x1x128xf32> to vector<1x128xf32>
    %c1_50 = arith.constant 1 : index
    %c6_51 = arith.constant 6 : index
    %83 = memref.load %arg0[%c1_50, %c6_51] : memref<2x8xi32, #tpu.memory_space<smem>>
    %84 = arith.index_cast %83 : i32 to index
    %c0_52 = arith.constant 0 : index
    %c0_53 = arith.constant 0 : index
    %85 = vector.load %arg2[%84, %c0_52, %c0_53] : memref<50x1x128xf32, #tpu.memory_space<vmem>>, vector<1x1x128xf32>
    %86 = vector.shape_cast %85 : vector<1x1x128xf32> to vector<1x128xf32>
    %87 = arith.addf %82, %86 : vector<1x128xf32>
    %c1_i32_54 = arith.constant 1 : i32
    %88 = vector.broadcast %c1_i32_54 : i32 to vector<2x128xi32>
    %89 = arith.cmpi eq, %6, %88 : vector<2x128xi32>
    %90 = vector.shape_cast %87 : vector<1x128xf32> to vector<1x128xf32>
    %91 = vector.broadcast %90 : vector<1x128xf32> to vector<2x128xf32>
    %92 = arith.select %89, %91, %78 : vector<2x128xi1>, vector<2x128xf32>
    %cst_55 = arith.constant dense<0.000000e+00> : vector<2x128xf32>
    %93 = tpu.matmul %55, %0, %cst_55 {dimension_numbers = #tpu.dot_dimension_numbers<[1], [0], [0], [1], [0, 0, 1, 1], [], []>} : vector<2x32xf32>, vector<32x128xf32>, vector<2x128xf32> -> vector<2x128xf32>
    %94 = arith.addf %92, %93 : vector<2x128xf32>
    %95 = vector.extract_strided_slice %94 {offsets = [0, 0], sizes = [2, 96], strides = [1, 1]} : vector<2x128xf32> to vector<2x96xf32>
    %96 = arith.negf %95 : vector<2x96xf32>
    %97 = math.exp %96 : vector<2x96xf32>
    %cst_56 = arith.constant 1.000000e+00 : f32
    %98 = vector.broadcast %cst_56 : f32 to vector<2x96xf32>
    %99 = arith.addf %98, %97 : vector<2x96xf32>
    %100 = arith.divf %98, %99 : vector<2x96xf32>
    %101 = vector.extract_strided_slice %94 {offsets = [0, 96], sizes = [2, 32], strides = [1, 1]} : vector<2x128xf32> to vector<2x32xf32>
    %102 = math.tanh %101 : vector<2x32xf32>
    %103 = vector.extract_strided_slice %100 {offsets = [0, 32], sizes = [2, 32], strides = [1, 1]} : vector<2x96xf32> to vector<2x32xf32>
    %104 = arith.mulf %103, %52 : vector<2x32xf32>
    %105 = vector.extract_strided_slice %100 {offsets = [0, 0], sizes = [2, 32], strides = [1, 1]} : vector<2x96xf32> to vector<2x32xf32>
    %106 = arith.mulf %105, %102 : vector<2x32xf32>
    %107 = arith.addf %104, %106 : vector<2x32xf32>
    %108 = vector.extract_strided_slice %100 {offsets = [0, 64], sizes = [2, 32], strides = [1, 1]} : vector<2x96xf32> to vector<2x32xf32>
    %109 = math.tanh %107 : vector<2x32xf32>
    %110 = arith.mulf %108, %109 : vector<2x32xf32>
    %111 = vector.extract_strided_slice %110 {offsets = [0, 0], sizes = [2, 16], strides = [1, 1]} : vector<2x32xf32> to vector<2x16xf32>
    %112 = vector.extract_strided_slice %110 {offsets = [0, 16], sizes = [2, 16], strides = [1, 1]} : vector<2x32xf32> to vector<2x16xf32>
    %c0_57 = arith.constant 0 : index
    %c1_58 = arith.constant 1 : index
    %c0_59 = arith.constant 0 : index
    %c0_60 = arith.constant 0 : index
    %113 = vector.load %arg10[%c0_57, %c1_58, %c0_59, %c0_60] : memref<2x8x2x16xf32, #tpu.memory_space<vmem>>, vector<1x1x2x16xf32>
    %114 = vector.shape_cast %113 : vector<1x1x2x16xf32> to vector<2x16xf32>
    %115 = vector.shape_cast %111 : vector<2x16xf32> to vector<1x1x2x16xf32>
    tpu.vector_store %arg10[%c0_57, %c1_58, %c0_59, %c0_60], %115 {strides = array<i32>} : memref<2x8x2x16xf32, #tpu.memory_space<vmem>>, vector<1x1x2x16xf32>,
    %c1_61 = arith.constant 1 : index
    %c6_62 = arith.constant 6 : index
    %c0_63 = arith.constant 0 : index
    %c0_64 = arith.constant 0 : index
    %116 = vector.load %arg10[%c1_61, %c6_62, %c0_63, %c0_64] : memref<2x8x2x16xf32, #tpu.memory_space<vmem>>, vector<1x1x2x16xf32>
    %117 = vector.shape_cast %116 : vector<1x1x2x16xf32> to vector<2x16xf32>
    %118 = vector.shape_cast %112 : vector<2x16xf32> to vector<1x1x2x16xf32>
    tpu.vector_store %arg10[%c1_61, %c6_62, %c0_63, %c0_64], %118 {strides = array<i32>} : memref<2x8x2x16xf32, #tpu.memory_space<vmem>>, vector<1x1x2x16xf32>,
    %cst_65 = arith.constant 0.000000e+00 : f32
    %119 = vector.broadcast %cst_65 : f32 to vector<2x128xf32>
    %c0_66 = arith.constant 0 : index
    %c2 = arith.constant 2 : index
    %120 = memref.load %arg0[%c0_66, %c2] : memref<2x8xi32, #tpu.memory_space<smem>>
    %121 = arith.index_cast %120 : i32 to index
    %c0_67 = arith.constant 0 : index
    %c0_68 = arith.constant 0 : index
    %122 = vector.load %arg1[%121, %c0_67, %c0_68] : memref<50x1x128xf32, #tpu.memory_space<vmem>>, vector<1x1x128xf32>
    %123 = vector.shape_cast %122 : vector<1x1x128xf32> to vector<1x128xf32>
    %c0_69 = arith.constant 0 : index
    %c5 = arith.constant 5 : index
    %124 = memref.load %arg0[%c0_69, %c5] : memref<2x8xi32, #tpu.memory_space<smem>>
    %125 = arith.index_cast %124 : i32 to index
    %c0_70 = arith.constant 0 : index
    %c0_71 = arith.constant 0 : index
    %126 = vector.load %arg2[%125, %c0_70, %c0_71] : memref<50x1x128xf32, #tpu.memory_space<vmem>>, vector<1x1x128xf32>
    %127 = vector.shape_cast %126 : vector<1x1x128xf32> to vector<1x128xf32>
    %128 = arith.addf %123, %127 : vector<1x128xf32>
    %c0_i32_72 = arith.constant 0 : i32
    %129 = vector.broadcast %c0_i32_72 : i32 to vector<2x128xi32>
    %130 = arith.cmpi eq, %6, %129 : vector<2x128xi32>
    %131 = vector.shape_cast %128 : vector<1x128xf32> to vector<1x128xf32>
    %132 = vector.broadcast %131 : vector<1x128xf32> to vector<2x128xf32>
    %133 = arith.select %130, %132, %119 : vector<2x128xi1>, vector<2x128xf32>
    %c1_73 = arith.constant 1 : index
    %c2_74 = arith.constant 2 : index
    %134 = memref.load %arg0[%c1_73, %c2_74] : memref<2x8xi32, #tpu.memory_space<smem>>
    %135 = arith.index_cast %134 : i32 to index
    %c0_75 = arith.constant 0 : index
    %c0_76 = arith.constant 0 : index
    %136 = vector.load %arg1[%135, %c0_75, %c0_76] : memref<50x1x128xf32, #tpu.memory_space<vmem>>, vector<1x1x128xf32>
    %137 = vector.shape_cast %136 : vector<1x1x128xf32> to vector<1x128xf32>
    %c1_77 = arith.constant 1 : index
    %c5_78 = arith.constant 5 : index
    %138 = memref.load %arg0[%c1_77, %c5_78] : memref<2x8xi32, #tpu.memory_space<smem>>
    %139 = arith.index_cast %138 : i32 to index
    %c0_79 = arith.constant 0 : index
    %c0_80 = arith.constant 0 : index
    %140 = vector.load %arg2[%139, %c0_79, %c0_80] : memref<50x1x128xf32, #tpu.memory_space<vmem>>, vector<1x1x128xf32>
    %141 = vector.shape_cast %140 : vector<1x1x128xf32> to vector<1x128xf32>
    %142 = arith.addf %137, %141 : vector<1x128xf32>
    %c1_i32_81 = arith.constant 1 : i32
    %143 = vector.broadcast %c1_i32_81 : i32 to vector<2x128xi32>
    %144 = arith.cmpi eq, %6, %143 : vector<2x128xi32>
    %145 = vector.shape_cast %142 : vector<1x128xf32> to vector<1x128xf32>
    %146 = vector.broadcast %145 : vector<1x128xf32> to vector<2x128xf32>
    %147 = arith.select %144, %146, %133 : vector<2x128xi1>, vector<2x128xf32>
    %cst_82 = arith.constant dense<0.000000e+00> : vector<2x128xf32>
    %148 = tpu.matmul %110, %0, %cst_82 {dimension_numbers = #tpu.dot_dimension_numbers<[1], [0], [0], [1], [0, 0, 1, 1], [], []>} : vector<2x32xf32>, vector<32x128xf32>, vector<2x128xf32> -> vector<2x128xf32>
    %149 = arith.addf %147, %148 : vector<2x128xf32>
    %150 = vector.extract_strided_slice %149 {offsets = [0, 0], sizes = [2, 96], strides = [1, 1]} : vector<2x128xf32> to vector<2x96xf32>
    %151 = arith.negf %150 : vector<2x96xf32>
    %152 = math.exp %151 : vector<2x96xf32>
    %cst_83 = arith.constant 1.000000e+00 : f32
    %153 = vector.broadcast %cst_83 : f32 to vector<2x96xf32>
    %154 = arith.addf %153, %152 : vector<2x96xf32>
    %155 = arith.divf %153, %154 : vector<2x96xf32>
    %156 = vector.extract_strided_slice %149 {offsets = [0, 96], sizes = [2, 32], strides = [1, 1]} : vector<2x128xf32> to vector<2x32xf32>
    %157 = math.tanh %156 : vector<2x32xf32>
    %158 = vector.extract_strided_slice %155 {offsets = [0, 32], sizes = [2, 32], strides = [1, 1]} : vector<2x96xf32> to vector<2x32xf32>
    %159 = arith.mulf %158, %107 : vector<2x32xf32>
    %160 = vector.extract_strided_slice %155 {offsets = [0, 0], sizes = [2, 32], strides = [1, 1]} : vector<2x96xf32> to vector<2x32xf32>
    %161 = arith.mulf %160, %157 : vector<2x32xf32>
    %162 = arith.addf %159, %161 : vector<2x32xf32>
    %163 = vector.extract_strided_slice %155 {offsets = [0, 64], sizes = [2, 32], strides = [1, 1]} : vector<2x96xf32> to vector<2x32xf32>
    %164 = math.tanh %162 : vector<2x32xf32>
    %165 = arith.mulf %163, %164 : vector<2x32xf32>
    %166 = vector.extract_strided_slice %165 {offsets = [0, 0], sizes = [2, 16], strides = [1, 1]} : vector<2x32xf32> to vector<2x16xf32>
    %167 = vector.extract_strided_slice %165 {offsets = [0, 16], sizes = [2, 16], strides = [1, 1]} : vector<2x32xf32> to vector<2x16xf32>
    %c0_84 = arith.constant 0 : index
    %c2_85 = arith.constant 2 : index
    %c0_86 = arith.constant 0 : index
    %c0_87 = arith.constant 0 : index
    %168 = vector.load %arg10[%c0_84, %c2_85, %c0_86, %c0_87] : memref<2x8x2x16xf32, #tpu.memory_space<vmem>>, vector<1x1x2x16xf32>
    %169 = vector.shape_cast %168 : vector<1x1x2x16xf32> to vector<2x16xf32>
    %170 = vector.shape_cast %166 : vector<2x16xf32> to vector<1x1x2x16xf32>
    tpu.vector_store %arg10[%c0_84, %c2_85, %c0_86, %c0_87], %170 {strides = array<i32>} : memref<2x8x2x16xf32, #tpu.memory_space<vmem>>, vector<1x1x2x16xf32>,
    %c1_88 = arith.constant 1 : index
    %c5_89 = arith.constant 5 : index
    %c0_90 = arith.constant 0 : index
    %c0_91 = arith.constant 0 : index
    %171 = vector.load %arg10[%c1_88, %c5_89, %c0_90, %c0_91] : memref<2x8x2x16xf32, #tpu.memory_space<vmem>>, vector<1x1x2x16xf32>
    %172 = vector.shape_cast %171 : vector<1x1x2x16xf32> to vector<2x16xf32>
    %173 = vector.shape_cast %167 : vector<2x16xf32> to vector<1x1x2x16xf32>
    tpu.vector_store %arg10[%c1_88, %c5_89, %c0_90, %c0_91], %173 {strides = array<i32>} : memref<2x8x2x16xf32, #tpu.memory_space<vmem>>, vector<1x1x2x16xf32>,
    %cst_92 = arith.constant 0.000000e+00 : f32
    %174 = vector.broadcast %cst_92 : f32 to vector<2x128xf32>
    %c0_93 = arith.constant 0 : index
    %c3 = arith.constant 3 : index
    %175 = memref.load %arg0[%c0_93, %c3] : memref<2x8xi32, #tpu.memory_space<smem>>
    %176 = arith.index_cast %175 : i32 to index
    %c0_94 = arith.constant 0 : index
    %c0_95 = arith.constant 0 : index
    %177 = vector.load %arg1[%176, %c0_94, %c0_95] : memref<50x1x128xf32, #tpu.memory_space<vmem>>, vector<1x1x128xf32>
    %178 = vector.shape_cast %177 : vector<1x1x128xf32> to vector<1x128xf32>
    %c0_96 = arith.constant 0 : index
    %c4 = arith.constant 4 : index
    %179 = memref.load %arg0[%c0_96, %c4] : memref<2x8xi32, #tpu.memory_space<smem>>
    %180 = arith.index_cast %179 : i32 to index
    %c0_97 = arith.constant 0 : index
    %c0_98 = arith.constant 0 : index
    %181 = vector.load %arg2[%180, %c0_97, %c0_98] : memref<50x1x128xf32, #tpu.memory_space<vmem>>, vector<1x1x128xf32>
    %182 = vector.shape_cast %181 : vector<1x1x128xf32> to vector<1x128xf32>
    %183 = arith.addf %178, %182 : vector<1x128xf32>
    %c0_i32_99 = arith.constant 0 : i32
    %184 = vector.broadcast %c0_i32_99 : i32 to vector<2x128xi32>
    %185 = arith.cmpi eq, %6, %184 : vector<2x128xi32>
    %186 = vector.shape_cast %183 : vector<1x128xf32> to vector<1x128xf32>
    %187 = vector.broadcast %186 : vector<1x128xf32> to vector<2x128xf32>
    %188 = arith.select %185, %187, %174 : vector<2x128xi1>, vector<2x128xf32>
    %c1_100 = arith.constant 1 : index
    %c3_101 = arith.constant 3 : index
    %189 = memref.load %arg0[%c1_100, %c3_101] : memref<2x8xi32, #tpu.memory_space<smem>>
    %190 = arith.index_cast %189 : i32 to index
    %c0_102 = arith.constant 0 : index
    %c0_103 = arith.constant 0 : index
    %191 = vector.load %arg1[%190, %c0_102, %c0_103] : memref<50x1x128xf32, #tpu.memory_space<vmem>>, vector<1x1x128xf32>
    %192 = vector.shape_cast %191 : vector<1x1x128xf32> to vector<1x128xf32>
    %c1_104 = arith.constant 1 : index
    %c4_105 = arith.constant 4 : index
    %193 = memref.load %arg0[%c1_104, %c4_105] : memref<2x8xi32, #tpu.memory_space<smem>>
    %194 = arith.index_cast %193 : i32 to index
    %c0_106 = arith.constant 0 : index
    %c0_107 = arith.constant 0 : index
    %195 = vector.load %arg2[%194, %c0_106, %c0_107] : memref<50x1x128xf32, #tpu.memory_space<vmem>>, vector<1x1x128xf32>
    %196 = vector.shape_cast %195 : vector<1x1x128xf32> to vector<1x128xf32>
    %197 = arith.addf %192, %196 : vector<1x128xf32>
    %c1_i32_108 = arith.constant 1 : i32
    %198 = vector.broadcast %c1_i32_108 : i32 to vector<2x128xi32>
    %199 = arith.cmpi eq, %6, %198 : vector<2x128xi32>
    %200 = vector.shape_cast %197 : vector<1x128xf32> to vector<1x128xf32>
    %201 = vector.broadcast %200 : vector<1x128xf32> to vector<2x128xf32>
    %202 = arith.select %199, %201, %188 : vector<2x128xi1>, vector<2x128xf32>
    %cst_109 = arith.constant dense<0.000000e+00> : vector<2x128xf32>
    %203 = tpu.matmul %165, %0, %cst_109 {dimension_numbers = #tpu.dot_dimension_numbers<[1], [0], [0], [1], [0, 0, 1, 1], [], []>} : vector<2x32xf32>, vector<32x128xf32>, vector<2x128xf32> -> vector<2x128xf32>
    %204 = arith.addf %202, %203 : vector<2x128xf32>
    %205 = vector.extract_strided_slice %204 {offsets = [0, 0], sizes = [2, 96], strides = [1, 1]} : vector<2x128xf32> to vector<2x96xf32>
    %206 = arith.negf %205 : vector<2x96xf32>
    %207 = math.exp %206 : vector<2x96xf32>
    %cst_110 = arith.constant 1.000000e+00 : f32
    %208 = vector.broadcast %cst_110 : f32 to vector<2x96xf32>
    %209 = arith.addf %208, %207 : vector<2x96xf32>
    %210 = arith.divf %208, %209 : vector<2x96xf32>
    %211 = vector.extract_strided_slice %204 {offsets = [0, 96], sizes = [2, 32], strides = [1, 1]} : vector<2x128xf32> to vector<2x32xf32>
    %212 = math.tanh %211 : vector<2x32xf32>
    %213 = vector.extract_strided_slice %210 {offsets = [0, 32], sizes = [2, 32], strides = [1, 1]} : vector<2x96xf32> to vector<2x32xf32>
    %214 = arith.mulf %213, %162 : vector<2x32xf32>
    %215 = vector.extract_strided_slice %210 {offsets = [0, 0], sizes = [2, 32], strides = [1, 1]} : vector<2x96xf32> to vector<2x32xf32>
    %216 = arith.mulf %215, %212 : vector<2x32xf32>
    %217 = arith.addf %214, %216 : vector<2x32xf32>
    %218 = vector.extract_strided_slice %210 {offsets = [0, 64], sizes = [2, 32], strides = [1, 1]} : vector<2x96xf32> to vector<2x32xf32>
    %219 = math.tanh %217 : vector<2x32xf32>
    %220 = arith.mulf %218, %219 : vector<2x32xf32>
    %221 = vector.extract_strided_slice %220 {offsets = [0, 0], sizes = [2, 16], strides = [1, 1]} : vector<2x32xf32> to vector<2x16xf32>
    %222 = vector.extract_strided_slice %220 {offsets = [0, 16], sizes = [2, 16], strides = [1, 1]} : vector<2x32xf32> to vector<2x16xf32>
    %c0_111 = arith.constant 0 : index
    %c3_112 = arith.constant 3 : index
    %c0_113 = arith.constant 0 : index
    %c0_114 = arith.constant 0 : index
    %223 = vector.load %arg10[%c0_111, %c3_112, %c0_113, %c0_114] : memref<2x8x2x16xf32, #tpu.memory_space<vmem>>, vector<1x1x2x16xf32>
    %224 = vector.shape_cast %223 : vector<1x1x2x16xf32> to vector<2x16xf32>
    %225 = vector.shape_cast %221 : vector<2x16xf32> to vector<1x1x2x16xf32>
    tpu.vector_store %arg10[%c0_111, %c3_112, %c0_113, %c0_114], %225 {strides = array<i32>} : memref<2x8x2x16xf32, #tpu.memory_space<vmem>>, vector<1x1x2x16xf32>,
    %c1_115 = arith.constant 1 : index
    %c4_116 = arith.constant 4 : index
    %c0_117 = arith.constant 0 : index
    %c0_118 = arith.constant 0 : index
    %226 = vector.load %arg10[%c1_115, %c4_116, %c0_117, %c0_118] : memref<2x8x2x16xf32, #tpu.memory_space<vmem>>, vector<1x1x2x16xf32>
    %227 = vector.shape_cast %226 : vector<1x1x2x16xf32> to vector<2x16xf32>
    %228 = vector.shape_cast %222 : vector<2x16xf32> to vector<1x1x2x16xf32>
    tpu.vector_store %arg10[%c1_115, %c4_116, %c0_117, %c0_118], %228 {strides = array<i32>} : memref<2x8x2x16xf32, #tpu.memory_space<vmem>>, vector<1x1x2x16xf32>,
    %cst_119 = arith.constant 0.000000e+00 : f32
    %229 = vector.broadcast %cst_119 : f32 to vector<2x128xf32>
    %c0_120 = arith.constant 0 : index
    %c4_121 = arith.constant 4 : index
    %230 = memref.load %arg0[%c0_120, %c4_121] : memref<2x8xi32, #tpu.memory_space<smem>>
    %231 = arith.index_cast %230 : i32 to index
    %c0_122 = arith.constant 0 : index
    %c0_123 = arith.constant 0 : index
    %232 = vector.load %arg1[%231, %c0_122, %c0_123] : memref<50x1x128xf32, #tpu.memory_space<vmem>>, vector<1x1x128xf32>
    %233 = vector.shape_cast %232 : vector<1x1x128xf32> to vector<1x128xf32>
    %c0_124 = arith.constant 0 : index
    %c3_125 = arith.constant 3 : index
    %234 = memref.load %arg0[%c0_124, %c3_125] : memref<2x8xi32, #tpu.memory_space<smem>>
    %235 = arith.index_cast %234 : i32 to index
    %c0_126 = arith.constant 0 : index
    %c0_127 = arith.constant 0 : index
    %236 = vector.load %arg2[%235, %c0_126, %c0_127] : memref<50x1x128xf32, #tpu.memory_space<vmem>>, vector<1x1x128xf32>
    %237 = vector.shape_cast %236 : vector<1x1x128xf32> to vector<1x128xf32>
    %238 = arith.addf %233, %237 : vector<1x128xf32>
    %c0_i32_128 = arith.constant 0 : i32
    %239 = vector.broadcast %c0_i32_128 : i32 to vector<2x128xi32>
    %240 = arith.cmpi eq, %6, %239 : vector<2x128xi32>
    %241 = vector.shape_cast %238 : vector<1x128xf32> to vector<1x128xf32>
    %242 = vector.broadcast %241 : vector<1x128xf32> to vector<2x128xf32>
    %243 = arith.select %240, %242, %229 : vector<2x128xi1>, vector<2x128xf32>
    %c1_129 = arith.constant 1 : index
    %c4_130 = arith.constant 4 : index
    %244 = memref.load %arg0[%c1_129, %c4_130] : memref<2x8xi32, #tpu.memory_space<smem>>
    %245 = arith.index_cast %244 : i32 to index
    %c0_131 = arith.constant 0 : index
    %c0_132 = arith.constant 0 : index
    %246 = vector.load %arg1[%245, %c0_131, %c0_132] : memref<50x1x128xf32, #tpu.memory_space<vmem>>, vector<1x1x128xf32>
    %247 = vector.shape_cast %246 : vector<1x1x128xf32> to vector<1x128xf32>
    %c1_133 = arith.constant 1 : index
    %c3_134 = arith.constant 3 : index
    %248 = memref.load %arg0[%c1_133, %c3_134] : memref<2x8xi32, #tpu.memory_space<smem>>
    %249 = arith.index_cast %248 : i32 to index
    %c0_135 = arith.constant 0 : index
    %c0_136 = arith.constant 0 : index
    %250 = vector.load %arg2[%249, %c0_135, %c0_136] : memref<50x1x128xf32, #tpu.memory_space<vmem>>, vector<1x1x128xf32>
    %251 = vector.shape_cast %250 : vector<1x1x128xf32> to vector<1x128xf32>
    %252 = arith.addf %247, %251 : vector<1x128xf32>
    %c1_i32_137 = arith.constant 1 : i32
    %253 = vector.broadcast %c1_i32_137 : i32 to vector<2x128xi32>
    %254 = arith.cmpi eq, %6, %253 : vector<2x128xi32>
    %255 = vector.shape_cast %252 : vector<1x128xf32> to vector<1x128xf32>
    %256 = vector.broadcast %255 : vector<1x128xf32> to vector<2x128xf32>
    %257 = arith.select %254, %256, %243 : vector<2x128xi1>, vector<2x128xf32>
    %cst_138 = arith.constant dense<0.000000e+00> : vector<2x128xf32>
    %258 = tpu.matmul %220, %0, %cst_138 {dimension_numbers = #tpu.dot_dimension_numbers<[1], [0], [0], [1], [0, 0, 1, 1], [], []>} : vector<2x32xf32>, vector<32x128xf32>, vector<2x128xf32> -> vector<2x128xf32>
    %259 = arith.addf %257, %258 : vector<2x128xf32>
    %260 = vector.extract_strided_slice %259 {offsets = [0, 0], sizes = [2, 96], strides = [1, 1]} : vector<2x128xf32> to vector<2x96xf32>
    %261 = arith.negf %260 : vector<2x96xf32>
    %262 = math.exp %261 : vector<2x96xf32>
    %cst_139 = arith.constant 1.000000e+00 : f32
    %263 = vector.broadcast %cst_139 : f32 to vector<2x96xf32>
    %264 = arith.addf %263, %262 : vector<2x96xf32>
    %265 = arith.divf %263, %264 : vector<2x96xf32>
    %266 = vector.extract_strided_slice %259 {offsets = [0, 96], sizes = [2, 32], strides = [1, 1]} : vector<2x128xf32> to vector<2x32xf32>
    %267 = math.tanh %266 : vector<2x32xf32>
    %268 = vector.extract_strided_slice %265 {offsets = [0, 32], sizes = [2, 32], strides = [1, 1]} : vector<2x96xf32> to vector<2x32xf32>
    %269 = arith.mulf %268, %217 : vector<2x32xf32>
    %270 = vector.extract_strided_slice %265 {offsets = [0, 0], sizes = [2, 32], strides = [1, 1]} : vector<2x96xf32> to vector<2x32xf32>
    %271 = arith.mulf %270, %267 : vector<2x32xf32>
    %272 = arith.addf %269, %271 : vector<2x32xf32>
    %273 = vector.extract_strided_slice %265 {offsets = [0, 64], sizes = [2, 32], strides = [1, 1]} : vector<2x96xf32> to vector<2x32xf32>
    %274 = math.tanh %272 : vector<2x32xf32>
    %275 = arith.mulf %273, %274 : vector<2x32xf32>
    %276 = vector.extract_strided_slice %275 {offsets = [0, 0], sizes = [2, 16], strides = [1, 1]} : vector<2x32xf32> to vector<2x16xf32>
    %277 = vector.extract_strided_slice %275 {offsets = [0, 16], sizes = [2, 16], strides = [1, 1]} : vector<2x32xf32> to vector<2x16xf32>
    %c0_140 = arith.constant 0 : index
    %c4_141 = arith.constant 4 : index
    %c0_142 = arith.constant 0 : index
    %c0_143 = arith.constant 0 : index
    %278 = vector.load %arg10[%c0_140, %c4_141, %c0_142, %c0_143] : memref<2x8x2x16xf32, #tpu.memory_space<vmem>>, vector<1x1x2x16xf32>
    %279 = vector.shape_cast %278 : vector<1x1x2x16xf32> to vector<2x16xf32>
    %280 = vector.shape_cast %276 : vector<2x16xf32> to vector<1x1x2x16xf32>
    tpu.vector_store %arg10[%c0_140, %c4_141, %c0_142, %c0_143], %280 {strides = array<i32>} : memref<2x8x2x16xf32, #tpu.memory_space<vmem>>, vector<1x1x2x16xf32>,
    %c1_144 = arith.constant 1 : index
    %c3_145 = arith.constant 3 : index
    %c0_146 = arith.constant 0 : index
    %c0_147 = arith.constant 0 : index
    %281 = vector.load %arg10[%c1_144, %c3_145, %c0_146, %c0_147] : memref<2x8x2x16xf32, #tpu.memory_space<vmem>>, vector<1x1x2x16xf32>
    %282 = vector.shape_cast %281 : vector<1x1x2x16xf32> to vector<2x16xf32>
    %283 = vector.shape_cast %277 : vector<2x16xf32> to vector<1x1x2x16xf32>
    tpu.vector_store %arg10[%c1_144, %c3_145, %c0_146, %c0_147], %283 {strides = array<i32>} : memref<2x8x2x16xf32, #tpu.memory_space<vmem>>, vector<1x1x2x16xf32>,
    %cst_148 = arith.constant 0.000000e+00 : f32
    %284 = vector.broadcast %cst_148 : f32 to vector<2x128xf32>
    %c0_149 = arith.constant 0 : index
    %c5_150 = arith.constant 5 : index
    %285 = memref.load %arg0[%c0_149, %c5_150] : memref<2x8xi32, #tpu.memory_space<smem>>
    %286 = arith.index_cast %285 : i32 to index
    %c0_151 = arith.constant 0 : index
    %c0_152 = arith.constant 0 : index
    %287 = vector.load %arg1[%286, %c0_151, %c0_152] : memref<50x1x128xf32, #tpu.memory_space<vmem>>, vector<1x1x128xf32>
    %288 = vector.shape_cast %287 : vector<1x1x128xf32> to vector<1x128xf32>
    %c0_153 = arith.constant 0 : index
    %c2_154 = arith.constant 2 : index
    %289 = memref.load %arg0[%c0_153, %c2_154] : memref<2x8xi32, #tpu.memory_space<smem>>
    %290 = arith.index_cast %289 : i32 to index
    %c0_155 = arith.constant 0 : index
    %c0_156 = arith.constant 0 : index
    %291 = vector.load %arg2[%290, %c0_155, %c0_156] : memref<50x1x128xf32, #tpu.memory_space<vmem>>, vector<1x1x128xf32>
    %292 = vector.shape_cast %291 : vector<1x1x128xf32> to vector<1x128xf32>
    %293 = arith.addf %288, %292 : vector<1x128xf32>
    %c0_i32_157 = arith.constant 0 : i32
    %294 = vector.broadcast %c0_i32_157 : i32 to vector<2x128xi32>
    %295 = arith.cmpi eq, %6, %294 : vector<2x128xi32>
    %296 = vector.shape_cast %293 : vector<1x128xf32> to vector<1x128xf32>
    %297 = vector.broadcast %296 : vector<1x128xf32> to vector<2x128xf32>
    %298 = arith.select %295, %297, %284 : vector<2x128xi1>, vector<2x128xf32>
    %c1_158 = arith.constant 1 : index
    %c5_159 = arith.constant 5 : index
    %299 = memref.load %arg0[%c1_158, %c5_159] : memref<2x8xi32, #tpu.memory_space<smem>>
    %300 = arith.index_cast %299 : i32 to index
    %c0_160 = arith.constant 0 : index
    %c0_161 = arith.constant 0 : index
    %301 = vector.load %arg1[%300, %c0_160, %c0_161] : memref<50x1x128xf32, #tpu.memory_space<vmem>>, vector<1x1x128xf32>
    %302 = vector.shape_cast %301 : vector<1x1x128xf32> to vector<1x128xf32>
    %c1_162 = arith.constant 1 : index
    %c2_163 = arith.constant 2 : index
    %303 = memref.load %arg0[%c1_162, %c2_163] : memref<2x8xi32, #tpu.memory_space<smem>>
    %304 = arith.index_cast %303 : i32 to index
    %c0_164 = arith.constant 0 : index
    %c0_165 = arith.constant 0 : index
    %305 = vector.load %arg2[%304, %c0_164, %c0_165] : memref<50x1x128xf32, #tpu.memory_space<vmem>>, vector<1x1x128xf32>
    %306 = vector.shape_cast %305 : vector<1x1x128xf32> to vector<1x128xf32>
    %307 = arith.addf %302, %306 : vector<1x128xf32>
    %c1_i32_166 = arith.constant 1 : i32
    %308 = vector.broadcast %c1_i32_166 : i32 to vector<2x128xi32>
    %309 = arith.cmpi eq, %6, %308 : vector<2x128xi32>
    %310 = vector.shape_cast %307 : vector<1x128xf32> to vector<1x128xf32>
    %311 = vector.broadcast %310 : vector<1x128xf32> to vector<2x128xf32>
    %312 = arith.select %309, %311, %298 : vector<2x128xi1>, vector<2x128xf32>
    %cst_167 = arith.constant dense<0.000000e+00> : vector<2x128xf32>
    %313 = tpu.matmul %275, %0, %cst_167 {dimension_numbers = #tpu.dot_dimension_numbers<[1], [0], [0], [1], [0, 0, 1, 1], [], []>} : vector<2x32xf32>, vector<32x128xf32>, vector<2x128xf32> -> vector<2x128xf32>
    %314 = arith.addf %312, %313 : vector<2x128xf32>
    %315 = vector.extract_strided_slice %314 {offsets = [0, 0], sizes = [2, 96], strides = [1, 1]} : vector<2x128xf32> to vector<2x96xf32>
    %316 = arith.negf %315 : vector<2x96xf32>
    %317 = math.exp %316 : vector<2x96xf32>
    %cst_168 = arith.constant 1.000000e+00 : f32
    %318 = vector.broadcast %cst_168 : f32 to vector<2x96xf32>
    %319 = arith.addf %318, %317 : vector<2x96xf32>
    %320 = arith.divf %318, %319 : vector<2x96xf32>
    %321 = vector.extract_strided_slice %314 {offsets = [0, 96], sizes = [2, 32], strides = [1, 1]} : vector<2x128xf32> to vector<2x32xf32>
    %322 = math.tanh %321 : vector<2x32xf32>
    %323 = vector.extract_strided_slice %320 {offsets = [0, 32], sizes = [2, 32], strides = [1, 1]} : vector<2x96xf32> to vector<2x32xf32>
    %324 = arith.mulf %323, %272 : vector<2x32xf32>
    %325 = vector.extract_strided_slice %320 {offsets = [0, 0], sizes = [2, 32], strides = [1, 1]} : vector<2x96xf32> to vector<2x32xf32>
    %326 = arith.mulf %325, %322 : vector<2x32xf32>
    %327 = arith.addf %324, %326 : vector<2x32xf32>
    %328 = vector.extract_strided_slice %320 {offsets = [0, 64], sizes = [2, 32], strides = [1, 1]} : vector<2x96xf32> to vector<2x32xf32>
    %329 = math.tanh %327 : vector<2x32xf32>
    %330 = arith.mulf %328, %329 : vector<2x32xf32>
    %331 = vector.extract_strided_slice %330 {offsets = [0, 0], sizes = [2, 16], strides = [1, 1]} : vector<2x32xf32> to vector<2x16xf32>
    %332 = vector.extract_strided_slice %330 {offsets = [0, 16], sizes = [2, 16], strides = [1, 1]} : vector<2x32xf32> to vector<2x16xf32>
    %c0_169 = arith.constant 0 : index
    %c5_170 = arith.constant 5 : index
    %c0_171 = arith.constant 0 : index
    %c0_172 = arith.constant 0 : index
    %333 = vector.load %arg10[%c0_169, %c5_170, %c0_171, %c0_172] : memref<2x8x2x16xf32, #tpu.memory_space<vmem>>, vector<1x1x2x16xf32>
    %334 = vector.shape_cast %333 : vector<1x1x2x16xf32> to vector<2x16xf32>
    %335 = vector.shape_cast %331 : vector<2x16xf32> to vector<1x1x2x16xf32>
    tpu.vector_store %arg10[%c0_169, %c5_170, %c0_171, %c0_172], %335 {strides = array<i32>} : memref<2x8x2x16xf32, #tpu.memory_space<vmem>>, vector<1x1x2x16xf32>,
    %c1_173 = arith.constant 1 : index
    %c2_174 = arith.constant 2 : index
    %c0_175 = arith.constant 0 : index
    %c0_176 = arith.constant 0 : index
    %336 = vector.load %arg10[%c1_173, %c2_174, %c0_175, %c0_176] : memref<2x8x2x16xf32, #tpu.memory_space<vmem>>, vector<1x1x2x16xf32>
    %337 = vector.shape_cast %336 : vector<1x1x2x16xf32> to vector<2x16xf32>
    %338 = vector.shape_cast %332 : vector<2x16xf32> to vector<1x1x2x16xf32>
    tpu.vector_store %arg10[%c1_173, %c2_174, %c0_175, %c0_176], %338 {strides = array<i32>} : memref<2x8x2x16xf32, #tpu.memory_space<vmem>>, vector<1x1x2x16xf32>,
    %cst_177 = arith.constant 0.000000e+00 : f32
    %339 = vector.broadcast %cst_177 : f32 to vector<2x128xf32>
    %c0_178 = arith.constant 0 : index
    %c6_179 = arith.constant 6 : index
    %340 = memref.load %arg0[%c0_178, %c6_179] : memref<2x8xi32, #tpu.memory_space<smem>>
    %341 = arith.index_cast %340 : i32 to index
    %c0_180 = arith.constant 0 : index
    %c0_181 = arith.constant 0 : index
    %342 = vector.load %arg1[%341, %c0_180, %c0_181] : memref<50x1x128xf32, #tpu.memory_space<vmem>>, vector<1x1x128xf32>
    %343 = vector.shape_cast %342 : vector<1x1x128xf32> to vector<1x128xf32>
    %c0_182 = arith.constant 0 : index
    %c1_183 = arith.constant 1 : index
    %344 = memref.load %arg0[%c0_182, %c1_183] : memref<2x8xi32, #tpu.memory_space<smem>>
    %345 = arith.index_cast %344 : i32 to index
    %c0_184 = arith.constant 0 : index
    %c0_185 = arith.constant 0 : index
    %346 = vector.load %arg2[%345, %c0_184, %c0_185] : memref<50x1x128xf32, #tpu.memory_space<vmem>>, vector<1x1x128xf32>
    %347 = vector.shape_cast %346 : vector<1x1x128xf32> to vector<1x128xf32>
    %348 = arith.addf %343, %347 : vector<1x128xf32>
    %c0_i32_186 = arith.constant 0 : i32
    %349 = vector.broadcast %c0_i32_186 : i32 to vector<2x128xi32>
    %350 = arith.cmpi eq, %6, %349 : vector<2x128xi32>
    %351 = vector.shape_cast %348 : vector<1x128xf32> to vector<1x128xf32>
    %352 = vector.broadcast %351 : vector<1x128xf32> to vector<2x128xf32>
    %353 = arith.select %350, %352, %339 : vector<2x128xi1>, vector<2x128xf32>
    %c1_187 = arith.constant 1 : index
    %c6_188 = arith.constant 6 : index
    %354 = memref.load %arg0[%c1_187, %c6_188] : memref<2x8xi32, #tpu.memory_space<smem>>
    %355 = arith.index_cast %354 : i32 to index
    %c0_189 = arith.constant 0 : index
    %c0_190 = arith.constant 0 : index
    %356 = vector.load %arg1[%355, %c0_189, %c0_190] : memref<50x1x128xf32, #tpu.memory_space<vmem>>, vector<1x1x128xf32>
    %357 = vector.shape_cast %356 : vector<1x1x128xf32> to vector<1x128xf32>
    %c1_191 = arith.constant 1 : index
    %c1_192 = arith.constant 1 : index
    %358 = memref.load %arg0[%c1_191, %c1_192] : memref<2x8xi32, #tpu.memory_space<smem>>
    %359 = arith.index_cast %358 : i32 to index
    %c0_193 = arith.constant 0 : index
    %c0_194 = arith.constant 0 : index
    %360 = vector.load %arg2[%359, %c0_193, %c0_194] : memref<50x1x128xf32, #tpu.memory_space<vmem>>, vector<1x1x128xf32>
    %361 = vector.shape_cast %360 : vector<1x1x128xf32> to vector<1x128xf32>
    %362 = arith.addf %357, %361 : vector<1x128xf32>
    %c1_i32_195 = arith.constant 1 : i32
    %363 = vector.broadcast %c1_i32_195 : i32 to vector<2x128xi32>
    %364 = arith.cmpi eq, %6, %363 : vector<2x128xi32>
    %365 = vector.shape_cast %362 : vector<1x128xf32> to vector<1x128xf32>
    %366 = vector.broadcast %365 : vector<1x128xf32> to vector<2x128xf32>
    %367 = arith.select %364, %366, %353 : vector<2x128xi1>, vector<2x128xf32>
    %cst_196 = arith.constant dense<0.000000e+00> : vector<2x128xf32>
    %368 = tpu.matmul %330, %0, %cst_196 {dimension_numbers = #tpu.dot_dimension_numbers<[1], [0], [0], [1], [0, 0, 1, 1], [], []>} : vector<2x32xf32>, vector<32x128xf32>, vector<2x128xf32> -> vector<2x128xf32>
    %369 = arith.addf %367, %368 : vector<2x128xf32>
    %370 = vector.extract_strided_slice %369 {offsets = [0, 0], sizes = [2, 96], strides = [1, 1]} : vector<2x128xf32> to vector<2x96xf32>
    %371 = arith.negf %370 : vector<2x96xf32>
    %372 = math.exp %371 : vector<2x96xf32>
    %cst_197 = arith.constant 1.000000e+00 : f32
    %373 = vector.broadcast %cst_197 : f32 to vector<2x96xf32>
    %374 = arith.addf %373, %372 : vector<2x96xf32>
    %375 = arith.divf %373, %374 : vector<2x96xf32>
    %376 = vector.extract_strided_slice %369 {offsets = [0, 96], sizes = [2, 32], strides = [1, 1]} : vector<2x128xf32> to vector<2x32xf32>
    %377 = math.tanh %376 : vector<2x32xf32>
    %378 = vector.extract_strided_slice %375 {offsets = [0, 32], sizes = [2, 32], strides = [1, 1]} : vector<2x96xf32> to vector<2x32xf32>
    %379 = arith.mulf %378, %327 : vector<2x32xf32>
    %380 = vector.extract_strided_slice %375 {offsets = [0, 0], sizes = [2, 32], strides = [1, 1]} : vector<2x96xf32> to vector<2x32xf32>
    %381 = arith.mulf %380, %377 : vector<2x32xf32>
    %382 = arith.addf %379, %381 : vector<2x32xf32>
    %383 = vector.extract_strided_slice %375 {offsets = [0, 64], sizes = [2, 32], strides = [1, 1]} : vector<2x96xf32> to vector<2x32xf32>
    %384 = math.tanh %382 : vector<2x32xf32>
    %385 = arith.mulf %383, %384 : vector<2x32xf32>
    %386 = vector.extract_strided_slice %385 {offsets = [0, 0], sizes = [2, 16], strides = [1, 1]} : vector<2x32xf32> to vector<2x16xf32>
    %387 = vector.extract_strided_slice %385 {offsets = [0, 16], sizes = [2, 16], strides = [1, 1]} : vector<2x32xf32> to vector<2x16xf32>
    %c0_198 = arith.constant 0 : index
    %c6_199 = arith.constant 6 : index
    %c0_200 = arith.constant 0 : index
    %c0_201 = arith.constant 0 : index
    %388 = vector.load %arg10[%c0_198, %c6_199, %c0_200, %c0_201] : memref<2x8x2x16xf32, #tpu.memory_space<vmem>>, vector<1x1x2x16xf32>
    %389 = vector.shape_cast %388 : vector<1x1x2x16xf32> to vector<2x16xf32>
    %390 = vector.shape_cast %386 : vector<2x16xf32> to vector<1x1x2x16xf32>
    tpu.vector_store %arg10[%c0_198, %c6_199, %c0_200, %c0_201], %390 {strides = array<i32>} : memref<2x8x2x16xf32, #tpu.memory_space<vmem>>, vector<1x1x2x16xf32>,
    %c1_202 = arith.constant 1 : index
    %c1_203 = arith.constant 1 : index
    %c0_204 = arith.constant 0 : index
    %c0_205 = arith.constant 0 : index
    %391 = vector.load %arg10[%c1_202, %c1_203, %c0_204, %c0_205] : memref<2x8x2x16xf32, #tpu.memory_space<vmem>>, vector<1x1x2x16xf32>
    %392 = vector.shape_cast %391 : vector<1x1x2x16xf32> to vector<2x16xf32>
    %393 = vector.shape_cast %387 : vector<2x16xf32> to vector<1x1x2x16xf32>
    tpu.vector_store %arg10[%c1_202, %c1_203, %c0_204, %c0_205], %393 {strides = array<i32>} : memref<2x8x2x16xf32, #tpu.memory_space<vmem>>, vector<1x1x2x16xf32>,
    %cst_206 = arith.constant 0.000000e+00 : f32
    %394 = vector.broadcast %cst_206 : f32 to vector<2x128xf32>
    %c0_207 = arith.constant 0 : index
    %c7_208 = arith.constant 7 : index
    %395 = memref.load %arg0[%c0_207, %c7_208] : memref<2x8xi32, #tpu.memory_space<smem>>
    %396 = arith.index_cast %395 : i32 to index
    %c0_209 = arith.constant 0 : index
    %c0_210 = arith.constant 0 : index
    %397 = vector.load %arg1[%396, %c0_209, %c0_210] : memref<50x1x128xf32, #tpu.memory_space<vmem>>, vector<1x1x128xf32>
    %398 = vector.shape_cast %397 : vector<1x1x128xf32> to vector<1x128xf32>
    %c0_211 = arith.constant 0 : index
    %c0_212 = arith.constant 0 : index
    %399 = memref.load %arg0[%c0_211, %c0_212] : memref<2x8xi32, #tpu.memory_space<smem>>
    %400 = arith.index_cast %399 : i32 to index
    %c0_213 = arith.constant 0 : index
    %c0_214 = arith.constant 0 : index
    %401 = vector.load %arg2[%400, %c0_213, %c0_214] : memref<50x1x128xf32, #tpu.memory_space<vmem>>, vector<1x1x128xf32>
    %402 = vector.shape_cast %401 : vector<1x1x128xf32> to vector<1x128xf32>
    %403 = arith.addf %398, %402 : vector<1x128xf32>
    %c0_i32_215 = arith.constant 0 : i32
    %404 = vector.broadcast %c0_i32_215 : i32 to vector<2x128xi32>
    %405 = arith.cmpi eq, %6, %404 : vector<2x128xi32>
    %406 = vector.shape_cast %403 : vector<1x128xf32> to vector<1x128xf32>
    %407 = vector.broadcast %406 : vector<1x128xf32> to vector<2x128xf32>
    %408 = arith.select %405, %407, %394 : vector<2x128xi1>, vector<2x128xf32>
    %c1_216 = arith.constant 1 : index
    %c7_217 = arith.constant 7 : index
    %409 = memref.load %arg0[%c1_216, %c7_217] : memref<2x8xi32, #tpu.memory_space<smem>>
    %410 = arith.index_cast %409 : i32 to index
    %c0_218 = arith.constant 0 : index
    %c0_219 = arith.constant 0 : index
    %411 = vector.load %arg1[%410, %c0_218, %c0_219] : memref<50x1x128xf32, #tpu.memory_space<vmem>>, vector<1x1x128xf32>
    %412 = vector.shape_cast %411 : vector<1x1x128xf32> to vector<1x128xf32>
    %c1_220 = arith.constant 1 : index
    %c0_221 = arith.constant 0 : index
    %413 = memref.load %arg0[%c1_220, %c0_221] : memref<2x8xi32, #tpu.memory_space<smem>>
    %414 = arith.index_cast %413 : i32 to index
    %c0_222 = arith.constant 0 : index
    %c0_223 = arith.constant 0 : index
    %415 = vector.load %arg2[%414, %c0_222, %c0_223] : memref<50x1x128xf32, #tpu.memory_space<vmem>>, vector<1x1x128xf32>
    %416 = vector.shape_cast %415 : vector<1x1x128xf32> to vector<1x128xf32>
    %417 = arith.addf %412, %416 : vector<1x128xf32>
    %c1_i32_224 = arith.constant 1 : i32
    %418 = vector.broadcast %c1_i32_224 : i32 to vector<2x128xi32>
    %419 = arith.cmpi eq, %6, %418 : vector<2x128xi32>
    %420 = vector.shape_cast %417 : vector<1x128xf32> to vector<1x128xf32>
    %421 = vector.broadcast %420 : vector<1x128xf32> to vector<2x128xf32>
    %422 = arith.select %419, %421, %408 : vector<2x128xi1>, vector<2x128xf32>
    %cst_225 = arith.constant dense<0.000000e+00> : vector<2x128xf32>
    %423 = tpu.matmul %385, %0, %cst_225 {dimension_numbers = #tpu.dot_dimension_numbers<[1], [0], [0], [1], [0, 0, 1, 1], [], []>} : vector<2x32xf32>, vector<32x128xf32>, vector<2x128xf32> -> vector<2x128xf32>
    %424 = arith.addf %422, %423 : vector<2x128xf32>
    %425 = vector.extract_strided_slice %424 {offsets = [0, 0], sizes = [2, 96], strides = [1, 1]} : vector<2x128xf32> to vector<2x96xf32>
    %426 = arith.negf %425 : vector<2x96xf32>
    %427 = math.exp %426 : vector<2x96xf32>
    %cst_226 = arith.constant 1.000000e+00 : f32
    %428 = vector.broadcast %cst_226 : f32 to vector<2x96xf32>
    %429 = arith.addf %428, %427 : vector<2x96xf32>
    %430 = arith.divf %428, %429 : vector<2x96xf32>
    %431 = vector.extract_strided_slice %424 {offsets = [0, 96], sizes = [2, 32], strides = [1, 1]} : vector<2x128xf32> to vector<2x32xf32>
    %432 = math.tanh %431 : vector<2x32xf32>
    %433 = vector.extract_strided_slice %430 {offsets = [0, 32], sizes = [2, 32], strides = [1, 1]} : vector<2x96xf32> to vector<2x32xf32>
    %434 = arith.mulf %433, %382 : vector<2x32xf32>
    %435 = vector.extract_strided_slice %430 {offsets = [0, 0], sizes = [2, 32], strides = [1, 1]} : vector<2x96xf32> to vector<2x32xf32>
    %436 = arith.mulf %435, %432 : vector<2x32xf32>
    %437 = arith.addf %434, %436 : vector<2x32xf32>
    %438 = vector.extract_strided_slice %430 {offsets = [0, 64], sizes = [2, 32], strides = [1, 1]} : vector<2x96xf32> to vector<2x32xf32>
    %439 = math.tanh %437 : vector<2x32xf32>
    %440 = arith.mulf %438, %439 : vector<2x32xf32>
    %441 = vector.extract_strided_slice %440 {offsets = [0, 0], sizes = [2, 16], strides = [1, 1]} : vector<2x32xf32> to vector<2x16xf32>
    %442 = vector.extract_strided_slice %440 {offsets = [0, 16], sizes = [2, 16], strides = [1, 1]} : vector<2x32xf32> to vector<2x16xf32>
    %c0_227 = arith.constant 0 : index
    %c7_228 = arith.constant 7 : index
    %c0_229 = arith.constant 0 : index
    %c0_230 = arith.constant 0 : index
    %443 = vector.load %arg10[%c0_227, %c7_228, %c0_229, %c0_230] : memref<2x8x2x16xf32, #tpu.memory_space<vmem>>, vector<1x1x2x16xf32>
    %444 = vector.shape_cast %443 : vector<1x1x2x16xf32> to vector<2x16xf32>
    %445 = vector.shape_cast %441 : vector<2x16xf32> to vector<1x1x2x16xf32>
    tpu.vector_store %arg10[%c0_227, %c7_228, %c0_229, %c0_230], %445 {strides = array<i32>} : memref<2x8x2x16xf32, #tpu.memory_space<vmem>>, vector<1x1x2x16xf32>,
    %c1_231 = arith.constant 1 : index
    %c0_232 = arith.constant 0 : index
    %c0_233 = arith.constant 0 : index
    %c0_234 = arith.constant 0 : index
    %446 = vector.load %arg10[%c1_231, %c0_232, %c0_233, %c0_234] : memref<2x8x2x16xf32, #tpu.memory_space<vmem>>, vector<1x1x2x16xf32>
    %447 = vector.shape_cast %446 : vector<1x1x2x16xf32> to vector<2x16xf32>
    %448 = vector.shape_cast %442 : vector<2x16xf32> to vector<1x1x2x16xf32>
    tpu.vector_store %arg10[%c1_231, %c0_232, %c0_233, %c0_234], %448 {strides = array<i32>} : memref<2x8x2x16xf32, #tpu.memory_space<vmem>>, vector<1x1x2x16xf32>,
    %449 = vector.extract_strided_slice %1 {offsets = [0, 0], sizes = [16, 5], strides = [1, 1]} : vector<32x5xf32> to vector<16x5xf32>
    %450 = vector.extract_strided_slice %1 {offsets = [16, 0], sizes = [16, 5], strides = [1, 1]} : vector<32x5xf32> to vector<16x5xf32>
    %cst_235 = arith.constant dense<0.000000e+00> : vector<2x5xf32>
    %451 = tpu.matmul %56, %449, %cst_235 {dimension_numbers = #tpu.dot_dimension_numbers<[1], [0], [0], [1], [0, 0, 1, 1], [], []>} : vector<2x16xf32>, vector<16x5xf32>, vector<2x5xf32> -> vector<2x5xf32>
    %cst_236 = arith.constant dense<0.000000e+00> : vector<2x5xf32>
    %452 = tpu.matmul %442, %450, %cst_236 {dimension_numbers = #tpu.dot_dimension_numbers<[1], [0], [0], [1], [0, 0, 1, 1], [], []>} : vector<2x16xf32>, vector<16x5xf32>, vector<2x5xf32> -> vector<2x5xf32>
    %453 = arith.addf %451, %452 : vector<2x5xf32>
    %454 = vector.broadcast %2 : vector<1x5xf32> to vector<2x5xf32>
    %455 = arith.addf %453, %454 : vector<2x5xf32>
    %c0_237 = arith.constant 0 : index
    %c0_238 = arith.constant 0 : index
    %c0_239 = arith.constant 0 : index
    %456 = vector.load %arg11[%c0_237, %c0_238, %c0_239] : memref<8x2x5xf32, #tpu.memory_space<vmem>>, vector<1x2x5xf32>
    %457 = vector.shape_cast %456 : vector<1x2x5xf32> to vector<2x5xf32>
    %458 = vector.shape_cast %455 : vector<2x5xf32> to vector<1x2x5xf32>
    tpu.vector_store %arg11[%c0_237, %c0_238, %c0_239], %458 {strides = array<i32>} : memref<8x2x5xf32, #tpu.memory_space<vmem>>, vector<1x2x5xf32>,
    %cst_240 = arith.constant dense<0.000000e+00> : vector<2x5xf32>
    %459 = tpu.matmul %111, %449, %cst_240 {dimension_numbers = #tpu.dot_dimension_numbers<[1], [0], [0], [1], [0, 0, 1, 1], [], []>} : vector<2x16xf32>, vector<16x5xf32>, vector<2x5xf32> -> vector<2x5xf32>
    %cst_241 = arith.constant dense<0.000000e+00> : vector<2x5xf32>
    %460 = tpu.matmul %387, %450, %cst_241 {dimension_numbers = #tpu.dot_dimension_numbers<[1], [0], [0], [1], [0, 0, 1, 1], [], []>} : vector<2x16xf32>, vector<16x5xf32>, vector<2x5xf32> -> vector<2x5xf32>
    %461 = arith.addf %459, %460 : vector<2x5xf32>
    %462 = vector.broadcast %2 : vector<1x5xf32> to vector<2x5xf32>
    %463 = arith.addf %461, %462 : vector<2x5xf32>
    %c1_242 = arith.constant 1 : index
    %c0_243 = arith.constant 0 : index
    %c0_244 = arith.constant 0 : index
    %464 = vector.load %arg11[%c1_242, %c0_243, %c0_244] : memref<8x2x5xf32, #tpu.memory_space<vmem>>, vector<1x2x5xf32>
    %465 = vector.shape_cast %464 : vector<1x2x5xf32> to vector<2x5xf32>
    %466 = vector.shape_cast %463 : vector<2x5xf32> to vector<1x2x5xf32>
    tpu.vector_store %arg11[%c1_242, %c0_243, %c0_244], %466 {strides = array<i32>} : memref<8x2x5xf32, #tpu.memory_space<vmem>>, vector<1x2x5xf32>,
    %cst_245 = arith.constant dense<0.000000e+00> : vector<2x5xf32>
    %467 = tpu.matmul %166, %449, %cst_245 {dimension_numbers = #tpu.dot_dimension_numbers<[1], [0], [0], [1], [0, 0, 1, 1], [], []>} : vector<2x16xf32>, vector<16x5xf32>, vector<2x5xf32> -> vector<2x5xf32>
    %cst_246 = arith.constant dense<0.000000e+00> : vector<2x5xf32>
    %468 = tpu.matmul %332, %450, %cst_246 {dimension_numbers = #tpu.dot_dimension_numbers<[1], [0], [0], [1], [0, 0, 1, 1], [], []>} : vector<2x16xf32>, vector<16x5xf32>, vector<2x5xf32> -> vector<2x5xf32>
    %469 = arith.addf %467, %468 : vector<2x5xf32>
    %470 = vector.broadcast %2 : vector<1x5xf32> to vector<2x5xf32>
    %471 = arith.addf %469, %470 : vector<2x5xf32>
    %c2_247 = arith.constant 2 : index
    %c0_248 = arith.constant 0 : index
    %c0_249 = arith.constant 0 : index
    %472 = vector.load %arg11[%c2_247, %c0_248, %c0_249] : memref<8x2x5xf32, #tpu.memory_space<vmem>>, vector<1x2x5xf32>
    %473 = vector.shape_cast %472 : vector<1x2x5xf32> to vector<2x5xf32>
    %474 = vector.shape_cast %471 : vector<2x5xf32> to vector<1x2x5xf32>
    tpu.vector_store %arg11[%c2_247, %c0_248, %c0_249], %474 {strides = array<i32>} : memref<8x2x5xf32, #tpu.memory_space<vmem>>, vector<1x2x5xf32>,
    %cst_250 = arith.constant dense<0.000000e+00> : vector<2x5xf32>
    %475 = tpu.matmul %221, %449, %cst_250 {dimension_numbers = #tpu.dot_dimension_numbers<[1], [0], [0], [1], [0, 0, 1, 1], [], []>} : vector<2x16xf32>, vector<16x5xf32>, vector<2x5xf32> -> vector<2x5xf32>
    %cst_251 = arith.constant dense<0.000000e+00> : vector<2x5xf32>
    %476 = tpu.matmul %277, %450, %cst_251 {dimension_numbers = #tpu.dot_dimension_numbers<[1], [0], [0], [1], [0, 0, 1, 1], [], []>} : vector<2x16xf32>, vector<16x5xf32>, vector<2x5xf32> -> vector<2x5xf32>
    %477 = arith.addf %475, %476 : vector<2x5xf32>
    %478 = vector.broadcast %2 : vector<1x5xf32> to vector<2x5xf32>
    %479 = arith.addf %477, %478 : vector<2x5xf32>
    %c3_252 = arith.constant 3 : index
    %c0_253 = arith.constant 0 : index
    %c0_254 = arith.constant 0 : index
    %480 = vector.load %arg11[%c3_252, %c0_253, %c0_254] : memref<8x2x5xf32, #tpu.memory_space<vmem>>, vector<1x2x5xf32>
    %481 = vector.shape_cast %480 : vector<1x2x5xf32> to vector<2x5xf32>
    %482 = vector.shape_cast %479 : vector<2x5xf32> to vector<1x2x5xf32>
    tpu.vector_store %arg11[%c3_252, %c0_253, %c0_254], %482 {strides = array<i32>} : memref<8x2x5xf32, #tpu.memory_space<vmem>>, vector<1x2x5xf32>,
    %cst_255 = arith.constant dense<0.000000e+00> : vector<2x5xf32>
    %483 = tpu.matmul %276, %449, %cst_255 {dimension_numbers = #tpu.dot_dimension_numbers<[1], [0], [0], [1], [0, 0, 1, 1], [], []>} : vector<2x16xf32>, vector<16x5xf32>, vector<2x5xf32> -> vector<2x5xf32>
    %cst_256 = arith.constant dense<0.000000e+00> : vector<2x5xf32>
    %484 = tpu.matmul %222, %450, %cst_256 {dimension_numbers = #tpu.dot_dimension_numbers<[1], [0], [0], [1], [0, 0, 1, 1], [], []>} : vector<2x16xf32>, vector<16x5xf32>, vector<2x5xf32> -> vector<2x5xf32>
    %485 = arith.addf %483, %484 : vector<2x5xf32>
    %486 = vector.broadcast %2 : vector<1x5xf32> to vector<2x5xf32>
    %487 = arith.addf %485, %486 : vector<2x5xf32>
    %c4_257 = arith.constant 4 : index
    %c0_258 = arith.constant 0 : index
    %c0_259 = arith.constant 0 : index
    %488 = vector.load %arg11[%c4_257, %c0_258, %c0_259] : memref<8x2x5xf32, #tpu.memory_space<vmem>>, vector<1x2x5xf32>
    %489 = vector.shape_cast %488 : vector<1x2x5xf32> to vector<2x5xf32>
    %490 = vector.shape_cast %487 : vector<2x5xf32> to vector<1x2x5xf32>
    tpu.vector_store %arg11[%c4_257, %c0_258, %c0_259], %490 {strides = array<i32>} : memref<8x2x5xf32, #tpu.memory_space<vmem>>, vector<1x2x5xf32>,
    %cst_260 = arith.constant dense<0.000000e+00> : vector<2x5xf32>
    %491 = tpu.matmul %331, %449, %cst_260 {dimension_numbers = #tpu.dot_dimension_numbers<[1], [0], [0], [1], [0, 0, 1, 1], [], []>} : vector<2x16xf32>, vector<16x5xf32>, vector<2x5xf32> -> vector<2x5xf32>
    %cst_261 = arith.constant dense<0.000000e+00> : vector<2x5xf32>
    %492 = tpu.matmul %167, %450, %cst_261 {dimension_numbers = #tpu.dot_dimension_numbers<[1], [0], [0], [1], [0, 0, 1, 1], [], []>} : vector<2x16xf32>, vector<16x5xf32>, vector<2x5xf32> -> vector<2x5xf32>
    %493 = arith.addf %491, %492 : vector<2x5xf32>
    %494 = vector.broadcast %2 : vector<1x5xf32> to vector<2x5xf32>
    %495 = arith.addf %493, %494 : vector<2x5xf32>
    %c5_262 = arith.constant 5 : index
    %c0_263 = arith.constant 0 : index
    %c0_264 = arith.constant 0 : index
    %496 = vector.load %arg11[%c5_262, %c0_263, %c0_264] : memref<8x2x5xf32, #tpu.memory_space<vmem>>, vector<1x2x5xf32>
    %497 = vector.shape_cast %496 : vector<1x2x5xf32> to vector<2x5xf32>
    %498 = vector.shape_cast %495 : vector<2x5xf32> to vector<1x2x5xf32>
    tpu.vector_store %arg11[%c5_262, %c0_263, %c0_264], %498 {strides = array<i32>} : memref<8x2x5xf32, #tpu.memory_space<vmem>>, vector<1x2x5xf32>,
    %cst_265 = arith.constant dense<0.000000e+00> : vector<2x5xf32>
    %499 = tpu.matmul %386, %449, %cst_265 {dimension_numbers = #tpu.dot_dimension_numbers<[1], [0], [0], [1], [0, 0, 1, 1], [], []>} : vector<2x16xf32>, vector<16x5xf32>, vector<2x5xf32> -> vector<2x5xf32>
    %cst_266 = arith.constant dense<0.000000e+00> : vector<2x5xf32>
    %500 = tpu.matmul %112, %450, %cst_266 {dimension_numbers = #tpu.dot_dimension_numbers<[1], [0], [0], [1], [0, 0, 1, 1], [], []>} : vector<2x16xf32>, vector<16x5xf32>, vector<2x5xf32> -> vector<2x5xf32>
    %501 = arith.addf %499, %500 : vector<2x5xf32>
    %502 = vector.broadcast %2 : vector<1x5xf32> to vector<2x5xf32>
    %503 = arith.addf %501, %502 : vector<2x5xf32>
    %c6_267 = arith.constant 6 : index
    %c0_268 = arith.constant 0 : index
    %c0_269 = arith.constant 0 : index
    %504 = vector.load %arg11[%c6_267, %c0_268, %c0_269] : memref<8x2x5xf32, #tpu.memory_space<vmem>>, vector<1x2x5xf32>
    %505 = vector.shape_cast %504 : vector<1x2x5xf32> to vector<2x5xf32>
    %506 = vector.shape_cast %503 : vector<2x5xf32> to vector<1x2x5xf32>
    tpu.vector_store %arg11[%c6_267, %c0_268, %c0_269], %506 {strides = array<i32>} : memref<8x2x5xf32, #tpu.memory_space<vmem>>, vector<1x2x5xf32>,
    %cst_270 = arith.constant dense<0.000000e+00> : vector<2x5xf32>
    %507 = tpu.matmul %441, %449, %cst_270 {dimension_numbers = #tpu.dot_dimension_numbers<[1], [0], [0], [1], [0, 0, 1, 1], [], []>} : vector<2x16xf32>, vector<16x5xf32>, vector<2x5xf32> -> vector<2x5xf32>
    %cst_271 = arith.constant dense<0.000000e+00> : vector<2x5xf32>
    %508 = tpu.matmul %57, %450, %cst_271 {dimension_numbers = #tpu.dot_dimension_numbers<[1], [0], [0], [1], [0, 0, 1, 1], [], []>} : vector<2x16xf32>, vector<16x5xf32>, vector<2x5xf32> -> vector<2x5xf32>
    %509 = arith.addf %507, %508 : vector<2x5xf32>
    %510 = vector.broadcast %2 : vector<1x5xf32> to vector<2x5xf32>
    %511 = arith.addf %509, %510 : vector<2x5xf32>
    %c7_272 = arith.constant 7 : index
    %c0_273 = arith.constant 0 : index
    %c0_274 = arith.constant 0 : index
    %512 = vector.load %arg11[%c7_272, %c0_273, %c0_274] : memref<8x2x5xf32, #tpu.memory_space<vmem>>, vector<1x2x5xf32>
    %513 = vector.shape_cast %512 : vector<1x2x5xf32> to vector<2x5xf32>
    %514 = vector.shape_cast %511 : vector<2x5xf32> to vector<1x2x5xf32>
    tpu.vector_store %arg11[%c7_272, %c0_273, %c0_274], %514 {strides = array<i32>} : memref<8x2x5xf32, #tpu.memory_space<vmem>>, vector<1x2x5xf32>,
    %515 = tpu.iota {dimensions = array<i32: 1>} : vector<2x5xi32>
    %516 = arith.sitofp %515 : vector<2x5xi32> to vector<2x5xf32>
    %517 = tpu.iota {dimensions = array<i32: 1>} : vector<2x5x5xi32>
    %518 = arith.sitofp %517 : vector<2x5x5xi32> to vector<2x5x5xf32>
    %519 = vector.broadcast %3 : vector<1x5xf32> to vector<2x5xf32>
    %520 = arith.addf %519, %455 : vector<2x5xf32>
    %521 = vector.shape_cast %520 : vector<2x5xf32> to vector<2x5x1xf32>
    %522 = vector.shape_cast %5 : vector<5x5xf32> to vector<1x5x5xf32>
    %523 = vector.broadcast %521 : vector<2x5x1xf32> to vector<2x5x5xf32>
    %524 = vector.broadcast %522 : vector<1x5x5xf32> to vector<2x5x5xf32>
    %525 = arith.addf %523, %524 : vector<2x5x5xf32>
    %526 = vector.shape_cast %463 : vector<2x5xf32> to vector<2x1x5xf32>
    %527 = vector.broadcast %526 : vector<2x1x5xf32> to vector<2x5x5xf32>
    %528 = arith.addf %525, %527 : vector<2x5x5xf32>
    %cst_275 = arith.constant dense<0xFF800000> : vector<2x5xf32>
    %529 = vector.multi_reduction <maximumf>, %528, %cst_275 [1] : vector<2x5x5xf32> to vector<2x5xf32>
    %530 = vector.shape_cast %529 : vector<2x5xf32> to vector<2x1x5xf32>
    %531 = vector.broadcast %530 : vector<2x1x5xf32> to vector<2x5x5xf32>
    %532 = arith.cmpf oeq, %528, %531 : vector<2x5x5xf32>
    %cst_276 = arith.constant 5.000000e+00 : f32
    %533 = vector.broadcast %cst_276 : f32 to vector<2x5x5xf32>
    %534 = arith.select %532, %518, %533 : vector<2x5x5xi1>, vector<2x5x5xf32>
    %cst_277 = arith.constant dense<0x7F800000> : vector<2x5xf32>
    %535 = vector.multi_reduction <minimumf>, %534, %cst_277 [1] : vector<2x5x5xf32> to vector<2x5xf32>
    %536 = vector.shape_cast %530 : vector<2x1x5xf32> to vector<2x5xf32>
    %537 = vector.shape_cast %536 : vector<2x5xf32> to vector<2x5x1xf32>
    %538 = vector.shape_cast %5 : vector<5x5xf32> to vector<1x5x5xf32>
    %539 = vector.broadcast %537 : vector<2x5x1xf32> to vector<2x5x5xf32>
    %540 = vector.broadcast %538 : vector<1x5x5xf32> to vector<2x5x5xf32>
    %541 = arith.addf %539, %540 : vector<2x5x5xf32>
    %542 = vector.shape_cast %471 : vector<2x5xf32> to vector<2x1x5xf32>
    %543 = vector.broadcast %542 : vector<2x1x5xf32> to vector<2x5x5xf32>
    %544 = arith.addf %541, %543 : vector<2x5x5xf32>
    %cst_278 = arith.constant dense<0xFF800000> : vector<2x5xf32>
    %545 = vector.multi_reduction <maximumf>, %544, %cst_278 [1] : vector<2x5x5xf32> to vector<2x5xf32>
    %546 = vector.shape_cast %545 : vector<2x5xf32> to vector<2x1x5xf32>
    %547 = vector.broadcast %546 : vector<2x1x5xf32> to vector<2x5x5xf32>
    %548 = arith.cmpf oeq, %544, %547 : vector<2x5x5xf32>
    %cst_279 = arith.constant 5.000000e+00 : f32
    %549 = vector.broadcast %cst_279 : f32 to vector<2x5x5xf32>
    %550 = arith.select %548, %518, %549 : vector<2x5x5xi1>, vector<2x5x5xf32>
    %cst_280 = arith.constant dense<0x7F800000> : vector<2x5xf32>
    %551 = vector.multi_reduction <minimumf>, %550, %cst_280 [1] : vector<2x5x5xf32> to vector<2x5xf32>
    %552 = vector.shape_cast %546 : vector<2x1x5xf32> to vector<2x5xf32>
    %553 = vector.shape_cast %552 : vector<2x5xf32> to vector<2x5x1xf32>
    %554 = vector.shape_cast %5 : vector<5x5xf32> to vector<1x5x5xf32>
    %555 = vector.broadcast %553 : vector<2x5x1xf32> to vector<2x5x5xf32>
    %556 = vector.broadcast %554 : vector<1x5x5xf32> to vector<2x5x5xf32>
    %557 = arith.addf %555, %556 : vector<2x5x5xf32>
    %558 = vector.shape_cast %479 : vector<2x5xf32> to vector<2x1x5xf32>
    %559 = vector.broadcast %558 : vector<2x1x5xf32> to vector<2x5x5xf32>
    %560 = arith.addf %557, %559 : vector<2x5x5xf32>
    %cst_281 = arith.constant dense<0xFF800000> : vector<2x5xf32>
    %561 = vector.multi_reduction <maximumf>, %560, %cst_281 [1] : vector<2x5x5xf32> to vector<2x5xf32>
    %562 = vector.shape_cast %561 : vector<2x5xf32> to vector<2x1x5xf32>
    %563 = vector.broadcast %562 : vector<2x1x5xf32> to vector<2x5x5xf32>
    %564 = arith.cmpf oeq, %560, %563 : vector<2x5x5xf32>
    %cst_282 = arith.constant 5.000000e+00 : f32
    %565 = vector.broadcast %cst_282 : f32 to vector<2x5x5xf32>
    %566 = arith.select %564, %518, %565 : vector<2x5x5xi1>, vector<2x5x5xf32>
    %cst_283 = arith.constant dense<0x7F800000> : vector<2x5xf32>
    %567 = vector.multi_reduction <minimumf>, %566, %cst_283 [1] : vector<2x5x5xf32> to vector<2x5xf32>
    %568 = vector.shape_cast %562 : vector<2x1x5xf32> to vector<2x5xf32>
    %569 = vector.shape_cast %568 : vector<2x5xf32> to vector<2x5x1xf32>
    %570 = vector.shape_cast %5 : vector<5x5xf32> to vector<1x5x5xf32>
    %571 = vector.broadcast %569 : vector<2x5x1xf32> to vector<2x5x5xf32>
    %572 = vector.broadcast %570 : vector<1x5x5xf32> to vector<2x5x5xf32>
    %573 = arith.addf %571, %572 : vector<2x5x5xf32>
    %574 = vector.shape_cast %487 : vector<2x5xf32> to vector<2x1x5xf32>
    %575 = vector.broadcast %574 : vector<2x1x5xf32> to vector<2x5x5xf32>
    %576 = arith.addf %573, %575 : vector<2x5x5xf32>
    %cst_284 = arith.constant dense<0xFF800000> : vector<2x5xf32>
    %577 = vector.multi_reduction <maximumf>, %576, %cst_284 [1] : vector<2x5x5xf32> to vector<2x5xf32>
    %578 = vector.shape_cast %577 : vector<2x5xf32> to vector<2x1x5xf32>
    %579 = vector.broadcast %578 : vector<2x1x5xf32> to vector<2x5x5xf32>
    %580 = arith.cmpf oeq, %576, %579 : vector<2x5x5xf32>
    %cst_285 = arith.constant 5.000000e+00 : f32
    %581 = vector.broadcast %cst_285 : f32 to vector<2x5x5xf32>
    %582 = arith.select %580, %518, %581 : vector<2x5x5xi1>, vector<2x5x5xf32>
    %cst_286 = arith.constant dense<0x7F800000> : vector<2x5xf32>
    %583 = vector.multi_reduction <minimumf>, %582, %cst_286 [1] : vector<2x5x5xf32> to vector<2x5xf32>
    %584 = vector.shape_cast %578 : vector<2x1x5xf32> to vector<2x5xf32>
    %585 = vector.shape_cast %584 : vector<2x5xf32> to vector<2x5x1xf32>
    %586 = vector.shape_cast %5 : vector<5x5xf32> to vector<1x5x5xf32>
    %587 = vector.broadcast %585 : vector<2x5x1xf32> to vector<2x5x5xf32>
    %588 = vector.broadcast %586 : vector<1x5x5xf32> to vector<2x5x5xf32>
    %589 = arith.addf %587, %588 : vector<2x5x5xf32>
    %590 = vector.shape_cast %495 : vector<2x5xf32> to vector<2x1x5xf32>
    %591 = vector.broadcast %590 : vector<2x1x5xf32> to vector<2x5x5xf32>
    %592 = arith.addf %589, %591 : vector<2x5x5xf32>
    %cst_287 = arith.constant dense<0xFF800000> : vector<2x5xf32>
    %593 = vector.multi_reduction <maximumf>, %592, %cst_287 [1] : vector<2x5x5xf32> to vector<2x5xf32>
    %594 = vector.shape_cast %593 : vector<2x5xf32> to vector<2x1x5xf32>
    %595 = vector.broadcast %594 : vector<2x1x5xf32> to vector<2x5x5xf32>
    %596 = arith.cmpf oeq, %592, %595 : vector<2x5x5xf32>
    %cst_288 = arith.constant 5.000000e+00 : f32
    %597 = vector.broadcast %cst_288 : f32 to vector<2x5x5xf32>
    %598 = arith.select %596, %518, %597 : vector<2x5x5xi1>, vector<2x5x5xf32>
    %cst_289 = arith.constant dense<0x7F800000> : vector<2x5xf32>
    %599 = vector.multi_reduction <minimumf>, %598, %cst_289 [1] : vector<2x5x5xf32> to vector<2x5xf32>
    %600 = vector.shape_cast %594 : vector<2x1x5xf32> to vector<2x5xf32>
    %601 = vector.shape_cast %600 : vector<2x5xf32> to vector<2x5x1xf32>
    %602 = vector.shape_cast %5 : vector<5x5xf32> to vector<1x5x5xf32>
    %603 = vector.broadcast %601 : vector<2x5x1xf32> to vector<2x5x5xf32>
    %604 = vector.broadcast %602 : vector<1x5x5xf32> to vector<2x5x5xf32>
    %605 = arith.addf %603, %604 : vector<2x5x5xf32>
    %606 = vector.shape_cast %503 : vector<2x5xf32> to vector<2x1x5xf32>
    %607 = vector.broadcast %606 : vector<2x1x5xf32> to vector<2x5x5xf32>
    %608 = arith.addf %605, %607 : vector<2x5x5xf32>
    %cst_290 = arith.constant dense<0xFF800000> : vector<2x5xf32>
    %609 = vector.multi_reduction <maximumf>, %608, %cst_290 [1] : vector<2x5x5xf32> to vector<2x5xf32>
    %610 = vector.shape_cast %609 : vector<2x5xf32> to vector<2x1x5xf32>
    %611 = vector.broadcast %610 : vector<2x1x5xf32> to vector<2x5x5xf32>
    %612 = arith.cmpf oeq, %608, %611 : vector<2x5x5xf32>
    %cst_291 = arith.constant 5.000000e+00 : f32
    %613 = vector.broadcast %cst_291 : f32 to vector<2x5x5xf32>
    %614 = arith.select %612, %518, %613 : vector<2x5x5xi1>, vector<2x5x5xf32>
    %cst_292 = arith.constant dense<0x7F800000> : vector<2x5xf32>
    %615 = vector.multi_reduction <minimumf>, %614, %cst_292 [1] : vector<2x5x5xf32> to vector<2x5xf32>
    %616 = vector.shape_cast %610 : vector<2x1x5xf32> to vector<2x5xf32>
    %617 = vector.shape_cast %616 : vector<2x5xf32> to vector<2x5x1xf32>
    %618 = vector.shape_cast %5 : vector<5x5xf32> to vector<1x5x5xf32>
    %619 = vector.broadcast %617 : vector<2x5x1xf32> to vector<2x5x5xf32>
    %620 = vector.broadcast %618 : vector<1x5x5xf32> to vector<2x5x5xf32>
    %621 = arith.addf %619, %620 : vector<2x5x5xf32>
    %622 = vector.shape_cast %511 : vector<2x5xf32> to vector<2x1x5xf32>
    %623 = vector.broadcast %622 : vector<2x1x5xf32> to vector<2x5x5xf32>
    %624 = arith.addf %621, %623 : vector<2x5x5xf32>
    %cst_293 = arith.constant dense<0xFF800000> : vector<2x5xf32>
    %625 = vector.multi_reduction <maximumf>, %624, %cst_293 [1] : vector<2x5x5xf32> to vector<2x5xf32>
    %626 = vector.shape_cast %625 : vector<2x5xf32> to vector<2x1x5xf32>
    %627 = vector.broadcast %626 : vector<2x1x5xf32> to vector<2x5x5xf32>
    %628 = arith.cmpf oeq, %624, %627 : vector<2x5x5xf32>
    %cst_294 = arith.constant 5.000000e+00 : f32
    %629 = vector.broadcast %cst_294 : f32 to vector<2x5x5xf32>
    %630 = arith.select %628, %518, %629 : vector<2x5x5xi1>, vector<2x5x5xf32>
    %cst_295 = arith.constant dense<0x7F800000> : vector<2x5xf32>
    %631 = vector.multi_reduction <minimumf>, %630, %cst_295 [1] : vector<2x5x5xf32> to vector<2x5xf32>
    %632 = vector.shape_cast %626 : vector<2x1x5xf32> to vector<2x5xf32>
    %633 = vector.broadcast %4 : vector<1x5xf32> to vector<2x5xf32>
    %634 = arith.addf %632, %633 : vector<2x5xf32>
    %cst_296 = arith.constant dense<0xFF800000> : vector<2xf32>
    %635 = vector.multi_reduction <maximumf>, %634, %cst_296 [1] : vector<2x5xf32> to vector<2xf32>
    %636 = vector.shape_cast %635 : vector<2xf32> to vector<2x1xf32>
    %637 = vector.broadcast %636 : vector<2x1xf32> to vector<2x5xf32>
    %638 = arith.cmpf oeq, %634, %637 : vector<2x5xf32>
    %cst_297 = arith.constant 5.000000e+00 : f32
    %639 = vector.broadcast %cst_297 : f32 to vector<2x5xf32>
    %640 = arith.select %638, %516, %639 : vector<2x5xi1>, vector<2x5xf32>
    %cst_298 = arith.constant dense<0x7F800000> : vector<2xf32>
    %641 = vector.multi_reduction <minimumf>, %640, %cst_298 [1] : vector<2x5xf32> to vector<2xf32>
    %642 = vector.shape_cast %641 : vector<2xf32> to vector<2x1xf32>
    %643 = tpu.iota {dimensions = array<i32: 1>} : vector<2x8xi32>
    %c7_i32 = arith.constant 7 : i32
    %644 = vector.broadcast %c7_i32 : i32 to vector<2x8xi32>
    %645 = arith.cmpi eq, %643, %644 : vector<2x8xi32>
    %cst_299 = arith.constant 0.000000e+00 : f32
    %646 = vector.broadcast %cst_299 : f32 to vector<2x8xf32>
    %647 = vector.shape_cast %642 : vector<2x1xf32> to vector<2x1xf32>
    %648 = vector.broadcast %647 : vector<2x1xf32> to vector<2x8xf32>
    %649 = arith.select %645, %648, %646 : vector<2x8xi1>, vector<2x8xf32>
    %650 = vector.broadcast %642 : vector<2x1xf32> to vector<2x5xf32>
    %651 = arith.cmpf oeq, %650, %516 : vector<2x5xf32>
    %cst_300 = arith.constant 0.000000e+00 : f32
    %652 = vector.broadcast %cst_300 : f32 to vector<2x5xf32>
    %653 = arith.select %651, %631, %652 : vector<2x5xi1>, vector<2x5xf32>
    %cst_301 = arith.constant dense<0.000000e+00> : vector<2xf32>
    %654 = vector.multi_reduction <add>, %653, %cst_301 [1] : vector<2x5xf32> to vector<2xf32>
    %655 = vector.shape_cast %654 : vector<2xf32> to vector<2x1xf32>
    %c6_i32 = arith.constant 6 : i32
    %656 = vector.broadcast %c6_i32 : i32 to vector<2x8xi32>
    %657 = arith.cmpi eq, %643, %656 : vector<2x8xi32>
    %658 = vector.shape_cast %655 : vector<2x1xf32> to vector<2x1xf32>
    %659 = vector.broadcast %658 : vector<2x1xf32> to vector<2x8xf32>
    %660 = arith.select %657, %659, %649 : vector<2x8xi1>, vector<2x8xf32>
    %661 = vector.broadcast %655 : vector<2x1xf32> to vector<2x5xf32>
    %662 = arith.cmpf oeq, %661, %516 : vector<2x5xf32>
    %cst_302 = arith.constant 0.000000e+00 : f32
    %663 = vector.broadcast %cst_302 : f32 to vector<2x5xf32>
    %664 = arith.select %662, %615, %663 : vector<2x5xi1>, vector<2x5xf32>
    %cst_303 = arith.constant dense<0.000000e+00> : vector<2xf32>
    %665 = vector.multi_reduction <add>, %664, %cst_303 [1] : vector<2x5xf32> to vector<2xf32>
    %666 = vector.shape_cast %665 : vector<2xf32> to vector<2x1xf32>
    %c5_i32 = arith.constant 5 : i32
    %667 = vector.broadcast %c5_i32 : i32 to vector<2x8xi32>
    %668 = arith.cmpi eq, %643, %667 : vector<2x8xi32>
    %669 = vector.shape_cast %666 : vector<2x1xf32> to vector<2x1xf32>
    %670 = vector.broadcast %669 : vector<2x1xf32> to vector<2x8xf32>
    %671 = arith.select %668, %670, %660 : vector<2x8xi1>, vector<2x8xf32>
    %672 = vector.broadcast %666 : vector<2x1xf32> to vector<2x5xf32>
    %673 = arith.cmpf oeq, %672, %516 : vector<2x5xf32>
    %cst_304 = arith.constant 0.000000e+00 : f32
    %674 = vector.broadcast %cst_304 : f32 to vector<2x5xf32>
    %675 = arith.select %673, %599, %674 : vector<2x5xi1>, vector<2x5xf32>
    %cst_305 = arith.constant dense<0.000000e+00> : vector<2xf32>
    %676 = vector.multi_reduction <add>, %675, %cst_305 [1] : vector<2x5xf32> to vector<2xf32>
    %677 = vector.shape_cast %676 : vector<2xf32> to vector<2x1xf32>
    %c4_i32 = arith.constant 4 : i32
    %678 = vector.broadcast %c4_i32 : i32 to vector<2x8xi32>
    %679 = arith.cmpi eq, %643, %678 : vector<2x8xi32>
    %680 = vector.shape_cast %677 : vector<2x1xf32> to vector<2x1xf32>
    %681 = vector.broadcast %680 : vector<2x1xf32> to vector<2x8xf32>
    %682 = arith.select %679, %681, %671 : vector<2x8xi1>, vector<2x8xf32>
    %683 = vector.broadcast %677 : vector<2x1xf32> to vector<2x5xf32>
    %684 = arith.cmpf oeq, %683, %516 : vector<2x5xf32>
    %cst_306 = arith.constant 0.000000e+00 : f32
    %685 = vector.broadcast %cst_306 : f32 to vector<2x5xf32>
    %686 = arith.select %684, %583, %685 : vector<2x5xi1>, vector<2x5xf32>
    %cst_307 = arith.constant dense<0.000000e+00> : vector<2xf32>
    %687 = vector.multi_reduction <add>, %686, %cst_307 [1] : vector<2x5xf32> to vector<2xf32>
    %688 = vector.shape_cast %687 : vector<2xf32> to vector<2x1xf32>
    %c3_i32 = arith.constant 3 : i32
    %689 = vector.broadcast %c3_i32 : i32 to vector<2x8xi32>
    %690 = arith.cmpi eq, %643, %689 : vector<2x8xi32>
    %691 = vector.shape_cast %688 : vector<2x1xf32> to vector<2x1xf32>
    %692 = vector.broadcast %691 : vector<2x1xf32> to vector<2x8xf32>
    %693 = arith.select %690, %692, %682 : vector<2x8xi1>, vector<2x8xf32>
    %694 = vector.broadcast %688 : vector<2x1xf32> to vector<2x5xf32>
    %695 = arith.cmpf oeq, %694, %516 : vector<2x5xf32>
    %cst_308 = arith.constant 0.000000e+00 : f32
    %696 = vector.broadcast %cst_308 : f32 to vector<2x5xf32>
    %697 = arith.select %695, %567, %696 : vector<2x5xi1>, vector<2x5xf32>
    %cst_309 = arith.constant dense<0.000000e+00> : vector<2xf32>
    %698 = vector.multi_reduction <add>, %697, %cst_309 [1] : vector<2x5xf32> to vector<2xf32>
    %699 = vector.shape_cast %698 : vector<2xf32> to vector<2x1xf32>
    %c2_i32 = arith.constant 2 : i32
    %700 = vector.broadcast %c2_i32 : i32 to vector<2x8xi32>
    %701 = arith.cmpi eq, %643, %700 : vector<2x8xi32>
    %702 = vector.shape_cast %699 : vector<2x1xf32> to vector<2x1xf32>
    %703 = vector.broadcast %702 : vector<2x1xf32> to vector<2x8xf32>
    %704 = arith.select %701, %703, %693 : vector<2x8xi1>, vector<2x8xf32>
    %705 = vector.broadcast %699 : vector<2x1xf32> to vector<2x5xf32>
    %706 = arith.cmpf oeq, %705, %516 : vector<2x5xf32>
    %cst_310 = arith.constant 0.000000e+00 : f32
    %707 = vector.broadcast %cst_310 : f32 to vector<2x5xf32>
    %708 = arith.select %706, %551, %707 : vector<2x5xi1>, vector<2x5xf32>
    %cst_311 = arith.constant dense<0.000000e+00> : vector<2xf32>
    %709 = vector.multi_reduction <add>, %708, %cst_311 [1] : vector<2x5xf32> to vector<2xf32>
    %710 = vector.shape_cast %709 : vector<2xf32> to vector<2x1xf32>
    %c1_i32_312 = arith.constant 1 : i32
    %711 = vector.broadcast %c1_i32_312 : i32 to vector<2x8xi32>
    %712 = arith.cmpi eq, %643, %711 : vector<2x8xi32>
    %713 = vector.shape_cast %710 : vector<2x1xf32> to vector<2x1xf32>
    %714 = vector.broadcast %713 : vector<2x1xf32> to vector<2x8xf32>
    %715 = arith.select %712, %714, %704 : vector<2x8xi1>, vector<2x8xf32>
    %716 = vector.broadcast %710 : vector<2x1xf32> to vector<2x5xf32>
    %717 = arith.cmpf oeq, %716, %516 : vector<2x5xf32>
    %cst_313 = arith.constant 0.000000e+00 : f32
    %718 = vector.broadcast %cst_313 : f32 to vector<2x5xf32>
    %719 = arith.select %717, %535, %718 : vector<2x5xi1>, vector<2x5xf32>
    %cst_314 = arith.constant dense<0.000000e+00> : vector<2xf32>
    %720 = vector.multi_reduction <add>, %719, %cst_314 [1] : vector<2x5xf32> to vector<2xf32>
    %721 = vector.shape_cast %720 : vector<2xf32> to vector<2x1xf32>
    %c0_i32_315 = arith.constant 0 : i32
    %722 = vector.broadcast %c0_i32_315 : i32 to vector<2x8xi32>
    %723 = arith.cmpi eq, %643, %722 : vector<2x8xi32>
    %724 = vector.shape_cast %721 : vector<2x1xf32> to vector<2x1xf32>
    %725 = vector.broadcast %724 : vector<2x1xf32> to vector<2x8xf32>
    %726 = arith.select %723, %725, %715 : vector<2x8xi1>, vector<2x8xf32>
    %727 = arith.fptosi %726 : vector<2x8xf32> to vector<2x8xi32>
    %c0_316 = arith.constant 0 : index
    %c0_317 = arith.constant 0 : index
    %728 = vector.load %arg9[%c0_316, %c0_317] : memref<2x8xi32, #tpu.memory_space<vmem>>, vector<2x8xi32>
    tpu.vector_store %arg9[%c0_316, %c0_317], %727 {strides = array<i32>} : memref<2x8xi32, #tpu.memory_space<vmem>>, vector<2x8xi32>,
    return
  }
}

</mosaic_0001>

<llo_original>
// kernel: bilstm_crf_forward.1
$region0: #{bilstm_crf_forward.1}
  #allocation0 [shape = 'u32[]', space=smem, size = 0x4, offset = 0x4, fixed_abs, tag = 'smem constant byte address 0x4 - core index']
  #allocation1 [shape = 'u32[72,128]{1,0:T(1,128)}', space=vmem, size = 0x9000, scoped, tag = 'internal scratch']
  %s0 = inlined_call_operand.vmem [shape: s32[2,8], index: 0, kind: input, shape index: {}]
  %s1 = inlined_call_operand.vmem [shape: f32[50,1,128], index: 1, kind: input, shape index: {}]
  %s2 = inlined_call_operand.vmem [shape: f32[50,1,128], index: 2, kind: input, shape index: {}]
  %s3 = inlined_call_operand.vmem [shape: f32[32,128], index: 3, kind: input, shape index: {}]
  %s4 = inlined_call_operand.vmem [shape: f32[32,5], index: 4, kind: input, shape index: {}]
  %s5 = inlined_call_operand.vmem [shape: f32[1,5], index: 5, kind: input, shape index: {}]
  %s6 = inlined_call_operand.vmem [shape: f32[1,5], index: 6, kind: input, shape index: {}]
  %s7 = inlined_call_operand.vmem [shape: f32[1,5], index: 7, kind: input, shape index: {}]
  %s8 = inlined_call_operand.vmem [shape: f32[5,5], index: 8, kind: input, shape index: {}]
  %s9 = inlined_call_operand.hbm [shape: s32[2,8], index: 9, kind: output, shape index: {0}]
  %s10 = inlined_call_operand.hbm [shape: f32[2,8,2,16], index: 10, kind: output, shape index: {1}]
  %s11 = inlined_call_operand.vmem [shape: f32[8,2,5], index: 11, kind: output, shape index: {2}]
  %12 = xla_tuple %s9, %s10, %s11
  %s13 = sld [smem:[#allocation0]]
  $region66: #{bilstm_crf_forward.1} parent=0
    _
  %s15 = ssub.s32 1, %s13
  %s16 = scalar_select 0, %s15, %s13
  $region1: #{bilstm_crf_forward.1} parent=0
    #allocation2 [shape = 'u8[1024]{0}', space=smem, size = 0x400, scoped, tag = 'input window, operand 0, single buffered']
    #allocation3 [shape = 's32[1]{0}', space=sflag, size = 0x4, scoped, tag = 'scoped memory for bilstm_crf_forward.1']
    #allocation4 [shape = 's32[1]{0}', space=sflag, size = 0x4, scoped, tag = 'scoped memory for bilstm_crf_forward.1']
    #allocation5 [shape = 'u8[1024]{0}', space=vmem, size = 0x400, scoped, tag = 'output window, operand 0, single buffered']
    #allocation6 [shape = 'u8[16384]{0}', space=vmem, size = 0x4000, scoped, tag = 'output window, operand 1, single buffered']
    #allocation7 [shape = 's32[1]{0}', space=sflag, size = 0x4, scoped, tag = 'scoped memory for bilstm_crf_forward.1']
    %17 = vsyncpa [#allocation4], 0
    %18 = vsyncpa [#allocation3], 0
    %19 = vsyncpa [#allocation7], 0
    // Predicated region
    $region2: #{bilstm_crf_forward.1} parent=1 // pred_check
      _
    $region3: #{bilstm_crf_forward.1} parent=1 // pred_check_branch
      %21 = sbr.rel (0) target = $region5
    $region4: #{bilstm_crf_forward.1} parent=1 // pred_region
      %23 = vsyncadd [#allocation4], 0
      %s25 = sshll.u32 %s0, 4
      %s26 = int_to_ptr.vmem [resolvable:$true] %s25
      %28 = dma.vmem_to_smem %s26, 32, [#allocation2], [#allocation4]
    $region5: #{bilstm_crf_forward.1} parent=1 // pred_fallthru
      _
    // Predicated region
    $region6: #{bilstm_crf_forward.1} parent=1 // pred_check
      _
    $region7: #{bilstm_crf_forward.1} parent=1 // pred_check_branch
      %30 = sbr.rel (0) target = $region9
    $region8: #{bilstm_crf_forward.1} parent=1 // pred_region
      _
    $region9: #{bilstm_crf_forward.1} parent=1 // pred_fallthru
      _
    // Predicated region
    $region10: #{bilstm_crf_forward.1} parent=1 // pred_check
      _
    $region11: #{bilstm_crf_forward.1} parent=1 // pred_check_branch
      %32 = sbr.rel (0) target = $region13
    $region12: #{bilstm_crf_forward.1} parent=1 // pred_region
      _
    $region13: #{bilstm_crf_forward.1} parent=1 // pred_fallthru
      _
    // Predicated region
    $region14: #{bilstm_crf_forward.1} parent=1 // pred_check
      _
    $region15: #{bilstm_crf_forward.1} parent=1 // pred_check_branch
      %34 = sbr.rel (0) target = $region17
    $region16: #{bilstm_crf_forward.1} parent=1 // pred_region
      _
    $region17: #{bilstm_crf_forward.1} parent=1 // pred_fallthru
      _
    // Predicated region
    $region18: #{bilstm_crf_forward.1} parent=1 // pred_check
      _
    $region19: #{bilstm_crf_forward.1} parent=1 // pred_check_branch
      %36 = sbr.rel (0) target = $region21
    $region20: #{bilstm_crf_forward.1} parent=1 // pred_region
      _
    $region21: #{bilstm_crf_forward.1} parent=1 // pred_fallthru
      _
    // Predicated region
    $region22: #{bilstm_crf_forward.1} parent=1 // pred_check
      _
    $region23: #{bilstm_crf_forward.1} parent=1 // pred_check_branch
      %38 = sbr.rel (0) target = $region25
    $region24: #{bilstm_crf_forward.1} parent=1 // pred_region
      _
    $region25: #{bilstm_crf_forward.1} parent=1 // pred_fallthru
      _
    // Predicated region
    $region26: #{bilstm_crf_forward.1} parent=1 // pred_check
      _
    $region27: #{bilstm_crf_forward.1} parent=1 // pred_check_branch
      %40 = sbr.rel (0) target = $region29
    $region28: #{bilstm_crf_forward.1} parent=1 // pred_region
      _
    $region29: #{bilstm_crf_forward.1} parent=1 // pred_fallthru
      _
    // Predicated region
    $region30: #{bilstm_crf_forward.1} parent=1 // pred_check
      _
    $region31: #{bilstm_crf_forward.1} parent=1 // pred_check_branch
      %42 = sbr.rel (0) target = $region33
    $region32: #{bilstm_crf_forward.1} parent=1 // pred_region
      _
    $region33: #{bilstm_crf_forward.1} parent=1 // pred_fallthru
      _
    // Predicated region
    $region34: #{bilstm_crf_forward.1} parent=1 // pred_check
      _
    $region35: #{bilstm_crf_forward.1} parent=1 // pred_check_branch
      %44 = sbr.rel (0) target = $region37
    $region36: #{bilstm_crf_forward.1} parent=1 // pred_region
      _
    $region37: #{bilstm_crf_forward.1} parent=1 // pred_fallthru
      _
    // Predicated region
    $region38: #{bilstm_crf_forward.1} parent=1 // pred_check
      _
    $region39: #{bilstm_crf_forward.1} parent=1 // pred_check_branch
      %46 = sbr.rel (0) target = $region41
    $region40: #{bilstm_crf_forward.1} parent=1 // pred_region
      %48 = dma.done [#allocation4], 32
    $region41: #{bilstm_crf_forward.1} parent=1 // pred_fallthru
      _
    %49 = sfence
    %v50 = vld [vmem:[%s3] sm:$0xff]
    %v51 = vld [vmem:[%s3 + $0x8] sm:$0xff]
    %v52 = vld [vmem:[%s3 + $0x10] sm:$0xff]
    %v53 = vld [vmem:[%s3 + $0x18] sm:$0xff]
    %v54 = vld [vmem:[%s4] sm:$0xff]
    %v55 = vld [vmem:[%s4 + $0x8] sm:$0xff]
    %v56 = vld [vmem:[%s4 + $0x10] sm:$0xff]
    %v57 = vld [vmem:[%s4 + $0x18] sm:$0xff]
    %v58 = vld [vmem:[%s5] sm:$0x1]
    %v59 = vld [vmem:[%s6] sm:$0x1]
    %v60 = vld [vmem:[%s7] sm:$0x1]
    %v61 = vld [vmem:[%s8] sm:$0x1f]
    %v62 = vlaneseq
    %v63 = vshrl.u32 %v62, 7
    %s64 = sld [smem:[#allocation2]]
    %s65 = scalar_lea.vmem %s1, %s64
    %v66 = vld [vmem:[%s65] sm:$0x1]
    %s67 = sld [smem:[#allocation2 + $0x7]]
    %s68 = scalar_lea.vmem %s2, %s67
    %v69 = vld [vmem:[%s68] sm:$0x1]
    %v70 = vadd.f32 %v66, %v69
    %vm71 = vcmp.eq.s32.totalorder %v63, 0
    %v73 = vperm.slane %v70, 0
    %v75 = vsel %vm71, %v73, 0.0
    %s76 = sld [smem:[#allocation2 + $0x80]]
    %s77 = scalar_lea.vmem %s1, %s76
    %v78 = vld [vmem:[%s77] sm:$0x1]
    %s79 = sld [smem:[#allocation2 + $0x87]]
    %s80 = scalar_lea.vmem %s2, %s79
    %v81 = vld [vmem:[%s80] sm:$0x1]
    %v82 = vadd.f32 %v78, %v81
    %vm83 = vcmp.eq.s32.totalorder %v63, 1
    %v85 = vperm.slane %v82, 0
    %v87 = vsel %vm83, %v85, %v75
    %vm88 = vcmask 261120
    %v90 = vsel %vm88, 0.0, 0
    %92 = vmatpush.msra.mxu0 0.0
    %93 = vmatpush.msra.mxu0 0.0
    %94 = vmatpush.msra.mxu0 0.0
    %95 = vmatpush.msra.mxu0 0.0
    %96 = vmatpush.msra.mxu0 0.0
    %97 = vmatpush.msra.mxu0 0.0
    %98 = vmatpush.msra.mxu0 0.0
    %99 = vmatpush.msra.mxu0 0.0
    %100 = vmatpush.msra.mxu0 0.0
    %101 = vmatpush.msra.mxu0 0.0
    %102 = vmatpush.msra.mxu0 0.0
    %103 = vmatpush.msra.mxu0 0.0
    %104 = vmatpush.msra.mxu0 %v53
    %105 = vmatpush.msra.mxu0 %v52
    %106 = vmatpush.msra.mxu0 %v51
    %107 = vmatpush.msra.mxu0 %v50
    %108 = vmatmul.f32.gmra.mxu0 %v90
    %v109 = vpop.f32.mrf.mxu0
    %v110 = vadd.f32 0.0, %v109
    %111 = vdwg.mxu0
    %v112 = vadd.f32 %v87, %v110
    %v113 = vxor.u32 %v112, 2147483648
    %v114 = vmul.f32 %v113, 1.442695
    %v115 = vpow.pop %v114
    %v116 = vadd.f32 %v115, 1.0
    %v117 = vrcp.pop %v116
    %v118 = vmul.f32 %v116, %v117
    %v119 = vsub.f32 1.0, %v118
    %v120 = vmul.f32 %v117, %v119
    %v121 = vadd.f32 %v117, %v120
    %vm122 = vweird.f32 %v116
    %vm123 = vweird.f32 %v117
    %vm124 = vmor %vm122, %vm123
    %v125 = vsel %vm124, %v117, %v121
    %v126 = vand.u32 2147483647, %v116
    %vm127 = vcmp.eq.f32.partialorder %v126, 8.507059e+37
    %v128 = vand.u32 %v116, 2147483648
    %v129 = vor.u32 1.1754944e-38, %v128
    %v130 = vsel %vm127, %v129, %v125
    %v131 = vmul.f32 1.0, %v130
    %v132 = vtanh.pop %v112
    %v133 = vmul.f32 %v131, 0.0
    %135 = vrot.lane.b32.xlu0 %v132, 32
    %v136 = vpop.permute.xlu0 %135
    %v138 = vmul.f32 %v131, %v136
    %140 = vrot.lane.b32.xlu0 %v138, 32
    %v141 = vpop.permute.xlu0 %140
    %v143 = vadd.f32 %v133, %v141
    %v144 = vtanh.pop %v143
    %146 = vrot.lane.b32.xlu0 %v144, 32
    %v147 = vpop.permute.xlu0 %146
    %v149 = vmul.f32 %v131, %v147
    %151 = vrot.lane.b32.xlu0 %v149, 64
    %v152 = vpop.permute.xlu0 %151
    %vm154 = vcmask 123904
    %155 = vst.msk [vmem:[#allocation6] sm:$0x3] %vm154, %v152
    %156 = vrot.lane.b32.xlu0 %v149, 48
    %v157 = vpop.permute.xlu0 %156
    %s159 = scalar_lea.vmem [#allocation6], 30
    %160 = vst.msk [vmem:[%s159] sm:$0x3] %vm154, %v157
    %s161 = sld [smem:[#allocation2 + $0x1]]
    %s162 = scalar_lea.vmem %s1, %s161
    %v163 = vld [vmem:[%s162] sm:$0x1]
    %s164 = sld [smem:[#allocation2 + $0x6]]
    %s165 = scalar_lea.vmem %s2, %s164
    %v166 = vld [vmem:[%s165] sm:$0x1]
    %v167 = vadd.f32 %v163, %v166
    %v169 = vperm.slane %v167, 0
    %v171 = vsel %vm71, %v169, 0.0
    %s172 = sld [smem:[#allocation2 + $0x81]]
    %s173 = scalar_lea.vmem %s1, %s172
    %v174 = vld [vmem:[%s173] sm:$0x1]
    %s175 = sld [smem:[#allocation2 + $0x86]]
    %s176 = scalar_lea.vmem %s2, %s175
    %v177 = vld [vmem:[%s176] sm:$0x1]
    %v178 = vadd.f32 %v174, %v177
    %v180 = vperm.slane %v178, 0
    %v182 = vsel %vm83, %v180, %v171
    %v183 = vsel %vm88, %v152, 0
    %185 = vmatpush.msra.mxu0 0.0
    %186 = vmatpush.msra.mxu0 0.0
    %187 = vmatpush.msra.mxu0 0.0
    %188 = vmatpush.msra.mxu0 0.0
    %189 = vmatpush.msra.mxu0 0.0
    %190 = vmatpush.msra.mxu0 0.0
    %191 = vmatpush.msra.mxu0 0.0
    %192 = vmatpush.msra.mxu0 0.0
    %193 = vmatpush.msra.mxu0 0.0
    %194 = vmatpush.msra.mxu0 0.0
    %195 = vmatpush.msra.mxu0 0.0
    %196 = vmatpush.msra.mxu0 0.0
    %197 = vmatpush.msra.mxu0 %v53
    %198 = vmatpush.msra.mxu0 %v52
    %199 = vmatpush.msra.mxu0 %v51
    %200 = vmatpush.msra.mxu0 %v50
    %201 = vmatmul.f32.gmra.mxu0 %v183
    %v202 = vpop.f32.mrf.mxu0
    %v203 = vadd.f32 0.0, %v202
    %204 = vdwg.mxu0
    %v205 = vadd.f32 %v182, %v203
    %v206 = vxor.u32 %v205, 2147483648
    %v207 = vmul.f32 %v206, 1.442695
    %v208 = vpow.pop %v207
    %v209 = vadd.f32 %v208, 1.0
    %v210 = vrcp.pop %v209
    %v211 = vmul.f32 %v209, %v210
    %v212 = vsub.f32 1.0, %v211
    %v213 = vmul.f32 %v210, %v212
    %v214 = vadd.f32 %v210, %v213
    %vm215 = vweird.f32 %v209
    %vm216 = vweird.f32 %v210
    %vm217 = vmor %vm215, %vm216
    %v218 = vsel %vm217, %v210, %v214
    %v219 = vand.u32 2147483647, %v209
    %vm220 = vcmp.eq.f32.partialorder %v219, 8.507059e+37
    %v221 = vand.u32 %v209, 2147483648
    %v222 = vor.u32 1.1754944e-38, %v221
    %v223 = vsel %vm220, %v222, %v218
    %v224 = vmul.f32 1.0, %v223
    %v225 = vtanh.pop %v205
    %v226 = vmul.f32 %v224, %v143
    %228 = vrot.lane.b32.xlu0 %v225, 32
    %v229 = vpop.permute.xlu0 %228
    %v231 = vmul.f32 %v224, %v229
    %233 = vrot.lane.b32.xlu0 %v231, 32
    %v234 = vpop.permute.xlu0 %233
    %v236 = vadd.f32 %v226, %v234
    %v237 = vtanh.pop %v236
    %239 = vrot.lane.b32.xlu0 %v237, 32
    %v240 = vpop.permute.xlu0 %239
    %v242 = vmul.f32 %v224, %v240
    %244 = vrot.lane.b32.xlu0 %v242, 64
    %v245 = vpop.permute.xlu0 %244
    %s247 = scalar_lea.vmem [#allocation6], 2
    %248 = vst.msk [vmem:[%s247] sm:$0x3] %vm154, %v245
    %249 = vrot.lane.b32.xlu0 %v242, 48
    %v250 = vpop.permute.xlu0 %249
    %s252 = scalar_lea.vmem [#allocation6], 28
    %253 = vst.msk [vmem:[%s252] sm:$0x3] %vm154, %v250
    %s254 = sld [smem:[#allocation2 + $0x2]]
    %s255 = scalar_lea.vmem %s1, %s254
    %v256 = vld [vmem:[%s255] sm:$0x1]
    %s257 = sld [smem:[#allocation2 + $0x5]]
    %s258 = scalar_lea.vmem %s2, %s257
    %v259 = vld [vmem:[%s258] sm:$0x1]
    %v260 = vadd.f32 %v256, %v259
    %v262 = vperm.slane %v260, 0
    %v264 = vsel %vm71, %v262, 0.0
    %s265 = sld [smem:[#allocation2 + $0x82]]
    %s266 = scalar_lea.vmem %s1, %s265
    %v267 = vld [vmem:[%s266] sm:$0x1]
    %s268 = sld [smem:[#allocation2 + $0x85]]
    %s269 = scalar_lea.vmem %s2, %s268
    %v270 = vld [vmem:[%s269] sm:$0x1]
    %v271 = vadd.f32 %v267, %v270
    %v273 = vperm.slane %v271, 0
    %v275 = vsel %vm83, %v273, %v264
    %v276 = vsel %vm88, %v245, 0
    %278 = vmatpush.msra.mxu0 0.0
    %279 = vmatpush.msra.mxu0 0.0
    %280 = vmatpush.msra.mxu0 0.0
    %281 = vmatpush.msra.mxu0 0.0
    %282 = vmatpush.msra.mxu0 0.0
    %283 = vmatpush.msra.mxu0 0.0
    %284 = vmatpush.msra.mxu0 0.0
    %285 = vmatpush.msra.mxu0 0.0
    %286 = vmatpush.msra.mxu0 0.0
    %287 = vmatpush.msra.mxu0 0.0
    %288 = vmatpush.msra.mxu0 0.0
    %289 = vmatpush.msra.mxu0 0.0
    %290 = vmatpush.msra.mxu0 %v53
    %291 = vmatpush.msra.mxu0 %v52
    %292 = vmatpush.msra.mxu0 %v51
    %293 = vmatpush.msra.mxu0 %v50
    %294 = vmatmul.f32.gmra.mxu0 %v276
    %v295 = vpop.f32.mrf.mxu0
    %v296 = vadd.f32 0.0, %v295
    %297 = vdwg.mxu0
    %v298 = vadd.f32 %v275, %v296
    %v299 = vxor.u32 %v298, 2147483648
    %v300 = vmul.f32 %v299, 1.442695
    %v301 = vpow.pop %v300
    %v302 = vadd.f32 %v301, 1.0
    %v303 = vrcp.pop %v302
    %v304 = vmul.f32 %v302, %v303
    %v305 = vsub.f32 1.0, %v304
    %v306 = vmul.f32 %v303, %v305
    %v307 = vadd.f32 %v303, %v306
    %vm308 = vweird.f32 %v302
    %vm309 = vweird.f32 %v303
    %vm310 = vmor %vm308, %vm309
    %v311 = vsel %vm310, %v303, %v307
    %v312 = vand.u32 2147483647, %v302
    %vm313 = vcmp.eq.f32.partialorder %v312, 8.507059e+37
    %v314 = vand.u32 %v302, 2147483648
    %v315 = vor.u32 1.1754944e-38, %v314
    %v316 = vsel %vm313, %v315, %v311
    %v317 = vmul.f32 1.0, %v316
    %v318 = vtanh.pop %v298
    %v319 = vmul.f32 %v317, %v236
    %321 = vrot.lane.b32.xlu0 %v318, 32
    %v322 = vpop.permute.xlu0 %321
    %v324 = vmul.f32 %v317, %v322
    %326 = vrot.lane.b32.xlu0 %v324, 32
    %v327 = vpop.permute.xlu0 %326
    %v329 = vadd.f32 %v319, %v327
    %v330 = vtanh.pop %v329
    %332 = vrot.lane.b32.xlu0 %v330, 32
    %v333 = vpop.permute.xlu0 %332
    %v335 = vmul.f32 %v317, %v333
    %337 = vrot.lane.b32.xlu0 %v335, 64
    %v338 = vpop.permute.xlu0 %337
    %s340 = scalar_lea.vmem [#allocation6], 4
    %341 = vst.msk [vmem:[%s340] sm:$0x3] %vm154, %v338
    %342 = vrot.lane.b32.xlu0 %v335, 48
    %v343 = vpop.permute.xlu0 %342
    %s345 = scalar_lea.vmem [#allocation6], 26
    %346 = vst.msk [vmem:[%s345] sm:$0x3] %vm154, %v343
    %s347 = sld [smem:[#allocation2 + $0x3]]
    %s348 = scalar_lea.vmem %s1, %s347
    %v349 = vld [vmem:[%s348] sm:$0x1]
    %s350 = sld [smem:[#allocation2 + $0x4]]
    %s351 = scalar_lea.vmem %s2, %s350
    %v352 = vld [vmem:[%s351] sm:$0x1]
    %v353 = vadd.f32 %v349, %v352
    %v355 = vperm.slane %v353, 0
    %v357 = vsel %vm71, %v355, 0.0
    %s358 = sld [smem:[#allocation2 + $0x83]]
    %s359 = scalar_lea.vmem %s1, %s358
    %v360 = vld [vmem:[%s359] sm:$0x1]
    %s361 = sld [smem:[#allocation2 + $0x84]]
    %s362 = scalar_lea.vmem %s2, %s361
    %v363 = vld [vmem:[%s362] sm:$0x1]
    %v364 = vadd.f32 %v360, %v363
    %v366 = vperm.slane %v364, 0
    %v368 = vsel %vm83, %v366, %v357
    %v369 = vsel %vm88, %v338, 0
    %371 = vmatpush.msra.mxu0 0.0
    %372 = vmatpush.msra.mxu0 0.0
    %373 = vmatpush.msra.mxu0 0.0
    %374 = vmatpush.msra.mxu0 0.0
    %375 = vmatpush.msra.mxu0 0.0
    %376 = vmatpush.msra.mxu0 0.0
    %377 = vmatpush.msra.mxu0 0.0
    %378 = vmatpush.msra.mxu0 0.0
    %379 = vmatpush.msra.mxu0 0.0
    %380 = vmatpush.msra.mxu0 0.0
    %381 = vmatpush.msra.mxu0 0.0
    %382 = vmatpush.msra.mxu0 0.0
    %383 = vmatpush.msra.mxu0 %v53
    %384 = vmatpush.msra.mxu0 %v52
    %385 = vmatpush.msra.mxu0 %v51
    %386 = vmatpush.msra.mxu0 %v50
    %387 = vmatmul.f32.gmra.mxu0 %v369
    %v388 = vpop.f32.mrf.mxu0
    %v389 = vadd.f32 0.0, %v388
    %390 = vdwg.mxu0
    %v391 = vadd.f32 %v368, %v389
    %v392 = vxor.u32 %v391, 2147483648
    %v393 = vmul.f32 %v392, 1.442695
    %v394 = vpow.pop %v393
    %v395 = vadd.f32 %v394, 1.0
    %v396 = vrcp.pop %v395
    %v397 = vmul.f32 %v395, %v396
    %v398 = vsub.f32 1.0, %v397
    %v399 = vmul.f32 %v396, %v398
    %v400 = vadd.f32 %v396, %v399
    %vm401 = vweird.f32 %v395
    %vm402 = vweird.f32 %v396
    %vm403 = vmor %vm401, %vm402
    %v404 = vsel %vm403, %v396, %v400
    %v405 = vand.u32 2147483647, %v395
    %vm406 = vcmp.eq.f32.partialorder %v405, 8.507059e+37
    %v407 = vand.u32 %v395, 2147483648
    %v408 = vor.u32 1.1754944e-38, %v407
    %v409 = vsel %vm406, %v408, %v404
    %v410 = vmul.f32 1.0, %v409
    %v411 = vtanh.pop %v391
    %v412 = vmul.f32 %v410, %v329
    %414 = vrot.lane.b32.xlu0 %v411, 32
    %v415 = vpop.permute.xlu0 %414
    %v417 = vmul.f32 %v410, %v415
    %419 = vrot.lane.b32.xlu0 %v417, 32
    %v420 = vpop.permute.xlu0 %419
    %v422 = vadd.f32 %v412, %v420
    %v423 = vtanh.pop %v422
    %425 = vrot.lane.b32.xlu0 %v423, 32
    %v426 = vpop.permute.xlu0 %425
    %v428 = vmul.f32 %v410, %v426
    %430 = vrot.lane.b32.xlu0 %v428, 64
    %v431 = vpop.permute.xlu0 %430
    %s433 = scalar_lea.vmem [#allocation6], 6
    %434 = vst.msk [vmem:[%s433] sm:$0x3] %vm154, %v431
    %435 = vrot.lane.b32.xlu0 %v428, 48
    %v436 = vpop.permute.xlu0 %435
    %s438 = scalar_lea.vmem [#allocation6], 24
    %439 = vst.msk [vmem:[%s438] sm:$0x3] %vm154, %v436
    %s440 = sld [smem:[#allocation2 + $0x4]]
    %s441 = scalar_lea.vmem %s1, %s440
    %v442 = vld [vmem:[%s441] sm:$0x1]
    %s443 = sld [smem:[#allocation2 + $0x3]]
    %s444 = scalar_lea.vmem %s2, %s443
    %v445 = vld [vmem:[%s444] sm:$0x1]
    %v446 = vadd.f32 %v442, %v445
    %v448 = vperm.slane %v446, 0
    %v450 = vsel %vm71, %v448, 0.0
    %s451 = sld [smem:[#allocation2 + $0x84]]
    %s452 = scalar_lea.vmem %s1, %s451
    %v453 = vld [vmem:[%s452] sm:$0x1]
    %s454 = sld [smem:[#allocation2 + $0x83]]
    %s455 = scalar_lea.vmem %s2, %s454
    %v456 = vld [vmem:[%s455] sm:$0x1]
    %v457 = vadd.f32 %v453, %v456
    %v459 = vperm.slane %v457, 0
    %v461 = vsel %vm83, %v459, %v450
    %v462 = vsel %vm88, %v431, 0
    %464 = vmatpush.msra.mxu0 0.0
    %465 = vmatpush.msra.mxu0 0.0
    %466 = vmatpush.msra.mxu0 0.0
    %467 = vmatpush.msra.mxu0 0.0
    %468 = vmatpush.msra.mxu0 0.0
    %469 = vmatpush.msra.mxu0 0.0
    %470 = vmatpush.msra.mxu0 0.0
    %471 = vmatpush.msra.mxu0 0.0
    %472 = vmatpush.msra.mxu0 0.0
    %473 = vmatpush.msra.mxu0 0.0
    %474 = vmatpush.msra.mxu0 0.0
    %475 = vmatpush.msra.mxu0 0.0
    %476 = vmatpush.msra.mxu0 %v53
    %477 = vmatpush.msra.mxu0 %v52
    %478 = vmatpush.msra.mxu0 %v51
    %479 = vmatpush.msra.mxu0 %v50
    %480 = vmatmul.f32.gmra.mxu0 %v462
    %v481 = vpop.f32.mrf.mxu0
    %v482 = vadd.f32 0.0, %v481
    %483 = vdwg.mxu0
    %v484 = vadd.f32 %v461, %v482
    %v485 = vxor.u32 %v484, 2147483648
    %v486 = vmul.f32 %v485, 1.442695
    %v487 = vpow.pop %v486
    %v488 = vadd.f32 %v487, 1.0
    %v489 = vrcp.pop %v488
    %v490 = vmul.f32 %v488, %v489
    %v491 = vsub.f32 1.0, %v490
    %v492 = vmul.f32 %v489, %v491
    %v493 = vadd.f32 %v489, %v492
    %vm494 = vweird.f32 %v488
    %vm495 = vweird.f32 %v489
    %vm496 = vmor %vm494, %vm495
    %v497 = vsel %vm496, %v489, %v493
    %v498 = vand.u32 2147483647, %v488
    %vm499 = vcmp.eq.f32.partialorder %v498, 8.507059e+37
    %v500 = vand.u32 %v488, 2147483648
    %v501 = vor.u32 1.1754944e-38, %v500
    %v502 = vsel %vm499, %v501, %v497
    %v503 = vmul.f32 1.0, %v502
    %v504 = vtanh.pop %v484
    %v505 = vmul.f32 %v503, %v422
    %507 = vrot.lane.b32.xlu0 %v504, 32
    %v508 = vpop.permute.xlu0 %507
    %v510 = vmul.f32 %v503, %v508
    %512 = vrot.lane.b32.xlu0 %v510, 32
    %v513 = vpop.permute.xlu0 %512
    %v515 = vadd.f32 %v505, %v513
    %v516 = vtanh.pop %v515
    %518 = vrot.lane.b32.xlu0 %v516, 32
    %v519 = vpop.permute.xlu0 %518
    %v521 = vmul.f32 %v503, %v519
    %523 = vrot.lane.b32.xlu0 %v521, 64
    %v524 = vpop.permute.xlu0 %523
    %s526 = scalar_lea.vmem [#allocation6], 8
    %527 = vst.msk [vmem:[%s526] sm:$0x3] %vm154, %v524
    %528 = vrot.lane.b32.xlu0 %v521, 48
    %v529 = vpop.permute.xlu0 %528
    %s531 = scalar_lea.vmem [#allocation6], 22
    %532 = vst.msk [vmem:[%s531] sm:$0x3] %vm154, %v529
    %s533 = sld [smem:[#allocation2 + $0x5]]
    %s534 = scalar_lea.vmem %s1, %s533
    %v535 = vld [vmem:[%s534] sm:$0x1]
    %s536 = sld [smem:[#allocation2 + $0x2]]
    %s537 = scalar_lea.vmem %s2, %s536
    %v538 = vld [vmem:[%s537] sm:$0x1]
    %v539 = vadd.f32 %v535, %v538
    %v541 = vperm.slane %v539, 0
    %v543 = vsel %vm71, %v541, 0.0
    %s544 = sld [smem:[#allocation2 + $0x85]]
    %s545 = scalar_lea.vmem %s1, %s544
    %v546 = vld [vmem:[%s545] sm:$0x1]
    %s547 = sld [smem:[#allocation2 + $0x82]]
    %s548 = scalar_lea.vmem %s2, %s547
    %v549 = vld [vmem:[%s548] sm:$0x1]
    %v550 = vadd.f32 %v546, %v549
    %v552 = vperm.slane %v550, 0
    %v554 = vsel %vm83, %v552, %v543
    %v555 = vsel %vm88, %v524, 0
    %557 = vmatpush.msra.mxu0 0.0
    %558 = vmatpush.msra.mxu0 0.0
    %559 = vmatpush.msra.mxu0 0.0
    %560 = vmatpush.msra.mxu0 0.0
    %561 = vmatpush.msra.mxu0 0.0
    %562 = vmatpush.msra.mxu0 0.0
    %563 = vmatpush.msra.mxu0 0.0
    %564 = vmatpush.msra.mxu0 0.0
    %565 = vmatpush.msra.mxu0 0.0
    %566 = vmatpush.msra.mxu0 0.0
    %567 = vmatpush.msra.mxu0 0.0
    %568 = vmatpush.msra.mxu0 0.0
    %569 = vmatpush.msra.mxu0 %v53
    %570 = vmatpush.msra.mxu0 %v52
    %571 = vmatpush.msra.mxu0 %v51
    %572 = vmatpush.msra.mxu0 %v50
    %573 = vmatmul.f32.gmra.mxu0 %v555
    %v574 = vpop.f32.mrf.mxu0
    %v575 = vadd.f32 0.0, %v574
    %576 = vdwg.mxu0
    %v577 = vadd.f32 %v554, %v575
    %v578 = vxor.u32 %v577, 2147483648
    %v579 = vmul.f32 %v578, 1.442695
    %v580 = vpow.pop %v579
    %v581 = vadd.f32 %v580, 1.0
    %v582 = vrcp.pop %v581
    %v583 = vmul.f32 %v581, %v582
    %v584 = vsub.f32 1.0, %v583
    %v585 = vmul.f32 %v582, %v584
    %v586 = vadd.f32 %v582, %v585
    %vm587 = vweird.f32 %v581
    %vm588 = vweird.f32 %v582
    %vm589 = vmor %vm587, %vm588
    %v590 = vsel %vm589, %v582, %v586
    %v591 = vand.u32 2147483647, %v581
    %vm592 = vcmp.eq.f32.partialorder %v591, 8.507059e+37
    %v593 = vand.u32 %v581, 2147483648
    %v594 = vor.u32 1.1754944e-38, %v593
    %v595 = vsel %vm592, %v594, %v590
    %v596 = vmul.f32 1.0, %v595
    %v597 = vtanh.pop %v577
    %v598 = vmul.f32 %v596, %v515
    %600 = vrot.lane.b32.xlu0 %v597, 32
    %v601 = vpop.permute.xlu0 %600
    %v603 = vmul.f32 %v596, %v601
    %605 = vrot.lane.b32.xlu0 %v603, 32
    %v606 = vpop.permute.xlu0 %605
    %v608 = vadd.f32 %v598, %v606
    %v609 = vtanh.pop %v608
    %611 = vrot.lane.b32.xlu0 %v609, 32
    %v612 = vpop.permute.xlu0 %611
    %v614 = vmul.f32 %v596, %v612
    %616 = vrot.lane.b32.xlu0 %v614, 64
    %v617 = vpop.permute.xlu0 %616
    %s619 = scalar_lea.vmem [#allocation6], 10
    %620 = vst.msk [vmem:[%s619] sm:$0x3] %vm154, %v617
    %621 = vrot.lane.b32.xlu0 %v614, 48
    %v622 = vpop.permute.xlu0 %621
    %s624 = scalar_lea.vmem [#allocation6], 20
    %625 = vst.msk [vmem:[%s624] sm:$0x3] %vm154, %v622
    %s626 = sld [smem:[#allocation2 + $0x6]]
    %s627 = scalar_lea.vmem %s1, %s626
    %v628 = vld [vmem:[%s627] sm:$0x1]
    %s629 = sld [smem:[#allocation2 + $0x1]]
    %s630 = scalar_lea.vmem %s2, %s629
    %v631 = vld [vmem:[%s630] sm:$0x1]
    %v632 = vadd.f32 %v628, %v631
    %v634 = vperm.slane %v632, 0
    %v636 = vsel %vm71, %v634, 0.0
    %s637 = sld [smem:[#allocation2 + $0x86]]
    %s638 = scalar_lea.vmem %s1, %s637
    %v639 = vld [vmem:[%s638] sm:$0x1]
    %s640 = sld [smem:[#allocation2 + $0x81]]
    %s641 = scalar_lea.vmem %s2, %s640
    %v642 = vld [vmem:[%s641] sm:$0x1]
    %v643 = vadd.f32 %v639, %v642
    %v645 = vperm.slane %v643, 0
    %v647 = vsel %vm83, %v645, %v636
    %v648 = vsel %vm88, %v617, 0
    %650 = vmatpush.msra.mxu0 0.0
    %651 = vmatpush.msra.mxu0 0.0
    %652 = vmatpush.msra.mxu0 0.0
    %653 = vmatpush.msra.mxu0 0.0
    %654 = vmatpush.msra.mxu0 0.0
    %655 = vmatpush.msra.mxu0 0.0
    %656 = vmatpush.msra.mxu0 0.0
    %657 = vmatpush.msra.mxu0 0.0
    %658 = vmatpush.msra.mxu0 0.0
    %659 = vmatpush.msra.mxu0 0.0
    %660 = vmatpush.msra.mxu0 0.0
    %661 = vmatpush.msra.mxu0 0.0
    %662 = vmatpush.msra.mxu0 %v53
    %663 = vmatpush.msra.mxu0 %v52
    %664 = vmatpush.msra.mxu0 %v51
    %665 = vmatpush.msra.mxu0 %v50
    %666 = vmatmul.f32.gmra.mxu0 %v648
    %v667 = vpop.f32.mrf.mxu0
    %v668 = vadd.f32 0.0, %v667
    %669 = vdwg.mxu0
    %v670 = vadd.f32 %v647, %v668
    %v671 = vxor.u32 %v670, 2147483648
    %v672 = vmul.f32 %v671, 1.442695
    %v673 = vpow.pop %v672
    %v674 = vadd.f32 %v673, 1.0
    %v675 = vrcp.pop %v674
    %v676 = vmul.f32 %v674, %v675
    %v677 = vsub.f32 1.0, %v676
    %v678 = vmul.f32 %v675, %v677
    %v679 = vadd.f32 %v675, %v678
    %vm680 = vweird.f32 %v674
    %vm681 = vweird.f32 %v675
    %vm682 = vmor %vm680, %vm681
    %v683 = vsel %vm682, %v675, %v679
    %v684 = vand.u32 2147483647, %v674
    %vm685 = vcmp.eq.f32.partialorder %v684, 8.507059e+37
    %v686 = vand.u32 %v674, 2147483648
    %v687 = vor.u32 1.1754944e-38, %v686
    %v688 = vsel %vm685, %v687, %v683
    %v689 = vmul.f32 1.0, %v688
    %v690 = vtanh.pop %v670
    %v691 = vmul.f32 %v689, %v608
    %693 = vrot.lane.b32.xlu0 %v690, 32
    %v694 = vpop.permute.xlu0 %693
    %v696 = vmul.f32 %v689, %v694
    %698 = vrot.lane.b32.xlu0 %v696, 32
    %v699 = vpop.permute.xlu0 %698
    %v701 = vadd.f32 %v691, %v699
    %v702 = vtanh.pop %v701
    %704 = vrot.lane.b32.xlu0 %v702, 32
    %v705 = vpop.permute.xlu0 %704
    %v707 = vmul.f32 %v689, %v705
    %709 = vrot.lane.b32.xlu0 %v707, 64
    %v710 = vpop.permute.xlu0 %709
    %s712 = scalar_lea.vmem [#allocation6], 12
    %713 = vst.msk [vmem:[%s712] sm:$0x3] %vm154, %v710
    %714 = vrot.lane.b32.xlu0 %v707, 48
    %v715 = vpop.permute.xlu0 %714
    %s717 = scalar_lea.vmem [#allocation6], 18
    %718 = vst.msk [vmem:[%s717] sm:$0x3] %vm154, %v715
    %s719 = sld [smem:[#allocation2 + $0x7]]
    %s720 = scalar_lea.vmem %s1, %s719
    %v721 = vld [vmem:[%s720] sm:$0x1]
    %s722 = sld [smem:[#allocation2]]
    %s723 = scalar_lea.vmem %s2, %s722
    %v724 = vld [vmem:[%s723] sm:$0x1]
    %v725 = vadd.f32 %v721, %v724
    %v727 = vperm.slane %v725, 0
    %v729 = vsel %vm71, %v727, 0.0
    %s730 = sld [smem:[#allocation2 + $0x87]]
    %s731 = scalar_lea.vmem %s1, %s730
    %v732 = vld [vmem:[%s731] sm:$0x1]
    %s733 = sld [smem:[#allocation2 + $0x80]]
    %s734 = scalar_lea.vmem %s2, %s733
    %v735 = vld [vmem:[%s734] sm:$0x1]
    %v736 = vadd.f32 %v732, %v735
    %v738 = vperm.slane %v736, 0
    %v740 = vsel %vm83, %v738, %v729
    %v741 = vsel %vm88, %v710, 0
    %743 = vmatpush.msra.mxu0 0.0
    %744 = vmatpush.msra.mxu0 0.0
    %745 = vmatpush.msra.mxu0 0.0
    %746 = vmatpush.msra.mxu0 0.0
    %747 = vmatpush.msra.mxu0 0.0
    %748 = vmatpush.msra.mxu0 0.0
    %749 = vmatpush.msra.mxu0 0.0
    %750 = vmatpush.msra.mxu0 0.0
    %751 = vmatpush.msra.mxu0 0.0
    %752 = vmatpush.msra.mxu0 0.0
    %753 = vmatpush.msra.mxu0 0.0
    %754 = vmatpush.msra.mxu0 0.0
    %755 = vmatpush.msra.mxu0 %v53
    %756 = vmatpush.msra.mxu0 %v52
    %757 = vmatpush.msra.mxu0 %v51
    %758 = vmatpush.msra.mxu0 %v50
    %759 = vmatmul.f32.gmra.mxu0 %v741
    %v760 = vpop.f32.mrf.mxu0
    %v761 = vadd.f32 0.0, %v760
    %762 = vdwg.mxu0
    %v763 = vadd.f32 %v740, %v761
    %v764 = vxor.u32 %v763, 2147483648
    %v765 = vmul.f32 %v764, 1.442695
    %v766 = vpow.pop %v765
    %v767 = vadd.f32 %v766, 1.0
    %v768 = vrcp.pop %v767
    %v769 = vmul.f32 %v767, %v768
    %v770 = vsub.f32 1.0, %v769
    %v771 = vmul.f32 %v768, %v770
    %v772 = vadd.f32 %v768, %v771
    %vm773 = vweird.f32 %v767
    %vm774 = vweird.f32 %v768
    %vm775 = vmor %vm773, %vm774
    %v776 = vsel %vm775, %v768, %v772
    %v777 = vand.u32 2147483647, %v767
    %vm778 = vcmp.eq.f32.partialorder %v777, 8.507059e+37
    %v779 = vand.u32 %v767, 2147483648
    %v780 = vor.u32 1.1754944e-38, %v779
    %v781 = vsel %vm778, %v780, %v776
    %v782 = vmul.f32 1.0, %v781
    %v783 = vtanh.pop %v763
    %v784 = vmul.f32 %v782, %v701
    %786 = vrot.lane.b32.xlu0 %v783, 32
    %v787 = vpop.permute.xlu0 %786
    %v789 = vmul.f32 %v782, %v787
    %791 = vrot.lane.b32.xlu0 %v789, 32
    %v792 = vpop.permute.xlu0 %791
    %v794 = vadd.f32 %v784, %v792
    %v795 = vtanh.pop %v794
    %797 = vrot.lane.b32.xlu0 %v795, 32
    %v798 = vpop.permute.xlu0 %797
    %v800 = vmul.f32 %v782, %v798
    %802 = vrot.lane.b32.xlu0 %v800, 64
    %v803 = vpop.permute.xlu0 %802
    %s805 = scalar_lea.vmem [#allocation6], 14
    %806 = vst.msk [vmem:[%s805] sm:$0x3] %vm154, %v803
    %807 = vrot.lane.b32.xlu0 %v800, 48
    %v808 = vpop.permute.xlu0 %807
    %s810 = scalar_lea.vmem [#allocation6], 16
    %811 = vst.msk [vmem:[%s810] sm:$0x3] %vm154, %v808
    %vm812 = vcmask 130048
    %v813 = vsel %vm812, %v808, 0
    %815 = vmatpush.msra.mxu0 0.0
    %816 = vmatpush.msra.mxu0 0.0
    %817 = vmatpush.msra.mxu0 0.0
    %818 = vmatpush.msra.mxu0 0.0
    %819 = vmatpush.msra.mxu0 0.0
    %820 = vmatpush.msra.mxu0 0.0
    %821 = vmatpush.msra.mxu0 0.0
    %822 = vmatpush.msra.mxu0 0.0
    %823 = vmatpush.msra.mxu0 0.0
    %824 = vmatpush.msra.mxu0 0.0
    %825 = vmatpush.msra.mxu0 0.0
    %826 = vmatpush.msra.mxu0 0.0
    %827 = vmatpush.msra.mxu0 0.0
    %828 = vmatpush.msra.mxu0 0.0
    %829 = vmatpush.msra.mxu0 %v57
    %830 = vmatpush.msra.mxu0 %v56
    %831 = vmatmul.f32.gmra.mxu0 %v813
    %v832 = vpop.f32.mrf.mxu0
    %v833 = vadd.f32 0.0, %v832
    %834 = vdwg.mxu0
    %v835 = vsel %vm812, %v152, 0
    %837 = vmatpush.msra.mxu0 0.0
    %838 = vmatpush.msra.mxu0 0.0
    %839 = vmatpush.msra.mxu0 0.0
    %840 = vmatpush.msra.mxu0 0.0
    %841 = vmatpush.msra.mxu0 0.0
    %842 = vmatpush.msra.mxu0 0.0
    %843 = vmatpush.msra.mxu0 0.0
    %844 = vmatpush.msra.mxu0 0.0
    %845 = vmatpush.msra.mxu0 0.0
    %846 = vmatpush.msra.mxu0 0.0
    %847 = vmatpush.msra.mxu0 0.0
    %848 = vmatpush.msra.mxu0 0.0
    %849 = vmatpush.msra.mxu0 0.0
    %850 = vmatpush.msra.mxu0 0.0
    %851 = vmatpush.msra.mxu0 %v55
    %852 = vmatpush.msra.mxu0 %v54
    %853 = vmatmul.f32.gmra.mxu0 %v835
    %v854 = vpop.f32.mrf.mxu0
    %v855 = vadd.f32 %v833, %v854
    %856 = vdwg.mxu0
    %v858 = vperm.slane %v58, 0
    %v860 = vadd.f32 %v855, %v858
    %vm861 = vcmask 33792
    %862 = vst.msk [vmem:[%s11] sm:$0x3] %vm861, %v860
    %v863 = vsel %vm812, %v715, 0
    %865 = vmatpush.msra.mxu0 0.0
    %866 = vmatpush.msra.mxu0 0.0
    %867 = vmatpush.msra.mxu0 0.0
    %868 = vmatpush.msra.mxu0 0.0
    %869 = vmatpush.msra.mxu0 0.0
    %870 = vmatpush.msra.mxu0 0.0
    %871 = vmatpush.msra.mxu0 0.0
    %872 = vmatpush.msra.mxu0 0.0
    %873 = vmatpush.msra.mxu0 0.0
    %874 = vmatpush.msra.mxu0 0.0
    %875 = vmatpush.msra.mxu0 0.0
    %876 = vmatpush.msra.mxu0 0.0
    %877 = vmatpush.msra.mxu0 0.0
    %878 = vmatpush.msra.mxu0 0.0
    %879 = vmatpush.msra.mxu0 %v57
    %880 = vmatpush.msra.mxu0 %v56
    %881 = vmatmul.f32.gmra.mxu0 %v863
    %v882 = vpop.f32.mrf.mxu0
    %v883 = vadd.f32 0.0, %v882
    %884 = vdwg.mxu0
    %v885 = vsel %vm812, %v245, 0
    %887 = vmatpush.msra.mxu0 0.0
    %888 = vmatpush.msra.mxu0 0.0
    %889 = vmatpush.msra.mxu0 0.0
    %890 = vmatpush.msra.mxu0 0.0
    %891 = vmatpush.msra.mxu0 0.0
    %892 = vmatpush.msra.mxu0 0.0
    %893 = vmatpush.msra.mxu0 0.0
    %894 = vmatpush.msra.mxu0 0.0
    %895 = vmatpush.msra.mxu0 0.0
    %896 = vmatpush.msra.mxu0 0.0
    %897 = vmatpush.msra.mxu0 0.0
    %898 = vmatpush.msra.mxu0 0.0
    %899 = vmatpush.msra.mxu0 0.0
    %900 = vmatpush.msra.mxu0 0.0
    %901 = vmatpush.msra.mxu0 %v55
    %902 = vmatpush.msra.mxu0 %v54
    %903 = vmatmul.f32.gmra.mxu0 %v885
    %v904 = vpop.f32.mrf.mxu0
    %v905 = vadd.f32 %v883, %v904
    %906 = vdwg.mxu0
    %v907 = vadd.f32 %v905, %v858
    %s908 = scalar_lea.vmem %s11, 2
    %909 = vst.msk [vmem:[%s908] sm:$0x3] %vm861, %v907
    %v910 = vsel %vm812, %v622, 0
    %912 = vmatpush.msra.mxu0 0.0
    %913 = vmatpush.msra.mxu0 0.0
    %914 = vmatpush.msra.mxu0 0.0
    %915 = vmatpush.msra.mxu0 0.0
    %916 = vmatpush.msra.mxu0 0.0
    %917 = vmatpush.msra.mxu0 0.0
    %918 = vmatpush.msra.mxu0 0.0
    %919 = vmatpush.msra.mxu0 0.0
    %920 = vmatpush.msra.mxu0 0.0
    %921 = vmatpush.msra.mxu0 0.0
    %922 = vmatpush.msra.mxu0 0.0
    %923 = vmatpush.msra.mxu0 0.0
    %924 = vmatpush.msra.mxu0 0.0
    %925 = vmatpush.msra.mxu0 0.0
    %926 = vmatpush.msra.mxu0 %v57
    %927 = vmatpush.msra.mxu0 %v56
    %928 = vmatmul.f32.gmra.mxu0 %v910
    %v929 = vpop.f32.mrf.mxu0
    %v930 = vadd.f32 0.0, %v929
    %931 = vdwg.mxu0
    %v932 = vsel %vm812, %v338, 0
    %934 = vmatpush.msra.mxu0 0.0
    %935 = vmatpush.msra.mxu0 0.0
    %936 = vmatpush.msra.mxu0 0.0
    %937 = vmatpush.msra.mxu0 0.0
    %938 = vmatpush.msra.mxu0 0.0
    %939 = vmatpush.msra.mxu0 0.0
    %940 = vmatpush.msra.mxu0 0.0
    %941 = vmatpush.msra.mxu0 0.0
    %942 = vmatpush.msra.mxu0 0.0
    %943 = vmatpush.msra.mxu0 0.0
    %944 = vmatpush.msra.mxu0 0.0
    %945 = vmatpush.msra.mxu0 0.0
    %946 = vmatpush.msra.mxu0 0.0
    %947 = vmatpush.msra.mxu0 0.0
    %948 = vmatpush.msra.mxu0 %v55
    %949 = vmatpush.msra.mxu0 %v54
    %950 = vmatmul.f32.gmra.mxu0 %v932
    %v951 = vpop.f32.mrf.mxu0
    %v952 = vadd.f32 %v930, %v951
    %953 = vdwg.mxu0
    %v954 = vadd.f32 %v952, %v858
    %s955 = scalar_lea.vmem %s11, 4
    %956 = vst.msk [vmem:[%s955] sm:$0x3] %vm861, %v954
    %v957 = vsel %vm812, %v529, 0
    %959 = vmatpush.msra.mxu0 0.0
    %960 = vmatpush.msra.mxu0 0.0
    %961 = vmatpush.msra.mxu0 0.0
    %962 = vmatpush.msra.mxu0 0.0
    %963 = vmatpush.msra.mxu0 0.0
    %964 = vmatpush.msra.mxu0 0.0
    %965 = vmatpush.msra.mxu0 0.0
    %966 = vmatpush.msra.mxu0 0.0
    %967 = vmatpush.msra.mxu0 0.0
    %968 = vmatpush.msra.mxu0 0.0
    %969 = vmatpush.msra.mxu0 0.0
    %970 = vmatpush.msra.mxu0 0.0
    %971 = vmatpush.msra.mxu0 0.0
    %972 = vmatpush.msra.mxu0 0.0
    %973 = vmatpush.msra.mxu0 %v57
    %974 = vmatpush.msra.mxu0 %v56
    %975 = vmatmul.f32.gmra.mxu0 %v957
    %v976 = vpop.f32.mrf.mxu0
    %v977 = vadd.f32 0.0, %v976
    %978 = vdwg.mxu0
    %v979 = vsel %vm812, %v431, 0
    %981 = vmatpush.msra.mxu0 0.0
    %982 = vmatpush.msra.mxu0 0.0
    %983 = vmatpush.msra.mxu0 0.0
    %984 = vmatpush.msra.mxu0 0.0
    %985 = vmatpush.msra.mxu0 0.0
    %986 = vmatpush.msra.mxu0 0.0
    %987 = vmatpush.msra.mxu0 0.0
    %988 = vmatpush.msra.mxu0 0.0
    %989 = vmatpush.msra.mxu0 0.0
    %990 = vmatpush.msra.mxu0 0.0
    %991 = vmatpush.msra.mxu0 0.0
    %992 = vmatpush.msra.mxu0 0.0
    %993 = vmatpush.msra.mxu0 0.0
    %994 = vmatpush.msra.mxu0 0.0
    %995 = vmatpush.msra.mxu0 %v55
    %996 = vmatpush.msra.mxu0 %v54
    %997 = vmatmul.f32.gmra.mxu0 %v979
    %v998 = vpop.f32.mrf.mxu0
    %v999 = vadd.f32 %v977, %v998
    %1000 = vdwg.mxu0
    %v1001 = vadd.f32 %v999, %v858
    %s1002 = scalar_lea.vmem %s11, 6
    %1003 = vst.msk [vmem:[%s1002] sm:$0x3] %vm861, %v1001
    %v1004 = vsel %vm812, %v436, 0
    %1006 = vmatpush.msra.mxu0 0.0
    %1007 = vmatpush.msra.mxu0 0.0
    %1008 = vmatpush.msra.mxu0 0.0
    %1009 = vmatpush.msra.mxu0 0.0
    %1010 = vmatpush.msra.mxu0 0.0
    %1011 = vmatpush.msra.mxu0 0.0
    %1012 = vmatpush.msra.mxu0 0.0
    %1013 = vmatpush.msra.mxu0 0.0
    %1014 = vmatpush.msra.mxu0 0.0
    %1015 = vmatpush.msra.mxu0 0.0
    %1016 = vmatpush.msra.mxu0 0.0
    %1017 = vmatpush.msra.mxu0 0.0
    %1018 = vmatpush.msra.mxu0 0.0
    %1019 = vmatpush.msra.mxu0 0.0
    %1020 = vmatpush.msra.mxu0 %v57
    %1021 = vmatpush.msra.mxu0 %v56
    %1022 = vmatmul.f32.gmra.mxu0 %v1004
    %v1023 = vpop.f32.mrf.mxu0
    %v1024 = vadd.f32 0.0, %v1023
    %1025 = vdwg.mxu0
    %v1026 = vsel %vm812, %v524, 0
    %1028 = vmatpush.msra.mxu0 0.0
    %1029 = vmatpush.msra.mxu0 0.0
    %1030 = vmatpush.msra.mxu0 0.0
    %1031 = vmatpush.msra.mxu0 0.0
    %1032 = vmatpush.msra.mxu0 0.0
    %1033 = vmatpush.msra.mxu0 0.0
    %1034 = vmatpush.msra.mxu0 0.0
    %1035 = vmatpush.msra.mxu0 0.0
    %1036 = vmatpush.msra.mxu0 0.0
    %1037 = vmatpush.msra.mxu0 0.0
    %1038 = vmatpush.msra.mxu0 0.0
    %1039 = vmatpush.msra.mxu0 0.0
    %1040 = vmatpush.msra.mxu0 0.0
    %1041 = vmatpush.msra.mxu0 0.0
    %1042 = vmatpush.msra.mxu0 %v55
    %1043 = vmatpush.msra.mxu0 %v54
    %1044 = vmatmul.f32.gmra.mxu0 %v1026
    %v1045 = vpop.f32.mrf.mxu0
    %v1046 = vadd.f32 %v1024, %v1045
    %1047 = vdwg.mxu0
    %v1048 = vadd.f32 %v1046, %v858
    %s1049 = scalar_lea.vmem %s11, 8
    %1050 = vst.msk [vmem:[%s1049] sm:$0x3] %vm861, %v1048
    %v1051 = vsel %vm812, %v343, 0
    %1053 = vmatpush.msra.mxu0 0.0
    %1054 = vmatpush.msra.mxu0 0.0
    %1055 = vmatpush.msra.mxu0 0.0
    %1056 = vmatpush.msra.mxu0 0.0
    %1057 = vmatpush.msra.mxu0 0.0
    %1058 = vmatpush.msra.mxu0 0.0
    %1059 = vmatpush.msra.mxu0 0.0
    %1060 = vmatpush.msra.mxu0 0.0
    %1061 = vmatpush.msra.mxu0 0.0
    %1062 = vmatpush.msra.mxu0 0.0
    %1063 = vmatpush.msra.mxu0 0.0
    %1064 = vmatpush.msra.mxu0 0.0
    %1065 = vmatpush.msra.mxu0 0.0
    %1066 = vmatpush.msra.mxu0 0.0
    %1067 = vmatpush.msra.mxu0 %v57
    %1068 = vmatpush.msra.mxu0 %v56
    %1069 = vmatmul.f32.gmra.mxu0 %v1051
    %v1070 = vpop.f32.mrf.mxu0
    %v1071 = vadd.f32 0.0, %v1070
    %1072 = vdwg.mxu0
    %v1073 = vsel %vm812, %v617, 0
    %1075 = vmatpush.msra.mxu0 0.0
    %1076 = vmatpush.msra.mxu0 0.0
    %1077 = vmatpush.msra.mxu0 0.0
    %1078 = vmatpush.msra.mxu0 0.0
    %1079 = vmatpush.msra.mxu0 0.0
    %1080 = vmatpush.msra.mxu0 0.0
    %1081 = vmatpush.msra.mxu0 0.0
    %1082 = vmatpush.msra.mxu0 0.0
    %1083 = vmatpush.msra.mxu0 0.0
    %1084 = vmatpush.msra.mxu0 0.0
    %1085 = vmatpush.msra.mxu0 0.0
    %1086 = vmatpush.msra.mxu0 0.0
    %1087 = vmatpush.msra.mxu0 0.0
    %1088 = vmatpush.msra.mxu0 0.0
    %1089 = vmatpush.msra.mxu0 %v55
    %1090 = vmatpush.msra.mxu0 %v54
    %1091 = vmatmul.f32.gmra.mxu0 %v1073
    %v1092 = vpop.f32.mrf.mxu0
    %v1093 = vadd.f32 %v1071, %v1092
    %1094 = vdwg.mxu0
    %v1095 = vadd.f32 %v1093, %v858
    %s1096 = scalar_lea.vmem %s11, 10
    %1097 = vst.msk [vmem:[%s1096] sm:$0x3] %vm861, %v1095
    %v1098 = vsel %vm812, %v250, 0
    %1100 = vmatpush.msra.mxu0 0.0
    %1101 = vmatpush.msra.mxu0 0.0
    %1102 = vmatpush.msra.mxu0 0.0
    %1103 = vmatpush.msra.mxu0 0.0
    %1104 = vmatpush.msra.mxu0 0.0
    %1105 = vmatpush.msra.mxu0 0.0
    %1106 = vmatpush.msra.mxu0 0.0
    %1107 = vmatpush.msra.mxu0 0.0
    %1108 = vmatpush.msra.mxu0 0.0
    %1109 = vmatpush.msra.mxu0 0.0
    %1110 = vmatpush.msra.mxu0 0.0
    %1111 = vmatpush.msra.mxu0 0.0
    %1112 = vmatpush.msra.mxu0 0.0
    %1113 = vmatpush.msra.mxu0 0.0
    %1114 = vmatpush.msra.mxu0 %v57
    %1115 = vmatpush.msra.mxu0 %v56
    %1116 = vmatmul.f32.gmra.mxu0 %v1098
    %v1117 = vpop.f32.mrf.mxu0
    %v1118 = vadd.f32 0.0, %v1117
    %1119 = vdwg.mxu0
    %v1120 = vsel %vm812, %v710, 0
    %1122 = vmatpush.msra.mxu0 0.0
    %1123 = vmatpush.msra.mxu0 0.0
    %1124 = vmatpush.msra.mxu0 0.0
    %1125 = vmatpush.msra.mxu0 0.0
    %1126 = vmatpush.msra.mxu0 0.0
    %1127 = vmatpush.msra.mxu0 0.0
    %1128 = vmatpush.msra.mxu0 0.0
    %1129 = vmatpush.msra.mxu0 0.0
    %1130 = vmatpush.msra.mxu0 0.0
    %1131 = vmatpush.msra.mxu0 0.0
    %1132 = vmatpush.msra.mxu0 0.0
    %1133 = vmatpush.msra.mxu0 0.0
    %1134 = vmatpush.msra.mxu0 0.0
    %1135 = vmatpush.msra.mxu0 0.0
    %1136 = vmatpush.msra.mxu0 %v55
    %1137 = vmatpush.msra.mxu0 %v54
    %1138 = vmatmul.f32.gmra.mxu0 %v1120
    %v1139 = vpop.f32.mrf.mxu0
    %v1140 = vadd.f32 %v1118, %v1139
    %1141 = vdwg.mxu0
    %v1142 = vadd.f32 %v1140, %v858
    %s1143 = scalar_lea.vmem %s11, 12
    %1144 = vst.msk [vmem:[%s1143] sm:$0x3] %vm861, %v1142
    %v1145 = vsel %vm812, %v157, 0
    %1147 = vmatpush.msra.mxu0 0.0
    %1148 = vmatpush.msra.mxu0 0.0
    %1149 = vmatpush.msra.mxu0 0.0
    %1150 = vmatpush.msra.mxu0 0.0
    %1151 = vmatpush.msra.mxu0 0.0
    %1152 = vmatpush.msra.mxu0 0.0
    %1153 = vmatpush.msra.mxu0 0.0
    %1154 = vmatpush.msra.mxu0 0.0
    %1155 = vmatpush.msra.mxu0 0.0
    %1156 = vmatpush.msra.mxu0 0.0
    %1157 = vmatpush.msra.mxu0 0.0
    %1158 = vmatpush.msra.mxu0 0.0
    %1159 = vmatpush.msra.mxu0 0.0
    %1160 = vmatpush.msra.mxu0 0.0
    %1161 = vmatpush.msra.mxu0 %v57
    %1162 = vmatpush.msra.mxu0 %v56
    %1163 = vmatmul.f32.gmra.mxu0 %v1145
    %v1164 = vpop.f32.mrf.mxu0
    %v1165 = vadd.f32 0.0, %v1164
    %1166 = vdwg.mxu0
    %v1167 = vsel %vm812, %v803, 0
    %1169 = vmatpush.msra.mxu0 0.0
    %1170 = vmatpush.msra.mxu0 0.0
    %1171 = vmatpush.msra.mxu0 0.0
    %1172 = vmatpush.msra.mxu0 0.0
    %1173 = vmatpush.msra.mxu0 0.0
    %1174 = vmatpush.msra.mxu0 0.0
    %1175 = vmatpush.msra.mxu0 0.0
    %1176 = vmatpush.msra.mxu0 0.0
    %1177 = vmatpush.msra.mxu0 0.0
    %1178 = vmatpush.msra.mxu0 0.0
    %1179 = vmatpush.msra.mxu0 0.0
    %1180 = vmatpush.msra.mxu0 0.0
    %1181 = vmatpush.msra.mxu0 0.0
    %1182 = vmatpush.msra.mxu0 0.0
    %1183 = vmatpush.msra.mxu0 %v55
    %1184 = vmatpush.msra.mxu0 %v54
    %1185 = vmatmul.f32.gmra.mxu0 %v1167
    %v1186 = vpop.f32.mrf.mxu0
    %v1187 = vadd.f32 %v1165, %v1186
    %1188 = vdwg.mxu0
    %v1189 = vadd.f32 %v1187, %v858
    %s1190 = scalar_lea.vmem %s11, 14
    %1191 = vst.msk [vmem:[%s1190] sm:$0x3] %vm861, %v1189
    %v1192 = vlaneseq
    %v1193 = vand.u32 %v1192, 127
    %v1194 = vcvt.s32.f32 %v1193
    %v1195 = vcvt.s32.f32 %v63
    %v1197 = vperm.slane %v59, 0
    %v1199 = vadd.f32 %v1197, %v860
    %v1200 = vperm.slane %v1199, 0
    %v1201 = vlaneseq
    %v1202 = vshrl.u32 %v1201, 7
    %1204 = vset.pattern.permute.xlu0 %v1202
    %1205 = vperm.xlu0 %1204, %v1200
    %v1206 = vpop.permute.xlu0 %1205
    %v1207 = vperm.slane %v1199, 1
    %v1208 = vlaneseq
    %v1209 = vshrl.u32 %v1208, 7
    %1211 = vset.pattern.permute.xlu0 %v1209
    %1212 = vperm.xlu0 %1211, %v1207
    %v1213 = vpop.permute.xlu0 %1212
    %v1214 = vadd.f32 %v1206, %v61
    %v1215 = vadd.f32 %v1213, %v61
    %v1217 = vrot.slane %v907, 1
    %v1218 = vperm.slane %v907, 0
    %v1219 = vperm.slane %v1217, 0
    %v1222 = vadd.f32 %v1214, %v1218
    %v1223 = vadd.f32 %v1215, %v1219
    %vm1224 = vcmask 36864
    %v1225 = vsel %vm1224, %v1222, -inf
    %v1226 = vrot.slane %v1225, 4
    %v1227 = vmax.f32 %v1225, %v1226
    %v1228 = vrot.slane %v1227, 2
    %v1229 = vmax.f32 %v1227, %v1228
    %v1230 = vrot.slane %v1229, 1
    %v1231 = vmax.f32 %v1229, %v1230
    %v1232 = vsel %vm1224, %v1223, -inf
    %v1233 = vrot.slane %v1232, 4
    %v1234 = vmax.f32 %v1232, %v1233
    %v1235 = vrot.slane %v1234, 2
    %v1236 = vmax.f32 %v1234, %v1235
    %v1237 = vrot.slane %v1236, 1
    %v1238 = vmax.f32 %v1236, %v1237
    %vm1239 = vcmp.eq.f32.partialorder %v1222, %v1231
    %vm1240 = vcmp.eq.f32.partialorder %v1223, %v1238
    %v1241 = vsel %vm1239, %v1195, 5.0
    %v1242 = vsel %vm1240, %v1195, 5.0
    %v1243 = vsel %vm1224, %v1241, inf
    %v1244 = vrot.slane %v1243, 4
    %v1245 = vmin.f32 %v1243, %v1244
    %v1246 = vrot.slane %v1245, 2
    %v1247 = vmin.f32 %v1245, %v1246
    %v1248 = vrot.slane %v1247, 1
    %v1249 = vmin.f32 %v1247, %v1248
    %v1250 = vsel %vm1224, %v1242, inf
    %v1251 = vrot.slane %v1250, 4
    %v1252 = vmin.f32 %v1250, %v1251
    %v1253 = vrot.slane %v1252, 2
    %v1254 = vmin.f32 %v1252, %v1253
    %v1255 = vrot.slane %v1254, 1
    %v1256 = vmin.f32 %v1254, %v1255
    %v1257 = vlaneseq
    %v1258 = vshrl.u32 %v1257, 7
    %1260 = vset.pattern.permute.xlu0 %v1258
    %1261 = vperm.xlu0 %1260, %v1231
    %v1262 = vpop.permute.xlu0 %1261
    %v1263 = vlaneseq
    %v1264 = vshrl.u32 %v1263, 7
    %1266 = vset.pattern.permute.xlu0 %v1264
    %1267 = vperm.xlu0 %1266, %v1238
    %v1268 = vpop.permute.xlu0 %1267
    %v1269 = vadd.f32 %v1262, %v61
    %v1270 = vadd.f32 %v1268, %v61
    %v1272 = vrot.slane %v954, 1
    %v1273 = vperm.slane %v954, 0
    %v1274 = vperm.slane %v1272, 0
    %v1277 = vadd.f32 %v1269, %v1273
    %v1278 = vadd.f32 %v1270, %v1274
    %v1279 = vsel %vm1224, %v1277, -inf
    %v1280 = vrot.slane %v1279, 4
    %v1281 = vmax.f32 %v1279, %v1280
    %v1282 = vrot.slane %v1281, 2
    %v1283 = vmax.f32 %v1281, %v1282
    %v1284 = vrot.slane %v1283, 1
    %v1285 = vmax.f32 %v1283, %v1284
    %v1286 = vsel %vm1224, %v1278, -inf
    %v1287 = vrot.slane %v1286, 4
    %v1288 = vmax.f32 %v1286, %v1287
    %v1289 = vrot.slane %v1288, 2
    %v1290 = vmax.f32 %v1288, %v1289
    %v1291 = vrot.slane %v1290, 1
    %v1292 = vmax.f32 %v1290, %v1291
    %vm1293 = vcmp.eq.f32.partialorder %v1277, %v1285
    %vm1294 = vcmp.eq.f32.partialorder %v1278, %v1292
    %v1295 = vsel %vm1293, %v1195, 5.0
    %v1296 = vsel %vm1294, %v1195, 5.0
    %v1297 = vsel %vm1224, %v1295, inf
    %v1298 = vrot.slane %v1297, 4
    %v1299 = vmin.f32 %v1297, %v1298
    %v1300 = vrot.slane %v1299, 2
    %v1301 = vmin.f32 %v1299, %v1300
    %v1302 = vrot.slane %v1301, 1
    %v1303 = vmin.f32 %v1301, %v1302
    %v1304 = vsel %vm1224, %v1296, inf
    %v1305 = vrot.slane %v1304, 4
    %v1306 = vmin.f32 %v1304, %v1305
    %v1307 = vrot.slane %v1306, 2
    %v1308 = vmin.f32 %v1306, %v1307
    %v1309 = vrot.slane %v1308, 1
    %v1310 = vmin.f32 %v1308, %v1309
    %v1311 = vlaneseq
    %v1312 = vshrl.u32 %v1311, 7
    %1314 = vset.pattern.permute.xlu0 %v1312
    %1315 = vperm.xlu0 %1314, %v1285
    %v1316 = vpop.permute.xlu0 %1315
    %v1317 = vlaneseq
    %v1318 = vshrl.u32 %v1317, 7
    %1320 = vset.pattern.permute.xlu0 %v1318
    %1321 = vperm.xlu0 %1320, %v1292
    %v1322 = vpop.permute.xlu0 %1321
    %v1323 = vadd.f32 %v1316, %v61
    %v1324 = vadd.f32 %v1322, %v61
    %v1326 = vrot.slane %v1001, 1
    %v1327 = vperm.slane %v1001, 0
    %v1328 = vperm.slane %v1326, 0
    %v1331 = vadd.f32 %v1323, %v1327
    %v1332 = vadd.f32 %v1324, %v1328
    %v1333 = vsel %vm1224, %v1331, -inf
    %v1334 = vrot.slane %v1333, 4
    %v1335 = vmax.f32 %v1333, %v1334
    %v1336 = vrot.slane %v1335, 2
    %v1337 = vmax.f32 %v1335, %v1336
    %v1338 = vrot.slane %v1337, 1
    %v1339 = vmax.f32 %v1337, %v1338
    %v1340 = vsel %vm1224, %v1332, -inf
    %v1341 = vrot.slane %v1340, 4
    %v1342 = vmax.f32 %v1340, %v1341
    %v1343 = vrot.slane %v1342, 2
    %v1344 = vmax.f32 %v1342, %v1343
    %v1345 = vrot.slane %v1344, 1
    %v1346 = vmax.f32 %v1344, %v1345
    %vm1347 = vcmp.eq.f32.partialorder %v1331, %v1339
    %vm1348 = vcmp.eq.f32.partialorder %v1332, %v1346
    %v1349 = vsel %vm1347, %v1195, 5.0
    %v1350 = vsel %vm1348, %v1195, 5.0
    %v1351 = vsel %vm1224, %v1349, inf
    %v1352 = vrot.slane %v1351, 4
    %v1353 = vmin.f32 %v1351, %v1352
    %v1354 = vrot.slane %v1353, 2
    %v1355 = vmin.f32 %v1353, %v1354
    %v1356 = vrot.slane %v1355, 1
    %v1357 = vmin.f32 %v1355, %v1356
    %v1358 = vsel %vm1224, %v1350, inf
    %v1359 = vrot.slane %v1358, 4
    %v1360 = vmin.f32 %v1358, %v1359
    %v1361 = vrot.slane %v1360, 2
    %v1362 = vmin.f32 %v1360, %v1361
    %v1363 = vrot.slane %v1362, 1
    %v1364 = vmin.f32 %v1362, %v1363
    %v1365 = vlaneseq
    %v1366 = vshrl.u32 %v1365, 7
    %1368 = vset.pattern.permute.xlu0 %v1366
    %1369 = vperm.xlu0 %1368, %v1339
    %v1370 = vpop.permute.xlu0 %1369
    %v1371 = vlaneseq
    %v1372 = vshrl.u32 %v1371, 7
    %1374 = vset.pattern.permute.xlu0 %v1372
    %1375 = vperm.xlu0 %1374, %v1346
    %v1376 = vpop.permute.xlu0 %1375
    %v1377 = vadd.f32 %v1370, %v61
    %v1378 = vadd.f32 %v1376, %v61
    %v1380 = vrot.slane %v1048, 1
    %v1381 = vperm.slane %v1048, 0
    %v1382 = vperm.slane %v1380, 0
    %v1385 = vadd.f32 %v1377, %v1381
    %v1386 = vadd.f32 %v1378, %v1382
    %v1387 = vsel %vm1224, %v1385, -inf
    %v1388 = vrot.slane %v1387, 4
    %v1389 = vmax.f32 %v1387, %v1388
    %v1390 = vrot.slane %v1389, 2
    %v1391 = vmax.f32 %v1389, %v1390
    %v1392 = vrot.slane %v1391, 1
    %v1393 = vmax.f32 %v1391, %v1392
    %v1394 = vsel %vm1224, %v1386, -inf
    %v1395 = vrot.slane %v1394, 4
    %v1396 = vmax.f32 %v1394, %v1395
    %v1397 = vrot.slane %v1396, 2
    %v1398 = vmax.f32 %v1396, %v1397
    %v1399 = vrot.slane %v1398, 1
    %v1400 = vmax.f32 %v1398, %v1399
    %vm1401 = vcmp.eq.f32.partialorder %v1385, %v1393
    %vm1402 = vcmp.eq.f32.partialorder %v1386, %v1400
    %v1403 = vsel %vm1401, %v1195, 5.0
    %v1404 = vsel %vm1402, %v1195, 5.0
    %v1405 = vsel %vm1224, %v1403, inf
    %v1406 = vrot.slane %v1405, 4
    %v1407 = vmin.f32 %v1405, %v1406
    %v1408 = vrot.slane %v1407, 2
    %v1409 = vmin.f32 %v1407, %v1408
    %v1410 = vrot.slane %v1409, 1
    %v1411 = vmin.f32 %v1409, %v1410
    %v1412 = vsel %vm1224, %v1404, inf
    %v1413 = vrot.slane %v1412, 4
    %v1414 = vmin.f32 %v1412, %v1413
    %v1415 = vrot.slane %v1414, 2
    %v1416 = vmin.f32 %v1414, %v1415
    %v1417 = vrot.slane %v1416, 1
    %v1418 = vmin.f32 %v1416, %v1417
    %v1419 = vlaneseq
    %v1420 = vshrl.u32 %v1419, 7
    %1422 = vset.pattern.permute.xlu0 %v1420
    %1423 = vperm.xlu0 %1422, %v1393
    %v1424 = vpop.permute.xlu0 %1423
    %v1425 = vlaneseq
    %v1426 = vshrl.u32 %v1425, 7
    %1428 = vset.pattern.permute.xlu0 %v1426
    %1429 = vperm.xlu0 %1428, %v1400
    %v1430 = vpop.permute.xlu0 %1429
    %v1431 = vadd.f32 %v1424, %v61
    %v1432 = vadd.f32 %v1430, %v61
    %v1434 = vrot.slane %v1095, 1
    %v1435 = vperm.slane %v1095, 0
    %v1436 = vperm.slane %v1434, 0
    %v1439 = vadd.f32 %v1431, %v1435
    %v1440 = vadd.f32 %v1432, %v1436
    %v1441 = vsel %vm1224, %v1439, -inf
    %v1442 = vrot.slane %v1441, 4
    %v1443 = vmax.f32 %v1441, %v1442
    %v1444 = vrot.slane %v1443, 2
    %v1445 = vmax.f32 %v1443, %v1444
    %v1446 = vrot.slane %v1445, 1
    %v1447 = vmax.f32 %v1445, %v1446
    %v1448 = vsel %vm1224, %v1440, -inf
    %v1449 = vrot.slane %v1448, 4
    %v1450 = vmax.f32 %v1448, %v1449
    %v1451 = vrot.slane %v1450, 2
    %v1452 = vmax.f32 %v1450, %v1451
    %v1453 = vrot.slane %v1452, 1
    %v1454 = vmax.f32 %v1452, %v1453
    %vm1455 = vcmp.eq.f32.partialorder %v1439, %v1447
    %vm1456 = vcmp.eq.f32.partialorder %v1440, %v1454
    %v1457 = vsel %vm1455, %v1195, 5.0
    %v1458 = vsel %vm1456, %v1195, 5.0
    %v1459 = vsel %vm1224, %v1457, inf
    %v1460 = vrot.slane %v1459, 4
    %v1461 = vmin.f32 %v1459, %v1460
    %v1462 = vrot.slane %v1461, 2
    %v1463 = vmin.f32 %v1461, %v1462
    %v1464 = vrot.slane %v1463, 1
    %v1465 = vmin.f32 %v1463, %v1464
    %v1466 = vsel %vm1224, %v1458, inf
    %v1467 = vrot.slane %v1466, 4
    %v1468 = vmin.f32 %v1466, %v1467
    %v1469 = vrot.slane %v1468, 2
    %v1470 = vmin.f32 %v1468, %v1469
    %v1471 = vrot.slane %v1470, 1
    %v1472 = vmin.f32 %v1470, %v1471
    %v1473 = vlaneseq
    %v1474 = vshrl.u32 %v1473, 7
    %1476 = vset.pattern.permute.xlu0 %v1474
    %1477 = vperm.xlu0 %1476, %v1447
    %v1478 = vpop.permute.xlu0 %1477
    %v1479 = vlaneseq
    %v1480 = vshrl.u32 %v1479, 7
    %1482 = vset.pattern.permute.xlu0 %v1480
    %1483 = vperm.xlu0 %1482, %v1454
    %v1484 = vpop.permute.xlu0 %1483
    %v1485 = vadd.f32 %v1478, %v61
    %v1486 = vadd.f32 %v1484, %v61
    %v1488 = vrot.slane %v1142, 1
    %v1489 = vperm.slane %v1142, 0
    %v1490 = vperm.slane %v1488, 0
    %v1493 = vadd.f32 %v1485, %v1489
    %v1494 = vadd.f32 %v1486, %v1490
    %v1495 = vsel %vm1224, %v1493, -inf
    %v1496 = vrot.slane %v1495, 4
    %v1497 = vmax.f32 %v1495, %v1496
    %v1498 = vrot.slane %v1497, 2
    %v1499 = vmax.f32 %v1497, %v1498
    %v1500 = vrot.slane %v1499, 1
    %v1501 = vmax.f32 %v1499, %v1500
    %v1502 = vsel %vm1224, %v1494, -inf
    %v1503 = vrot.slane %v1502, 4
    %v1504 = vmax.f32 %v1502, %v1503
    %v1505 = vrot.slane %v1504, 2
    %v1506 = vmax.f32 %v1504, %v1505
    %v1507 = vrot.slane %v1506, 1
    %v1508 = vmax.f32 %v1506, %v1507
    %vm1509 = vcmp.eq.f32.partialorder %v1493, %v1501
    %vm1510 = vcmp.eq.f32.partialorder %v1494, %v1508
    %v1511 = vsel %vm1509, %v1195, 5.0
    %v1512 = vsel %vm1510, %v1195, 5.0
    %v1513 = vsel %vm1224, %v1511, inf
    %v1514 = vrot.slane %v1513, 4
    %v1515 = vmin.f32 %v1513, %v1514
    %v1516 = vrot.slane %v1515, 2
    %v1517 = vmin.f32 %v1515, %v1516
    %v1518 = vrot.slane %v1517, 1
    %v1519 = vmin.f32 %v1517, %v1518
    %v1520 = vsel %vm1224, %v1512, inf
    %v1521 = vrot.slane %v1520, 4
    %v1522 = vmin.f32 %v1520, %v1521
    %v1523 = vrot.slane %v1522, 2
    %v1524 = vmin.f32 %v1522, %v1523
    %v1525 = vrot.slane %v1524, 1
    %v1526 = vmin.f32 %v1524, %v1525
    %v1527 = vlaneseq
    %v1528 = vshrl.u32 %v1527, 7
    %1530 = vset.pattern.permute.xlu0 %v1528
    %1531 = vperm.xlu0 %1530, %v1501
    %v1532 = vpop.permute.xlu0 %1531
    %v1533 = vlaneseq
    %v1534 = vshrl.u32 %v1533, 7
    %1536 = vset.pattern.permute.xlu0 %v1534
    %1537 = vperm.xlu0 %1536, %v1508
    %v1538 = vpop.permute.xlu0 %1537
    %v1539 = vadd.f32 %v1532, %v61
    %v1540 = vadd.f32 %v1538, %v61
    %v1542 = vrot.slane %v1189, 1
    %v1543 = vperm.slane %v1189, 0
    %v1544 = vperm.slane %v1542, 0
    %v1547 = vadd.f32 %v1539, %v1543
    %v1548 = vadd.f32 %v1540, %v1544
    %v1549 = vsel %vm1224, %v1547, -inf
    %v1550 = vrot.slane %v1549, 4
    %v1551 = vmax.f32 %v1549, %v1550
    %v1552 = vrot.slane %v1551, 2
    %v1553 = vmax.f32 %v1551, %v1552
    %v1554 = vrot.slane %v1553, 1
    %v1555 = vmax.f32 %v1553, %v1554
    %v1556 = vsel %vm1224, %v1548, -inf
    %v1557 = vrot.slane %v1556, 4
    %v1558 = vmax.f32 %v1556, %v1557
    %v1559 = vrot.slane %v1558, 2
    %v1560 = vmax.f32 %v1558, %v1559
    %v1561 = vrot.slane %v1560, 1
    %v1562 = vmax.f32 %v1560, %v1561
    %vm1563 = vcmp.eq.f32.partialorder %v1547, %v1555
    %vm1564 = vcmp.eq.f32.partialorder %v1548, %v1562
    %v1565 = vsel %vm1563, %v1195, 5.0
    %v1566 = vsel %vm1564, %v1195, 5.0
    %v1567 = vsel %vm1224, %v1565, inf
    %v1568 = vrot.slane %v1567, 4
    %v1569 = vmin.f32 %v1567, %v1568
    %v1570 = vrot.slane %v1569, 2
    %v1571 = vmin.f32 %v1569, %v1570
    %v1572 = vrot.slane %v1571, 1
    %v1573 = vmin.f32 %v1571, %v1572
    %v1574 = vsel %vm1224, %v1566, inf
    %v1575 = vrot.slane %v1574, 4
    %v1576 = vmin.f32 %v1574, %v1575
    %v1577 = vrot.slane %v1576, 2
    %v1578 = vmin.f32 %v1576, %v1577
    %v1579 = vrot.slane %v1578, 1
    %v1580 = vmin.f32 %v1578, %v1579
    %v1582 = vperm.slane %v60, 0
    %v1584 = vadd.f32 %v1555, %v1582
    %v1585 = vadd.f32 %v1562, %v1582
    %v1588 = vrot.slane %v1585, 7
    %vm1589 = vcmask 1041409
    %v1590 = vsel %vm1589, %v1588, %v1584
    %v1592 = vsel %vm861, %v1590, -inf
    %1593 = vmax.xlane.f32.xlu0 %v1592
    %v1594 = vpop.xlane.xlu0 %1593
    %v1596 = vrot.slane %v1594, 1
    %vm1599 = vcmp.eq.f32.partialorder %v1584, %v1594
    %vm1600 = vcmp.eq.f32.partialorder %v1585, %v1596
    %v1601 = vsel %vm1599, %v1194, 5.0
    %v1602 = vsel %vm1600, %v1194, 5.0
    %v1605 = vrot.slane %v1602, 7
    %v1606 = vsel %vm1589, %v1605, %v1601
    %v1608 = vsel %vm861, %v1606, inf
    %1609 = vmin.xlane.f32.xlu0 %v1608
    %v1610 = vpop.xlane.xlu0 %1609
    %vm1611 = vcmp.eq.s32.totalorder %v1193, 7
    %v1612 = vsel %vm1611, %v1610, 0.0
    %vm1613 = vcmp.eq.f32.partialorder %v1610, %v1194
    %v1616 = vsel %vm1589, %v1580, %v1573
    %v1618 = vsel %vm1613, %v1616, 0.0
    %v1619 = vsel %vm861, %v1618, 0.0
    %1620 = vadd.xlane.f32.xlu0 %v1619
    %v1621 = vpop.xlane.xlu0 %1620
    %vm1622 = vcmp.eq.s32.totalorder %v1193, 6
    %v1623 = vsel %vm1622, %v1621, %v1612
    %vm1624 = vcmp.eq.f32.partialorder %v1621, %v1194
    %v1627 = vsel %vm1589, %v1526, %v1519
    %v1629 = vsel %vm1624, %v1627, 0.0
    %v1630 = vsel %vm861, %v1629, 0.0
    %1631 = vadd.xlane.f32.xlu0 %v1630
    %v1632 = vpop.xlane.xlu0 %1631
    %vm1633 = vcmp.eq.s32.totalorder %v1193, 5
    %v1634 = vsel %vm1633, %v1632, %v1623
    %vm1635 = vcmp.eq.f32.partialorder %v1632, %v1194
    %v1638 = vsel %vm1589, %v1472, %v1465
    %v1640 = vsel %vm1635, %v1638, 0.0
    %v1641 = vsel %vm861, %v1640, 0.0
    %1642 = vadd.xlane.f32.xlu0 %v1641
    %v1643 = vpop.xlane.xlu0 %1642
    %vm1644 = vcmp.eq.s32.totalorder %v1193, 4
    %v1645 = vsel %vm1644, %v1643, %v1634
    %vm1646 = vcmp.eq.f32.partialorder %v1643, %v1194
    %v1649 = vsel %vm1589, %v1418, %v1411
    %v1651 = vsel %vm1646, %v1649, 0.0
    %v1652 = vsel %vm861, %v1651, 0.0
    %1653 = vadd.xlane.f32.xlu0 %v1652
    %v1654 = vpop.xlane.xlu0 %1653
    %vm1655 = vcmp.eq.s32.totalorder %v1193, 3
    %v1656 = vsel %vm1655, %v1654, %v1645
    %vm1657 = vcmp.eq.f32.partialorder %v1654, %v1194
    %v1660 = vsel %vm1589, %v1364, %v1357
    %v1662 = vsel %vm1657, %v1660, 0.0
    %v1663 = vsel %vm861, %v1662, 0.0
    %1664 = vadd.xlane.f32.xlu0 %v1663
    %v1665 = vpop.xlane.xlu0 %1664
    %vm1666 = vcmp.eq.s32.totalorder %v1193, 2
    %v1667 = vsel %vm1666, %v1665, %v1656
    %vm1668 = vcmp.eq.f32.partialorder %v1665, %v1194
    %v1671 = vsel %vm1589, %v1310, %v1303
    %v1673 = vsel %vm1668, %v1671, 0.0
    %v1674 = vsel %vm861, %v1673, 0.0
    %1675 = vadd.xlane.f32.xlu0 %v1674
    %v1676 = vpop.xlane.xlu0 %1675
    %vm1677 = vcmp.eq.s32.totalorder %v1193, 1
    %v1678 = vsel %vm1677, %v1676, %v1667
    %vm1679 = vcmp.eq.f32.partialorder %v1676, %v1194
    %v1682 = vsel %vm1589, %v1256, %v1249
    %v1684 = vsel %vm1679, %v1682, 0.0
    %v1685 = vsel %vm861, %v1684, 0.0
    %1686 = vadd.xlane.f32.xlu0 %v1685
    %v1687 = vpop.xlane.xlu0 %1686
    %vm1688 = vcmp.eq.s32.totalorder %v1193, 0
    %v1689 = vsel %vm1688, %v1687, %v1678
    %v1690 = vcvt.f32.s32.to.zero.pseudo %v1689
    %vm1691 = vcmask 58368
    %1692 = vst.msk [vmem:[#allocation5] sm:$0x3] %vm1691, %v1690
    // Predicated region
    $region42: #{bilstm_crf_forward.1} parent=1 // pred_check
      _
    $region43: #{bilstm_crf_forward.1} parent=1 // pred_check_branch
      %1694 = sbr.rel (0) target = $region45
    $region44: #{bilstm_crf_forward.1} parent=1 // pred_region
      %1696 = vsyncadd [#allocation3], 0
      %s1698 = sshll.u32 [#allocation5], 4
      %s1699 = int_to_ptr.vmem [resolvable:$true] %s1698
      %s1700 = sshll.u32 %s9, 4
      %s1701 = int_to_ptr.hbm [resolvable:$true] %s1700
      %1703 = dma.vmem_to_hbm [thread:$0]  %s1699, 32, %s1701, [#allocation3]
    $region45: #{bilstm_crf_forward.1} parent=1 // pred_fallthru
      _
    // Predicated region
    $region46: #{bilstm_crf_forward.1} parent=1 // pred_check
      _
    $region47: #{bilstm_crf_forward.1} parent=1 // pred_check_branch
      %1705 = sbr.rel (0) target = $region49
    $region48: #{bilstm_crf_forward.1} parent=1 // pred_region
      %1707 = vsyncadd [#allocation7], 0
      %s1708 = sshll.u32 [#allocation6], 4
      %s1709 = int_to_ptr.vmem [resolvable:$true] %s1708
      %s1710 = sshll.u32 %s10, 4
      %s1711 = int_to_ptr.hbm [resolvable:$true] %s1710
      %1716 = dma.vmem_to_hbm [thread:$0]  %s1709, 512, %s1711, [#allocation7], 32, 32, 2
    $region49: #{bilstm_crf_forward.1} parent=1 // pred_fallthru
      _
    // Predicated region
    $region50: #{bilstm_crf_forward.1} parent=1 // pred_check
      _
    $region51: #{bilstm_crf_forward.1} parent=1 // pred_check_branch
      %1718 = sbr.rel (0) target = $region53
    $region52: #{bilstm_crf_forward.1} parent=1 // pred_region
      _
    $region53: #{bilstm_crf_forward.1} parent=1 // pred_fallthru
      _
    // Predicated region
    $region54: #{bilstm_crf_forward.1} parent=1 // pred_check
      _
    $region55: #{bilstm_crf_forward.1} parent=1 // pred_check_branch
      %1720 = sbr.rel (0) target = $region57
    $region56: #{bilstm_crf_forward.1} parent=1 // pred_region
      %1722 = dma.done [#allocation3], 32
    $region57: #{bilstm_crf_forward.1} parent=1 // pred_fallthru
      _
    // Predicated region
    $region58: #{bilstm_crf_forward.1} parent=1 // pred_check
      _
    $region59: #{bilstm_crf_forward.1} parent=1 // pred_check_branch
      %1724 = sbr.rel (0) target = $region61
    $region60: #{bilstm_crf_forward.1} parent=1 // pred_region
      %1726 = dma.done [#allocation7], 512
    $region61: #{bilstm_crf_forward.1} parent=1 // pred_fallthru
      _
    // Predicated region
    $region62: #{bilstm_crf_forward.1} parent=1 // pred_check
      _
    $region63: #{bilstm_crf_forward.1} parent=1 // pred_check_branch
      %1728 = sbr.rel (0) target = $region65
    $region64: #{bilstm_crf_forward.1} parent=1 // pred_region
      _
    $region65: #{bilstm_crf_forward.1} parent=1 // pred_fallthru
      _
    %1729 = vsyncpa [#allocation3], 1
    %1730 = vsyncpa [#allocation7], 1
    %1731 = vsyncpa [#allocation4], 1

</llo_original>
